<compile_context>
chip_gen: v5e
topology: v5e:2x2
jax: 0.10.0
libtpu: 0.0.40
codegen_flags: <defaults>
</compile_context>

<pallas_src>
import jax
import jax.numpy as jnp
from jax import lax
from jax.experimental import pallas as pl
from jax.experimental.pallas import tpu as pltpu


def _pos_emd_kernel(x_ref, w_ref, pos_ref, o_ref):
    # x_ref  : (TB, BB, HW, Cin)  bf16 -- HW-major, lane-dense over Cin
    # w_ref  : (Cin, E)           bf16 -- resident (constant index map)
    # pos_ref: (TB, HW, E)        f32  -- per-t positional embedding (+ conv bias)
    # o_ref  : (TB, BB, HW, E)    f32  -- lane-dense store over E
    tb, bb, hw, cin = x_ref.shape
    e = w_ref.shape[1]
    # One MXU stream over every (t, b, hw) row of this block -- no in-kernel
    # transpose, no per-b loop.
    x = x_ref[...].reshape(tb * bb * hw, cin)
    y = jnp.dot(x, w_ref[...], preferred_element_type=jnp.float32)
    y = y.reshape(tb, bb, hw, e) + pos_ref[...][:, None]   # broadcast pos over BB
    o_ref[...] = y.astype(o_ref.dtype)


def _vmem_capacity_bytes():
    try:
        return int(pltpu.get_tpu_info().vmem_capacity_bytes)
    except Exception:
        return 128 * 1024 * 1024  # v5e/v6e default if the query is unavailable


def _block_footprint(tb, bb, HW, Cin, E):
    x_b = tb * bb * HW * Cin * 2      # bf16 input tile
    o_b = tb * bb * HW * E * 4        # f32 output tile
    pos_b = tb * HW * E * 4           # f32 pos tile
    w_b = Cin * E * 2                 # bf16 weight (resident, but count 2x anyway)
    return 2 * (x_b + o_b + pos_b + w_b)  # BlockSpec double-buffers each operand


def _pick_blocks(T, B, HW, Cin, E, budget_bytes):
    """Pick (TB, BB) divisors of (T, B): biggest block that fits the budget,
    preferring an even total step count (v7x has 2 TensorCores) and treating
    1 vs 2 total steps as equally cheap."""
    def divisors(n):
        return [d for d in range(1, n + 1) if n % d == 0]

    candidates = [(tb, bb) for tb in divisors(T) for bb in divisors(B)]
    fitting = [c for c in candidates
               if _block_footprint(c[0], c[1], HW, Cin, E) <= budget_bytes]
    if not fitting:
        # Nothing fits the conservative budget: fall back to the smallest block
        # (vmem_limit is raised to cover it below, so compile fails loudly if
        # even that is impossible).
        fitting = [min(candidates, key=lambda c: _block_footprint(*c, HW, Cin, E))]

    def rank(c):
        tb, bb = c
        steps = (T // tb) * (B // bb)
        return ((steps + 1) // 2,   # 1 and 2 steps are equally cheap
                steps % 2,          # prefer even step count (megacore balance)
                -(tb * bb))         # then the biggest block
    return min(fitting, key=rank)


def pos_emd_forward(x, conv_w, conv_b, pos_embedding):
    """
    x:             (T, B, Cin, H, W)  float32
    conv_w:        (E, Cin)           1x1 conv weight with kh=kw=1 squeezed
    conv_b:        (E,)
    pos_embedding: (T, 1, E, H, W)
    returns:       (T, B, H*W, E)
    """
    T, B, Cin, H, W = x.shape
    E = conv_w.shape[0]
    HW = H * W

    # One-off HW-major transpose + bf16 cast of x (XLA op at HBM BW); halves the
    # kernel's input traffic and removes any in-kernel transpose.
    x_hwc = jnp.transpose(x.reshape(T, B, Cin, HW), (0, 1, 3, 2)).astype(jnp.bfloat16)
    # Weight as (Cin, E) in bf16 (tiny).
    w_mat = jnp.transpose(conv_w).astype(jnp.bfloat16)
    # Channels-last positional embedding with the conv bias folded in (f32, per-t only).
    pos_cl = (
        jnp.transpose(pos_embedding[:, 0], (0, 2, 3, 1)).reshape(T, HW, E)
        + conv_b[None, None, :]
    )

    # Per-generation VMEM sizing: 64 MiB/TC on v7x, 128 MiB on v5e/v6e.
    cap = _vmem_capacity_bytes()
    vmem_limit = cap // 2
    budget = vmem_limit // 2
    TB, BB = _pick_blocks(T, B, HW, Cin, E, budget)
    fp = _block_footprint(TB, BB, HW, Cin, E)
    # Safeguard: make sure the chosen block (plus headroom for Mosaic internal
    # scratch) is actually allowed, without exceeding physical VMEM.
    vmem_limit = min(cap * 3 // 4, max(vmem_limit, fp + (4 << 20)))

    grid = (T // TB, B // BB)

    out = pl.pallas_call(
        _pos_emd_kernel,
        out_shape=jax.ShapeDtypeStruct((T, B, HW, E), x.dtype),
        grid_spec=pltpu.PrefetchScalarGridSpec(
            num_scalar_prefetch=0,
            grid=grid,
            in_specs=[
                pl.BlockSpec((TB, BB, HW, Cin), lambda ti, bi: (ti, bi, 0, 0)),
                pl.BlockSpec((Cin, E), lambda ti, bi: (0, 0)),        # resident weight
                pl.BlockSpec((TB, HW, E), lambda ti, bi: (ti, 0, 0)),  # per-t pos (+bias)
            ],
            out_specs=pl.BlockSpec((TB, BB, HW, E), lambda ti, bi: (ti, bi, 0, 0)),
        ),
        compiler_params=pltpu.CompilerParams(
            dimension_semantics=("parallel", "parallel"),
            vmem_limit_bytes=vmem_limit,
        ),
    )(x_hwc, w_mat, pos_cl)
    return out


def pos_emd_reference(x, conv_w, conv_b, pos_embedding):
    T, B, Cin, H, W = x.shape
    E = conv_w.shape[0]
    y = jnp.einsum("tbchw,ec->tbehw", x, conv_w, precision=lax.Precision.HIGHEST)
    y = y + conv_b[None, None, :, None, None] + pos_embedding
    return jnp.transpose(y, (0, 1, 3, 4, 2)).reshape(T, B, H * W, E)


if __name__ == "__main__":
    # Module defaults: T=5 (fixed by pos_embedding's leading dim), in_channels=256,
    # embed_dims=256, 16x16 image, patch_size=1; small batch B=2.
    T, B = 5, 2
    Cin, E = 256, 256
    H = W = 16

    key = jax.random.PRNGKey(0)
    k_x, k_w, k_b, k_pos = jax.random.split(key, 4)

    x = jax.random.normal(k_x, (T, B, Cin, H, W), dtype=jnp.float32)
    conv_w = jax.random.normal(k_w, (E, Cin), dtype=jnp.float32) * 0.05
    conv_b = jax.random.normal(k_b, (E,), dtype=jnp.float32) * 0.05
    pos_embedding = jax.random.normal(k_pos, (T, 1, E, H, W), dtype=jnp.float32)

    fwd = jax.jit(pos_emd_forward)
    out = jax.block_until_ready(fwd(x, conv_w, conv_b, pos_embedding))
    ref = pos_emd_reference(x, conv_w, conv_b, pos_embedding)

    assert out.shape == (T, B, H * W, E), out.shape
    max_err = float(jnp.max(jnp.abs(out - ref)))
    # bf16 MXU operands with f32 accumulation vs an f32 HIGHEST reference:
    # expected max abs error ~1e-2 at these magnitudes.
    assert jnp.allclose(out, ref, atol=3e-2, rtol=3e-2), f"mismatch, max_err={max_err}"

    print("KERNEL_OK")
</pallas_src>

<mosaic_0001>
module attributes {stable_mosaic.version = 11 : i64} {
  func.func @_pos_emd_kernel(%arg0: i32, %arg1: i32, %arg2: memref<5x1x256x256xbf16, #tpu.memory_space<vmem>>, %arg3: memref<256x256xbf16, #tpu.memory_space<vmem>>, %arg4: memref<5x256x256xf32, #tpu.memory_space<vmem>>, %arg5: memref<5x1x256x256xf32, #tpu.memory_space<vmem>>) attributes {dimension_semantics = [#tpu.dimension_semantics<parallel>, #tpu.dimension_semantics<parallel>], iteration_bounds = array<i64: 1, 2>, scalar_prefetch = 0 : i64, scratch_operands = 0 : i64, tpu.core_type = #tpu.core_type<tc>, window_params = [{transform_indices = @transform_0, window_bounds = array<i64: 5, 1, 256, 256>}, {pipeline_mode = #tpu.pipeline_mode<synchronous>, transform_indices = @transform_1, window_bounds = array<i64: 256, 256>}, {transform_indices = @transform_2, window_bounds = array<i64: 5, 256, 256>}, {transform_indices = @transform_3, window_bounds = array<i64: 5, 1, 256, 256>}]} {
    %c0 = arith.constant 0 : index
    %c0_0 = arith.constant 0 : index
    %c0_1 = arith.constant 0 : index
    %c0_2 = arith.constant 0 : index
    %0 = vector.load %arg2[%c0, %c0_0, %c0_1, %c0_2] : memref<5x1x256x256xbf16, #tpu.memory_space<vmem>>, vector<5x1x256x256xbf16>
    %1 = vector.shape_cast %0 : vector<5x1x256x256xbf16> to vector<1280x256xbf16>
    %c0_3 = arith.constant 0 : index
    %c0_4 = arith.constant 0 : index
    %2 = vector.load %arg3[%c0_3, %c0_4] : memref<256x256xbf16, #tpu.memory_space<vmem>>, vector<256x256xbf16>
    %cst = arith.constant dense<0.000000e+00> : vector<1280x256xf32>
    %3 = tpu.matmul %1, %2, %cst {dimension_numbers = #tpu.dot_dimension_numbers<[1], [0], [0], [1], [0, 0, 1, 1], [], []>} : vector<1280x256xbf16>, vector<256x256xbf16>, vector<1280x256xf32> -> vector<1280x256xf32>
    %4 = vector.shape_cast %3 : vector<1280x256xf32> to vector<5x1x256x256xf32>
    %c0_5 = arith.constant 0 : index
    %c0_6 = arith.constant 0 : index
    %c0_7 = arith.constant 0 : index
    %5 = vector.load %arg4[%c0_5, %c0_6, %c0_7] : memref<5x256x256xf32, #tpu.memory_space<vmem>>, vector<5x256x256xf32>
    %6 = vector.shape_cast %5 : vector<5x256x256xf32> to vector<5x1x256x256xf32>
    %7 = arith.addf %4, %6 : vector<5x1x256x256xf32>
    %c0_8 = arith.constant 0 : index
    %c0_9 = arith.constant 0 : index
    %c0_10 = arith.constant 0 : index
    %c0_11 = arith.constant 0 : index
    %8 = vector.load %arg5[%c0_8, %c0_9, %c0_10, %c0_11] : memref<5x1x256x256xf32, #tpu.memory_space<vmem>>, vector<5x1x256x256xf32>
    tpu.vector_store %arg5[%c0_8, %c0_9, %c0_10, %c0_11], %7 {strides = array<i32>} : memref<5x1x256x256xf32, #tpu.memory_space<vmem>>, vector<5x1x256x256xf32>,
    return
  }
  func.func @transform_0(%arg0: i32, %arg1: i32) -> (i32, i32, i32, i32) {
    %c0_i32 = arith.constant 0 : i32
    %c0_i32_0 = arith.constant 0 : i32
    %c0_i32_1 = arith.constant 0 : i32
    return %arg0, %arg1, %c0_i32, %c0_i32_0 : i32, i32, i32, i32
  }
  func.func @transform_1(%arg0: i32, %arg1: i32) -> (i32, i32) {
    %c0_i32 = arith.constant 0 : i32
    %c0_i32_0 = arith.constant 0 : i32
    %c0_i32_1 = arith.constant 0 : i32
    return %c0_i32, %c0_i32_0 : i32, i32
  }
  func.func @transform_2(%arg0: i32, %arg1: i32) -> (i32, i32, i32) {
    %c0_i32 = arith.constant 0 : i32
    %c0_i32_0 = arith.constant 0 : i32
    %c0_i32_1 = arith.constant 0 : i32
    return %arg0, %c0_i32, %c0_i32_0 : i32, i32, i32
  }
  func.func @transform_3(%arg0: i32, %arg1: i32) -> (i32, i32, i32, i32) {
    %c0_i32 = arith.constant 0 : i32
    %c0_i32_0 = arith.constant 0 : i32
    %c0_i32_1 = arith.constant 0 : i32
    return %arg0, %arg1, %c0_i32, %c0_i32_0 : i32, i32, i32, i32
  }
}

</mosaic_0001>

<llo_original>
// kernel: pos_emd_forward.1
$region0: #{pos_emd_forward.1}
  #allocation0 [shape = 'u32[]', space=smem, size = 0x4, offset = 0x4, fixed_abs, tag = 'smem constant byte address 0x4 - core index']
  #allocation1 [shape = 'u32[72,128]{1,0:T(1,128)}', space=vmem, size = 0x9000, scoped, tag = 'internal scratch']
  #allocation5 [shape = 's32[]', space=sflag, size = 0x4, offset = 0, fixed_abs, tag = 'sflag constant byte address 0x0 - dummy sync flag']
  %s0 = inlined_call_operand.vmem [shape: bf16[5,2,256,256], index: 0, kind: input, shape index: {}]
  %s1 = inlined_call_operand.vmem [shape: bf16[256,256], index: 1, kind: input, shape index: {}]
  %s2 = inlined_call_operand.vmem [shape: f32[5,256,256], index: 2, kind: input, shape index: {}]
  %s3 = inlined_call_operand.hbm [shape: f32[5,2,256,256], index: 3, kind: output, shape index: {}]
  %s4 = sld [smem:[#allocation0]]
  $region83: #{pos_emd_forward.1} parent=0
    _
  %s6 = ssub.s32 1, %s4
  %s7 = scalar_select 0, %s6, %s4
  $region1: #{pos_emd_forward.1} parent=0
    #allocation2 [shape = 'u8[1310720]{0}', space=vmem, size = 0x140000, scoped, tag = 'input window, operand 0']
    #allocation3 [shape = 'u8[2621440]{0}', space=vmem, size = 0x280000, scoped, tag = 'output window, operand 0']
    #allocation4 [shape = 's32[2]{0}', space=sflag, size = 0x8, scoped, tag = 'scoped memory for pos_emd_forward.1']
    %8 = vsyncpa [#allocation4], 0
    %s9 = scalar_lea.sflag [#allocation4], 1
    %10 = vsyncpa %s9, 0
    loop: start=0, step=1, limit=4
    $region2: #{pos_emd_forward.1} parent=1 // loop_pre_header
      _
    $region3: #{pos_emd_forward.1} parent=1 // loop_header
      %s12 = sphi 0, %s16
      %p13 = scmp.ge.s32.totalorder %s12, 4
      %s19 = sphi 0, %s31
      %s20 = sphi 0, %s27
      %s21 = sphi 0, %s19
      %s22 = sphi 0, %s20
      %s23 = sphi 0, %s21
      %s24 = sphi 0, %s22
      %s36 = sphi 0, %s38
      %s39 = sphi 0, %s36
      %s40 = sphi 0, %s39
      %s56 = sphi 0, %s40
      %s60 = sphi 0, %s60
      %s62 = sphi 0, %s60
      %s63 = sphi 0, %s62
      %s77 = sphi 0, %s63
      %s83 = sphi 0, %s85
      %s86 = sphi 0, %s83
      %s87 = sphi 0, %s86
      %s103 = sphi 0, %s87
      %s111 = sphi 0, %s113
      %s114 = sphi 0, %s111
      %s115 = sphi 0, %s114
      %s131 = sphi 0, %s115
    $region4: #{pos_emd_forward.1} parent=1 // loop_header_branch
      %15 = sbr.rel (%p13) target = $region8
    $region5: #{pos_emd_forward.1} parent=1 // loop_body
      %s17 = ssub.s32 %s12, 1
      %s18 = ssub.s32 %s12, 2
      %s25 = sadd.s32 1, %s20
      %p26 = scmp.ge.s32.totalorder %s25, 2
      %s27 = scalar_select %p26, 0, %s25
      %s28 = sadd.s32 1, %s19
      %s29 = scalar_select %p26, %s28, %s19
      %p30 = scmp.ge.s32.totalorder %s29, 1
      %s31 = scalar_select %p30, 0, %s29
      %s32 = ssub.s32 %s19, %s31
      %s33 = ssub.s32 %s20, %s27
      %s34 = sor.u32 %s32, %s33
      %p35 = scmp.eq.s32.totalorder %s34, 0
      %s37 = sadd.s32 %s36, 1
      %s38 = scalar_select %p35, %s36, %s37
      %p41 = pneg %p35
      %p42 = scmp.eq.s32.totalorder %s12, 1
      %p43 = por %p41, %p42
      %p44 = scmp.ne.s32.totalorder %s36, %s39
      %p45 = scmp.eq.s32.totalorder %s12, 0
      %p46 = por %p44, %p45
      %p47 = scmp.ne.s32.totalorder %s36, %s39
      %p48 = scmp.eq.s32.totalorder %s17, 1
      %p49 = por %p47, %p48
      %p50 = scmp.ne.s32.totalorder %s39, %s40
      %p51 = scmp.eq.s32.totalorder %s17, 0
      %p52 = por %p50, %p51
      %p53 = scmp.ne.s32.totalorder %s39, %s40
      %p54 = scmp.eq.s32.totalorder %s18, 1
      %p55 = por %p53, %p54
      %p57 = scmp.ne.s32.totalorder %s40, %s56
      %p58 = scmp.eq.s32.totalorder %s18, 0
      %p59 = por %p57, %p58
      %s61 = sadd.s32 %s60, 1
      %p64 = scmp.eq.s32.totalorder %s12, 1
      %p65 = scmp.ne.s32.totalorder %s60, %s62
      %p66 = scmp.eq.s32.totalorder %s12, 0
      %p67 = por %p65, %p66
      %p68 = scmp.ne.s32.totalorder %s60, %s62
      %p69 = scmp.eq.s32.totalorder %s17, 1
      %p70 = por %p68, %p69
      %p71 = scmp.ne.s32.totalorder %s62, %s63
      %p72 = scmp.eq.s32.totalorder %s17, 0
      %p73 = por %p71, %p72
      %p74 = scmp.ne.s32.totalorder %s62, %s63
      %p75 = scmp.eq.s32.totalorder %s18, 1
      %p76 = por %p74, %p75
      %p78 = scmp.ne.s32.totalorder %s63, %s77
      %p79 = scmp.eq.s32.totalorder %s18, 0
      %p80 = por %p78, %p79
      %s81 = ssub.s32 %s19, %s31
      %p82 = scmp.eq.s32.totalorder %s81, 0
      %s84 = sadd.s32 %s83, 1
      %s85 = scalar_select %p82, %s83, %s84
      %p88 = pneg %p82
      %p89 = scmp.eq.s32.totalorder %s12, 1
      %p90 = por %p88, %p89
      %p91 = scmp.ne.s32.totalorder %s83, %s86
      %p92 = scmp.eq.s32.totalorder %s12, 0
      %p93 = por %p91, %p92
      %p94 = scmp.ne.s32.totalorder %s83, %s86
      %p95 = scmp.eq.s32.totalorder %s17, 1
      %p96 = por %p94, %p95
      %p97 = scmp.ne.s32.totalorder %s86, %s87
      %p98 = scmp.eq.s32.totalorder %s17, 0
      %p99 = por %p97, %p98
      %p100 = scmp.ne.s32.totalorder %s86, %s87
      %p101 = scmp.eq.s32.totalorder %s18, 1
      %p102 = por %p100, %p101
      %p104 = scmp.ne.s32.totalorder %s87, %s103
      %p105 = scmp.eq.s32.totalorder %s18, 0
      %p106 = por %p104, %p105
      %s107 = ssub.s32 %s19, %s31
      %s108 = ssub.s32 %s20, %s27
      %s109 = sor.u32 %s107, %s108
      %p110 = scmp.eq.s32.totalorder %s109, 0
      %s112 = sadd.s32 %s111, 1
      %s113 = scalar_select %p110, %s111, %s112
      %p116 = pneg %p110
      %p117 = scmp.eq.s32.totalorder %s12, 1
      %p118 = por %p116, %p117
      %p119 = scmp.ne.s32.totalorder %s111, %s114
      %p120 = scmp.eq.s32.totalorder %s12, 0
      %p121 = por %p119, %p120
      %p122 = scmp.ne.s32.totalorder %s111, %s114
      %p123 = scmp.eq.s32.totalorder %s17, 1
      %p124 = por %p122, %p123
      %p125 = scmp.ne.s32.totalorder %s114, %s115
      %p126 = scmp.eq.s32.totalorder %s17, 0
      %p127 = por %p125, %p126
      %p128 = scmp.ne.s32.totalorder %s114, %s115
      %p129 = scmp.eq.s32.totalorder %s18, 1
      %p130 = por %p128, %p129
      %p132 = scmp.ne.s32.totalorder %s115, %s131
      %p133 = scmp.eq.s32.totalorder %s18, 0
      %p134 = por %p132, %p133
      %p135 = scmp.le.s32.totalorder 1, %s12
      %p136 = scmp.lt.s32.totalorder %s12, 3
      %p137 = pnand %p135, %p136
      %p138 = pneg %p137
      // Predicated region
      $region9: #{pos_emd_forward.1} parent=5 // pred_check
        _
      $region10: #{pos_emd_forward.1} parent=5 // pred_check_branch
        %140 = sbr.rel (%p137) target = $region12
      $region11: #{pos_emd_forward.1} parent=5 // pred_region
        %s141 = ssub.s32 %s12, 1
        // Predicated region
        $region13: #{pos_emd_forward.1} parent=11 // pred_check
          %p142 = pneg %p73
        $region14: #{pos_emd_forward.1} parent=11 // pred_check_branch
          %144 = sbr.rel (%p142) target = $region16
        $region15: #{pos_emd_forward.1} parent=11 // pred_region
          _
        $region16: #{pos_emd_forward.1} parent=11 // pred_fallthru
          _
        // Predicated region
        $region17: #{pos_emd_forward.1} parent=11 // pred_check
          %p145 = pneg %p99
        $region18: #{pos_emd_forward.1} parent=11 // pred_check_branch
          %147 = sbr.rel (%p145) target = $region20
        $region19: #{pos_emd_forward.1} parent=11 // pred_region
          %s148 = smul.u32 5, %s21
          %p149 = scmp.lt.s32.totalorder %s148, 4
          %s150 = scalar_select %p149, %s148, 4
          %s151 = smul.addr %s150, 64
          %s152 = smul.addr %s151, 8
          %s153 = scalar_lea.vmem %s2, %s152
          %s154 = smul.u32 5, %s21
        $region20: #{pos_emd_forward.1} parent=11 // pred_fallthru
          _
      $region12: #{pos_emd_forward.1} parent=5 // pred_fallthru
        _
      %p155 = scmp.lt.s32.totalorder %s12, 2
      // Predicated region
      $region21: #{pos_emd_forward.1} parent=5 // pred_check
        %p156 = pneg %p155
      $region22: #{pos_emd_forward.1} parent=5 // pred_check_branch
        %158 = sbr.rel (%p156) target = $region24
      $region23: #{pos_emd_forward.1} parent=5 // pred_region
        // Predicated region
        $region25: #{pos_emd_forward.1} parent=23 // pred_check
          %p159 = pneg %p46
        $region26: #{pos_emd_forward.1} parent=23 // pred_check_branch
          %161 = sbr.rel (%p159) target = $region28
        $region27: #{pos_emd_forward.1} parent=23 // pred_region
          %s162 = sand.u32 %s36, 1
          %s163 = sand.u32 %s36, 1
          %s164 = smul.addr %s163, 1280
          %s165 = scalar_lea.vmem [#allocation2], %s164
          %s166 = smul.u32 5, %s19
          %s167 = smul.addr %s20, 64
          %s168 = smul.addr %s166, 128
          %s169 = sadd.s32 %s167, %s168
          %s170 = smul.addr %s169, 4
          %s171 = scalar_lea.vmem %s0, %s170
          // Predicated region
          $region29: #{pos_emd_forward.1} parent=27 // pred_check
            _
          $region30: #{pos_emd_forward.1} parent=27 // pred_check_branch
            %173 = sbr.rel (0) target = $region32
          $region31: #{pos_emd_forward.1} parent=27 // pred_region
            // Predicated region
            $region33: #{pos_emd_forward.1} parent=31 // pred_check
              _
            $region34: #{pos_emd_forward.1} parent=31 // pred_check_branch
              %175 = sbr.rel (0) target = $region36
            $region35: #{pos_emd_forward.1} parent=31 // pred_region
              // Predicated region
              $region48: #{pos_emd_forward.1} parent=35 // pred_check
                _
              $region49: #{pos_emd_forward.1} parent=35 // pred_check_branch
                %509 = sbr.rel (0) target = $region51
              $region50: #{pos_emd_forward.1} parent=35 // pred_region
                loop: start=0, step=1, limit=1
                $region52: #{pos_emd_forward.1} parent=50 // loop_pre_header
                  _
                $region53: #{pos_emd_forward.1} parent=50 // loop_header
                  %s511 = sphi 0, %s515
                  %p512 = scmp.ge.s32.totalorder %s511, 1
                  %s516 = sphi %s171, %s171
                  %s517 = sphi %s165, %s165
                $region54: #{pos_emd_forward.1} parent=50 // loop_header_branch
                  %514 = sbr.rel (%p512) target = $region58
                $region55: #{pos_emd_forward.1} parent=50 // loop_body
                  %v518 = vld [vmem:[%s516] sm:$0xff]
                  %519 = vst [vmem:[%s517] sm:$0xff] %v518
                  %v520 = vld [vmem:[%s516 + $0x8] sm:$0xff]
                  %521 = vst [vmem:[%s517 + $0x8] sm:$0xff] %v520
                  %v522 = vld [vmem:[%s516 + $0x10] sm:$0xff]
                  %523 = vst [vmem:[%s517 + $0x10] sm:$0xff] %v522
                  %v524 = vld [vmem:[%s516 + $0x18] sm:$0xff]
                  %525 = vst [vmem:[%s517 + $0x18] sm:$0xff] %v524
                  %v526 = vld [vmem:[%s516 + $0x20] sm:$0xff]
                  %527 = vst [vmem:[%s517 + $0x20] sm:$0xff] %v526
                  %v528 = vld [vmem:[%s516 + $0x28] sm:$0xff]
                  %529 = vst [vmem:[%s517 + $0x28] sm:$0xff] %v528
                  %v530 = vld [vmem:[%s516 + $0x30] sm:$0xff]
                  %531 = vst [vmem:[%s517 + $0x30] sm:$0xff] %v530
                  %v532 = vld [vmem:[%s516 + $0x38] sm:$0xff]
                  %533 = vst [vmem:[%s517 + $0x38] sm:$0xff] %v532
                  %v534 = vld [vmem:[%s516 + $0x40] sm:$0xff]
                  %535 = vst [vmem:[%s517 + $0x40] sm:$0xff] %v534
                  %v536 = vld [vmem:[%s516 + $0x48] sm:$0xff]
                  %537 = vst [vmem:[%s517 + $0x48] sm:$0xff] %v536
                  %v538 = vld [vmem:[%s516 + $0x50] sm:$0xff]
                  %539 = vst [vmem:[%s517 + $0x50] sm:$0xff] %v538
                  %v540 = vld [vmem:[%s516 + $0x58] sm:$0xff]
                  %541 = vst [vmem:[%s517 + $0x58] sm:$0xff] %v540
                  %v542 = vld [vmem:[%s516 + $0x60] sm:$0xff]
                  %543 = vst [vmem:[%s517 + $0x60] sm:$0xff] %v542
                  %v544 = vld [vmem:[%s516 + $0x68] sm:$0xff]
                  %545 = vst [vmem:[%s517 + $0x68] sm:$0xff] %v544
                  %v546 = vld [vmem:[%s516 + $0x70] sm:$0xff]
                  %547 = vst [vmem:[%s517 + $0x70] sm:$0xff] %v546
                  %v548 = vld [vmem:[%s516 + $0x78] sm:$0xff]
                  %549 = vst [vmem:[%s517 + $0x78] sm:$0xff] %v548
                  %v550 = vld [vmem:[%s516 + $0x80] sm:$0xff]
                  %551 = vst [vmem:[%s517 + $0x80] sm:$0xff] %v550
                  %v552 = vld [vmem:[%s516 + $0x88] sm:$0xff]
                  %553 = vst [vmem:[%s517 + $0x88] sm:$0xff] %v552
                  %v554 = vld [vmem:[%s516 + $0x90] sm:$0xff]
                  %555 = vst [vmem:[%s517 + $0x90] sm:$0xff] %v554
                  %v556 = vld [vmem:[%s516 + $0x98] sm:$0xff]
                  %557 = vst [vmem:[%s517 + $0x98] sm:$0xff] %v556
                  %v558 = vld [vmem:[%s516 + $0xa0] sm:$0xff]
                  %559 = vst [vmem:[%s517 + $0xa0] sm:$0xff] %v558
                  %v560 = vld [vmem:[%s516 + $0xa8] sm:$0xff]
                  %561 = vst [vmem:[%s517 + $0xa8] sm:$0xff] %v560
                  %v562 = vld [vmem:[%s516 + $0xb0] sm:$0xff]
                  %563 = vst [vmem:[%s517 + $0xb0] sm:$0xff] %v562
                  %v564 = vld [vmem:[%s516 + $0xb8] sm:$0xff]
                  %565 = vst [vmem:[%s517 + $0xb8] sm:$0xff] %v564
                  %v566 = vld [vmem:[%s516 + $0xc0] sm:$0xff]
                  %567 = vst [vmem:[%s517 + $0xc0] sm:$0xff] %v566
                  %v568 = vld [vmem:[%s516 + $0xc8] sm:$0xff]
                  %569 = vst [vmem:[%s517 + $0xc8] sm:$0xff] %v568
                  %v570 = vld [vmem:[%s516 + $0xd0] sm:$0xff]
                  %571 = vst [vmem:[%s517 + $0xd0] sm:$0xff] %v570
                  %v572 = vld [vmem:[%s516 + $0xd8] sm:$0xff]
                  %573 = vst [vmem:[%s517 + $0xd8] sm:$0xff] %v572
                  %v574 = vld [vmem:[%s516 + $0xe0] sm:$0xff]
                  %575 = vst [vmem:[%s517 + $0xe0] sm:$0xff] %v574
                  %v576 = vld [vmem:[%s516 + $0xe8] sm:$0xff]
                  %577 = vst [vmem:[%s517 + $0xe8] sm:$0xff] %v576
                  %v578 = vld [vmem:[%s516 + $0xf0] sm:$0xff]
                  %579 = vst [vmem:[%s517 + $0xf0] sm:$0xff] %v578
                  %v580 = vld [vmem:[%s516 + $0xf8] sm:$0xff]
                  %581 = vst [vmem:[%s517 + $0xf8] sm:$0xff] %v580
                  %v582 = vld [vmem:[%s516 + $0x200] sm:$0xff]
                  %583 = vst [vmem:[%s517 + $0x100] sm:$0xff] %v582
                  %v584 = vld [vmem:[%s516 + $0x208] sm:$0xff]
                  %585 = vst [vmem:[%s517 + $0x108] sm:$0xff] %v584
                  %v586 = vld [vmem:[%s516 + $0x210] sm:$0xff]
                  %587 = vst [vmem:[%s517 + $0x110] sm:$0xff] %v586
                  %v588 = vld [vmem:[%s516 + $0x218] sm:$0xff]
                  %589 = vst [vmem:[%s517 + $0x118] sm:$0xff] %v588
                  %v590 = vld [vmem:[%s516 + $0x220] sm:$0xff]
                  %591 = vst [vmem:[%s517 + $0x120] sm:$0xff] %v590
                  %v592 = vld [vmem:[%s516 + $0x228] sm:$0xff]
                  %593 = vst [vmem:[%s517 + $0x128] sm:$0xff] %v592
                  %v594 = vld [vmem:[%s516 + $0x230] sm:$0xff]
                  %595 = vst [vmem:[%s517 + $0x130] sm:$0xff] %v594
                  %v596 = vld [vmem:[%s516 + $0x238] sm:$0xff]
                  %597 = vst [vmem:[%s517 + $0x138] sm:$0xff] %v596
                  %v598 = vld [vmem:[%s516 + $0x240] sm:$0xff]
                  %599 = vst [vmem:[%s517 + $0x140] sm:$0xff] %v598
                  %v600 = vld [vmem:[%s516 + $0x248] sm:$0xff]
                  %601 = vst [vmem:[%s517 + $0x148] sm:$0xff] %v600
                  %v602 = vld [vmem:[%s516 + $0x250] sm:$0xff]
                  %603 = vst [vmem:[%s517 + $0x150] sm:$0xff] %v602
                  %v604 = vld [vmem:[%s516 + $0x258] sm:$0xff]
                  %605 = vst [vmem:[%s517 + $0x158] sm:$0xff] %v604
                  %v606 = vld [vmem:[%s516 + $0x260] sm:$0xff]
                  %607 = vst [vmem:[%s517 + $0x160] sm:$0xff] %v606
                  %v608 = vld [vmem:[%s516 + $0x268] sm:$0xff]
                  %609 = vst [vmem:[%s517 + $0x168] sm:$0xff] %v608
                  %v610 = vld [vmem:[%s516 + $0x270] sm:$0xff]
                  %611 = vst [vmem:[%s517 + $0x170] sm:$0xff] %v610
                  %v612 = vld [vmem:[%s516 + $0x278] sm:$0xff]
                  %613 = vst [vmem:[%s517 + $0x178] sm:$0xff] %v612
                  %v614 = vld [vmem:[%s516 + $0x280] sm:$0xff]
                  %615 = vst [vmem:[%s517 + $0x180] sm:$0xff] %v614
                  %v616 = vld [vmem:[%s516 + $0x288] sm:$0xff]
                  %617 = vst [vmem:[%s517 + $0x188] sm:$0xff] %v616
                  %v618 = vld [vmem:[%s516 + $0x290] sm:$0xff]
                  %619 = vst [vmem:[%s517 + $0x190] sm:$0xff] %v618
                  %v620 = vld [vmem:[%s516 + $0x298] sm:$0xff]
                  %621 = vst [vmem:[%s517 + $0x198] sm:$0xff] %v620
                  %v622 = vld [vmem:[%s516 + $0x2a0] sm:$0xff]
                  %623 = vst [vmem:[%s517 + $0x1a0] sm:$0xff] %v622
                  %v624 = vld [vmem:[%s516 + $0x2a8] sm:$0xff]
                  %625 = vst [vmem:[%s517 + $0x1a8] sm:$0xff] %v624
                  %v626 = vld [vmem:[%s516 + $0x2b0] sm:$0xff]
                  %627 = vst [vmem:[%s517 + $0x1b0] sm:$0xff] %v626
                  %v628 = vld [vmem:[%s516 + $0x2b8] sm:$0xff]
                  %629 = vst [vmem:[%s517 + $0x1b8] sm:$0xff] %v628
                  %v630 = vld [vmem:[%s516 + $0x2c0] sm:$0xff]
                  %631 = vst [vmem:[%s517 + $0x1c0] sm:$0xff] %v630
                  %v632 = vld [vmem:[%s516 + $0x2c8] sm:$0xff]
                  %633 = vst [vmem:[%s517 + $0x1c8] sm:$0xff] %v632
                  %v634 = vld [vmem:[%s516 + $0x2d0] sm:$0xff]
                  %635 = vst [vmem:[%s517 + $0x1d0] sm:$0xff] %v634
                  %v636 = vld [vmem:[%s516 + $0x2d8] sm:$0xff]
                  %637 = vst [vmem:[%s517 + $0x1d8] sm:$0xff] %v636
                  %v638 = vld [vmem:[%s516 + $0x2e0] sm:$0xff]
                  %639 = vst [vmem:[%s517 + $0x1e0] sm:$0xff] %v638
                  %v640 = vld [vmem:[%s516 + $0x2e8] sm:$0xff]
                  %641 = vst [vmem:[%s517 + $0x1e8] sm:$0xff] %v640
                  %v642 = vld [vmem:[%s516 + $0x2f0] sm:$0xff]
                  %643 = vst [vmem:[%s517 + $0x1f0] sm:$0xff] %v642
                  %v644 = vld [vmem:[%s516 + $0x2f8] sm:$0xff]
                  %645 = vst [vmem:[%s517 + $0x1f8] sm:$0xff] %v644
                  %v646 = vld [vmem:[%s516 + $0x400] sm:$0xff]
                  %647 = vst [vmem:[%s517 + $0x200] sm:$0xff] %v646
                  %v648 = vld [vmem:[%s516 + $0x408] sm:$0xff]
                  %649 = vst [vmem:[%s517 + $0x208] sm:$0xff] %v648
                  %v650 = vld [vmem:[%s516 + $0x410] sm:$0xff]
                  %651 = vst [vmem:[%s517 + $0x210] sm:$0xff] %v650
                  %v652 = vld [vmem:[%s516 + $0x418] sm:$0xff]
                  %653 = vst [vmem:[%s517 + $0x218] sm:$0xff] %v652
                  %v654 = vld [vmem:[%s516 + $0x420] sm:$0xff]
                  %655 = vst [vmem:[%s517 + $0x220] sm:$0xff] %v654
                  %v656 = vld [vmem:[%s516 + $0x428] sm:$0xff]
                  %657 = vst [vmem:[%s517 + $0x228] sm:$0xff] %v656
                  %v658 = vld [vmem:[%s516 + $0x430] sm:$0xff]
                  %659 = vst [vmem:[%s517 + $0x230] sm:$0xff] %v658
                  %v660 = vld [vmem:[%s516 + $0x438] sm:$0xff]
                  %661 = vst [vmem:[%s517 + $0x238] sm:$0xff] %v660
                  %v662 = vld [vmem:[%s516 + $0x440] sm:$0xff]
                  %663 = vst [vmem:[%s517 + $0x240] sm:$0xff] %v662
                  %v664 = vld [vmem:[%s516 + $0x448] sm:$0xff]
                  %665 = vst [vmem:[%s517 + $0x248] sm:$0xff] %v664
                  %v666 = vld [vmem:[%s516 + $0x450] sm:$0xff]
                  %667 = vst [vmem:[%s517 + $0x250] sm:$0xff] %v666
                  %v668 = vld [vmem:[%s516 + $0x458] sm:$0xff]
                  %669 = vst [vmem:[%s517 + $0x258] sm:$0xff] %v668
                  %v670 = vld [vmem:[%s516 + $0x460] sm:$0xff]
                  %671 = vst [vmem:[%s517 + $0x260] sm:$0xff] %v670
                  %v672 = vld [vmem:[%s516 + $0x468] sm:$0xff]
                  %673 = vst [vmem:[%s517 + $0x268] sm:$0xff] %v672
                  %v674 = vld [vmem:[%s516 + $0x470] sm:$0xff]
                  %675 = vst [vmem:[%s517 + $0x270] sm:$0xff] %v674
                  %v676 = vld [vmem:[%s516 + $0x478] sm:$0xff]
                  %677 = vst [vmem:[%s517 + $0x278] sm:$0xff] %v676
                  %v678 = vld [vmem:[%s516 + $0x480] sm:$0xff]
                  %679 = vst [vmem:[%s517 + $0x280] sm:$0xff] %v678
                  %v680 = vld [vmem:[%s516 + $0x488] sm:$0xff]
                  %681 = vst [vmem:[%s517 + $0x288] sm:$0xff] %v680
                  %v682 = vld [vmem:[%s516 + $0x490] sm:$0xff]
                  %683 = vst [vmem:[%s517 + $0x290] sm:$0xff] %v682
                  %v684 = vld [vmem:[%s516 + $0x498] sm:$0xff]
                  %685 = vst [vmem:[%s517 + $0x298] sm:$0xff] %v684
                  %v686 = vld [vmem:[%s516 + $0x4a0] sm:$0xff]
                  %687 = vst [vmem:[%s517 + $0x2a0] sm:$0xff] %v686
                  %v688 = vld [vmem:[%s516 + $0x4a8] sm:$0xff]
                  %689 = vst [vmem:[%s517 + $0x2a8] sm:$0xff] %v688
                  %v690 = vld [vmem:[%s516 + $0x4b0] sm:$0xff]
                  %691 = vst [vmem:[%s517 + $0x2b0] sm:$0xff] %v690
                  %v692 = vld [vmem:[%s516 + $0x4b8] sm:$0xff]
                  %693 = vst [vmem:[%s517 + $0x2b8] sm:$0xff] %v692
                  %v694 = vld [vmem:[%s516 + $0x4c0] sm:$0xff]
                  %695 = vst [vmem:[%s517 + $0x2c0] sm:$0xff] %v694
                  %v696 = vld [vmem:[%s516 + $0x4c8] sm:$0xff]
                  %697 = vst [vmem:[%s517 + $0x2c8] sm:$0xff] %v696
                  %v698 = vld [vmem:[%s516 + $0x4d0] sm:$0xff]
                  %699 = vst [vmem:[%s517 + $0x2d0] sm:$0xff] %v698
                  %v700 = vld [vmem:[%s516 + $0x4d8] sm:$0xff]
                  %701 = vst [vmem:[%s517 + $0x2d8] sm:$0xff] %v700
                  %v702 = vld [vmem:[%s516 + $0x4e0] sm:$0xff]
                  %703 = vst [vmem:[%s517 + $0x2e0] sm:$0xff] %v702
                  %v704 = vld [vmem:[%s516 + $0x4e8] sm:$0xff]
                  %705 = vst [vmem:[%s517 + $0x2e8] sm:$0xff] %v704
                  %v706 = vld [vmem:[%s516 + $0x4f0] sm:$0xff]
                  %707 = vst [vmem:[%s517 + $0x2f0] sm:$0xff] %v706
                  %v708 = vld [vmem:[%s516 + $0x4f8] sm:$0xff]
                  %709 = vst [vmem:[%s517 + $0x2f8] sm:$0xff] %v708
                  %v710 = vld [vmem:[%s516 + $0x600] sm:$0xff]
                  %711 = vst [vmem:[%s517 + $0x300] sm:$0xff] %v710
                  %v712 = vld [vmem:[%s516 + $0x608] sm:$0xff]
                  %713 = vst [vmem:[%s517 + $0x308] sm:$0xff] %v712
                  %v714 = vld [vmem:[%s516 + $0x610] sm:$0xff]
                  %715 = vst [vmem:[%s517 + $0x310] sm:$0xff] %v714
                  %v716 = vld [vmem:[%s516 + $0x618] sm:$0xff]
                  %717 = vst [vmem:[%s517 + $0x318] sm:$0xff] %v716
                  %v718 = vld [vmem:[%s516 + $0x620] sm:$0xff]
                  %719 = vst [vmem:[%s517 + $0x320] sm:$0xff] %v718
                  %v720 = vld [vmem:[%s516 + $0x628] sm:$0xff]
                  %721 = vst [vmem:[%s517 + $0x328] sm:$0xff] %v720
                  %v722 = vld [vmem:[%s516 + $0x630] sm:$0xff]
                  %723 = vst [vmem:[%s517 + $0x330] sm:$0xff] %v722
                  %v724 = vld [vmem:[%s516 + $0x638] sm:$0xff]
                  %725 = vst [vmem:[%s517 + $0x338] sm:$0xff] %v724
                  %v726 = vld [vmem:[%s516 + $0x640] sm:$0xff]
                  %727 = vst [vmem:[%s517 + $0x340] sm:$0xff] %v726
                  %v728 = vld [vmem:[%s516 + $0x648] sm:$0xff]
                  %729 = vst [vmem:[%s517 + $0x348] sm:$0xff] %v728
                  %v730 = vld [vmem:[%s516 + $0x650] sm:$0xff]
                  %731 = vst [vmem:[%s517 + $0x350] sm:$0xff] %v730
                  %v732 = vld [vmem:[%s516 + $0x658] sm:$0xff]
                  %733 = vst [vmem:[%s517 + $0x358] sm:$0xff] %v732
                  %v734 = vld [vmem:[%s516 + $0x660] sm:$0xff]
                  %735 = vst [vmem:[%s517 + $0x360] sm:$0xff] %v734
                  %v736 = vld [vmem:[%s516 + $0x668] sm:$0xff]
                  %737 = vst [vmem:[%s517 + $0x368] sm:$0xff] %v736
                  %v738 = vld [vmem:[%s516 + $0x670] sm:$0xff]
                  %739 = vst [vmem:[%s517 + $0x370] sm:$0xff] %v738
                  %v740 = vld [vmem:[%s516 + $0x678] sm:$0xff]
                  %741 = vst [vmem:[%s517 + $0x378] sm:$0xff] %v740
                  %v742 = vld [vmem:[%s516 + $0x680] sm:$0xff]
                  %743 = vst [vmem:[%s517 + $0x380] sm:$0xff] %v742
                  %v744 = vld [vmem:[%s516 + $0x688] sm:$0xff]
                  %745 = vst [vmem:[%s517 + $0x388] sm:$0xff] %v744
                  %v746 = vld [vmem:[%s516 + $0x690] sm:$0xff]
                  %747 = vst [vmem:[%s517 + $0x390] sm:$0xff] %v746
                  %v748 = vld [vmem:[%s516 + $0x698] sm:$0xff]
                  %749 = vst [vmem:[%s517 + $0x398] sm:$0xff] %v748
                  %v750 = vld [vmem:[%s516 + $0x6a0] sm:$0xff]
                  %751 = vst [vmem:[%s517 + $0x3a0] sm:$0xff] %v750
                  %v752 = vld [vmem:[%s516 + $0x6a8] sm:$0xff]
                  %753 = vst [vmem:[%s517 + $0x3a8] sm:$0xff] %v752
                  %v754 = vld [vmem:[%s516 + $0x6b0] sm:$0xff]
                  %755 = vst [vmem:[%s517 + $0x3b0] sm:$0xff] %v754
                  %v756 = vld [vmem:[%s516 + $0x6b8] sm:$0xff]
                  %757 = vst [vmem:[%s517 + $0x3b8] sm:$0xff] %v756
                  %v758 = vld [vmem:[%s516 + $0x6c0] sm:$0xff]
                  %759 = vst [vmem:[%s517 + $0x3c0] sm:$0xff] %v758
                  %v760 = vld [vmem:[%s516 + $0x6c8] sm:$0xff]
                  %761 = vst [vmem:[%s517 + $0x3c8] sm:$0xff] %v760
                  %v762 = vld [vmem:[%s516 + $0x6d0] sm:$0xff]
                  %763 = vst [vmem:[%s517 + $0x3d0] sm:$0xff] %v762
                  %v764 = vld [vmem:[%s516 + $0x6d8] sm:$0xff]
                  %765 = vst [vmem:[%s517 + $0x3d8] sm:$0xff] %v764
                  %v766 = vld [vmem:[%s516 + $0x6e0] sm:$0xff]
                  %767 = vst [vmem:[%s517 + $0x3e0] sm:$0xff] %v766
                  %v768 = vld [vmem:[%s516 + $0x6e8] sm:$0xff]
                  %769 = vst [vmem:[%s517 + $0x3e8] sm:$0xff] %v768
                  %v770 = vld [vmem:[%s516 + $0x6f0] sm:$0xff]
                  %771 = vst [vmem:[%s517 + $0x3f0] sm:$0xff] %v770
                  %v772 = vld [vmem:[%s516 + $0x6f8] sm:$0xff]
                  %773 = vst [vmem:[%s517 + $0x3f8] sm:$0xff] %v772
                  %v774 = vld [vmem:[%s516 + $0x800] sm:$0xff]
                  %775 = vst [vmem:[%s517 + $0x400] sm:$0xff] %v774
                  %v776 = vld [vmem:[%s516 + $0x808] sm:$0xff]
                  %777 = vst [vmem:[%s517 + $0x408] sm:$0xff] %v776
                  %v778 = vld [vmem:[%s516 + $0x810] sm:$0xff]
                  %779 = vst [vmem:[%s517 + $0x410] sm:$0xff] %v778
                  %v780 = vld [vmem:[%s516 + $0x818] sm:$0xff]
                  %781 = vst [vmem:[%s517 + $0x418] sm:$0xff] %v780
                  %v782 = vld [vmem:[%s516 + $0x820] sm:$0xff]
                  %783 = vst [vmem:[%s517 + $0x420] sm:$0xff] %v782
                  %v784 = vld [vmem:[%s516 + $0x828] sm:$0xff]
                  %785 = vst [vmem:[%s517 + $0x428] sm:$0xff] %v784
                  %v786 = vld [vmem:[%s516 + $0x830] sm:$0xff]
                  %787 = vst [vmem:[%s517 + $0x430] sm:$0xff] %v786
                  %v788 = vld [vmem:[%s516 + $0x838] sm:$0xff]
                  %789 = vst [vmem:[%s517 + $0x438] sm:$0xff] %v788
                  %v790 = vld [vmem:[%s516 + $0x840] sm:$0xff]
                  %791 = vst [vmem:[%s517 + $0x440] sm:$0xff] %v790
                  %v792 = vld [vmem:[%s516 + $0x848] sm:$0xff]
                  %793 = vst [vmem:[%s517 + $0x448] sm:$0xff] %v792
                  %v794 = vld [vmem:[%s516 + $0x850] sm:$0xff]
                  %795 = vst [vmem:[%s517 + $0x450] sm:$0xff] %v794
                  %v796 = vld [vmem:[%s516 + $0x858] sm:$0xff]
                  %797 = vst [vmem:[%s517 + $0x458] sm:$0xff] %v796
                  %v798 = vld [vmem:[%s516 + $0x860] sm:$0xff]
                  %799 = vst [vmem:[%s517 + $0x460] sm:$0xff] %v798
                  %v800 = vld [vmem:[%s516 + $0x868] sm:$0xff]
                  %801 = vst [vmem:[%s517 + $0x468] sm:$0xff] %v800
                  %v802 = vld [vmem:[%s516 + $0x870] sm:$0xff]
                  %803 = vst [vmem:[%s517 + $0x470] sm:$0xff] %v802
                  %v804 = vld [vmem:[%s516 + $0x878] sm:$0xff]
                  %805 = vst [vmem:[%s517 + $0x478] sm:$0xff] %v804
                  %v806 = vld [vmem:[%s516 + $0x880] sm:$0xff]
                  %807 = vst [vmem:[%s517 + $0x480] sm:$0xff] %v806
                  %v808 = vld [vmem:[%s516 + $0x888] sm:$0xff]
                  %809 = vst [vmem:[%s517 + $0x488] sm:$0xff] %v808
                  %v810 = vld [vmem:[%s516 + $0x890] sm:$0xff]
                  %811 = vst [vmem:[%s517 + $0x490] sm:$0xff] %v810
                  %v812 = vld [vmem:[%s516 + $0x898] sm:$0xff]
                  %813 = vst [vmem:[%s517 + $0x498] sm:$0xff] %v812
                  %v814 = vld [vmem:[%s516 + $0x8a0] sm:$0xff]
                  %815 = vst [vmem:[%s517 + $0x4a0] sm:$0xff] %v814
                  %v816 = vld [vmem:[%s516 + $0x8a8] sm:$0xff]
                  %817 = vst [vmem:[%s517 + $0x4a8] sm:$0xff] %v816
                  %v818 = vld [vmem:[%s516 + $0x8b0] sm:$0xff]
                  %819 = vst [vmem:[%s517 + $0x4b0] sm:$0xff] %v818
                  %v820 = vld [vmem:[%s516 + $0x8b8] sm:$0xff]
                  %821 = vst [vmem:[%s517 + $0x4b8] sm:$0xff] %v820
                  %v822 = vld [vmem:[%s516 + $0x8c0] sm:$0xff]
                  %823 = vst [vmem:[%s517 + $0x4c0] sm:$0xff] %v822
                  %v824 = vld [vmem:[%s516 + $0x8c8] sm:$0xff]
                  %825 = vst [vmem:[%s517 + $0x4c8] sm:$0xff] %v824
                  %v826 = vld [vmem:[%s516 + $0x8d0] sm:$0xff]
                  %827 = vst [vmem:[%s517 + $0x4d0] sm:$0xff] %v826
                  %v828 = vld [vmem:[%s516 + $0x8d8] sm:$0xff]
                  %829 = vst [vmem:[%s517 + $0x4d8] sm:$0xff] %v828
                  %v830 = vld [vmem:[%s516 + $0x8e0] sm:$0xff]
                  %831 = vst [vmem:[%s517 + $0x4e0] sm:$0xff] %v830
                  %v832 = vld [vmem:[%s516 + $0x8e8] sm:$0xff]
                  %833 = vst [vmem:[%s517 + $0x4e8] sm:$0xff] %v832
                  %v834 = vld [vmem:[%s516 + $0x8f0] sm:$0xff]
                  %835 = vst [vmem:[%s517 + $0x4f0] sm:$0xff] %v834
                  %v836 = vld [vmem:[%s516 + $0x8f8] sm:$0xff]
                  %837 = vst [vmem:[%s517 + $0x4f8] sm:$0xff] %v836
                $region56: #{pos_emd_forward.1} parent=50 // loop_footer
                  %s515 = sadd.s32 1, %s511
                $region57: #{pos_emd_forward.1} parent=50 // loop_footer_branch
                  %510 = sbr.rel target = $region53
                $region58: #{pos_emd_forward.1} parent=50 // loop_exit
                  _
              $region51: #{pos_emd_forward.1} parent=35 // pred_fallthru
                _
              // Predicated region
              $region59: #{pos_emd_forward.1} parent=35 // pred_check
                _
              $region60: #{pos_emd_forward.1} parent=35 // pred_check_branch
                %839 = sbr.rel target = $region62
              $region61: #{pos_emd_forward.1} parent=35 // pred_region
                _
              $region62: #{pos_emd_forward.1} parent=35 // pred_fallthru
                _
            $region36: #{pos_emd_forward.1} parent=31 // pred_fallthru
              _
            // Predicated region
            $region37: #{pos_emd_forward.1} parent=31 // pred_check
              _
            $region38: #{pos_emd_forward.1} parent=31 // pred_check_branch
              %177 = sbr.rel target = $region40
            $region39: #{pos_emd_forward.1} parent=31 // pred_region
              %s179 = ssub.s32 256, 1
              loop: start=0, step=1, limit=1
              $region41: #{pos_emd_forward.1} parent=39 // loop_pre_header
                _
              $region42: #{pos_emd_forward.1} parent=39 // loop_header
                %s181 = sphi 0, %s185
                %p182 = scmp.ge.s32.totalorder %s181, 1
                %s186 = sphi %s171, %s171
                %s187 = sphi %s165, %s165
              $region43: #{pos_emd_forward.1} parent=39 // loop_header_branch
                %184 = sbr.rel (%p182) target = $region47
              $region44: #{pos_emd_forward.1} parent=39 // loop_body
                %v188 = vld [vmem:[%s186] sm:%s179]
                %189 = vst [vmem:[%s187] sm:%s179] %v188
                %v190 = vld [vmem:[%s186 + $0x8] sm:%s179]
                %191 = vst [vmem:[%s187 + $0x8] sm:%s179] %v190
                %v192 = vld [vmem:[%s186 + $0x10] sm:%s179]
                %193 = vst [vmem:[%s187 + $0x10] sm:%s179] %v192
                %v194 = vld [vmem:[%s186 + $0x18] sm:%s179]
                %195 = vst [vmem:[%s187 + $0x18] sm:%s179] %v194
                %v196 = vld [vmem:[%s186 + $0x20] sm:%s179]
                %197 = vst [vmem:[%s187 + $0x20] sm:%s179] %v196
                %v198 = vld [vmem:[%s186 + $0x28] sm:%s179]
                %199 = vst [vmem:[%s187 + $0x28] sm:%s179] %v198
                %v200 = vld [vmem:[%s186 + $0x30] sm:%s179]
                %201 = vst [vmem:[%s187 + $0x30] sm:%s179] %v200
                %v202 = vld [vmem:[%s186 + $0x38] sm:%s179]
                %203 = vst [vmem:[%s187 + $0x38] sm:%s179] %v202
                %v204 = vld [vmem:[%s186 + $0x40] sm:%s179]
                %205 = vst [vmem:[%s187 + $0x40] sm:%s179] %v204
                %v206 = vld [vmem:[%s186 + $0x48] sm:%s179]
                %207 = vst [vmem:[%s187 + $0x48] sm:%s179] %v206
                %v208 = vld [vmem:[%s186 + $0x50] sm:%s179]
                %209 = vst [vmem:[%s187 + $0x50] sm:%s179] %v208
                %v210 = vld [vmem:[%s186 + $0x58] sm:%s179]
                %211 = vst [vmem:[%s187 + $0x58] sm:%s179] %v210
                %v212 = vld [vmem:[%s186 + $0x60] sm:%s179]
                %213 = vst [vmem:[%s187 + $0x60] sm:%s179] %v212
                %v214 = vld [vmem:[%s186 + $0x68] sm:%s179]
                %215 = vst [vmem:[%s187 + $0x68] sm:%s179] %v214
                %v216 = vld [vmem:[%s186 + $0x70] sm:%s179]
                %217 = vst [vmem:[%s187 + $0x70] sm:%s179] %v216
                %v218 = vld [vmem:[%s186 + $0x78] sm:%s179]
                %219 = vst [vmem:[%s187 + $0x78] sm:%s179] %v218
                %v220 = vld [vmem:[%s186 + $0x80] sm:%s179]
                %221 = vst [vmem:[%s187 + $0x80] sm:%s179] %v220
                %v222 = vld [vmem:[%s186 + $0x88] sm:%s179]
                %223 = vst [vmem:[%s187 + $0x88] sm:%s179] %v222
                %v224 = vld [vmem:[%s186 + $0x90] sm:%s179]
                %225 = vst [vmem:[%s187 + $0x90] sm:%s179] %v224
                %v226 = vld [vmem:[%s186 + $0x98] sm:%s179]
                %227 = vst [vmem:[%s187 + $0x98] sm:%s179] %v226
                %v228 = vld [vmem:[%s186 + $0xa0] sm:%s179]
                %229 = vst [vmem:[%s187 + $0xa0] sm:%s179] %v228
                %v230 = vld [vmem:[%s186 + $0xa8] sm:%s179]
                %231 = vst [vmem:[%s187 + $0xa8] sm:%s179] %v230
                %v232 = vld [vmem:[%s186 + $0xb0] sm:%s179]
                %233 = vst [vmem:[%s187 + $0xb0] sm:%s179] %v232
                %v234 = vld [vmem:[%s186 + $0xb8] sm:%s179]
                %235 = vst [vmem:[%s187 + $0xb8] sm:%s179] %v234
                %v236 = vld [vmem:[%s186 + $0xc0] sm:%s179]
                %237 = vst [vmem:[%s187 + $0xc0] sm:%s179] %v236
                %v238 = vld [vmem:[%s186 + $0xc8] sm:%s179]
                %239 = vst [vmem:[%s187 + $0xc8] sm:%s179] %v238
                %v240 = vld [vmem:[%s186 + $0xd0] sm:%s179]
                %241 = vst [vmem:[%s187 + $0xd0] sm:%s179] %v240
                %v242 = vld [vmem:[%s186 + $0xd8] sm:%s179]
                %243 = vst [vmem:[%s187 + $0xd8] sm:%s179] %v242
                %v244 = vld [vmem:[%s186 + $0xe0] sm:%s179]
                %245 = vst [vmem:[%s187 + $0xe0] sm:%s179] %v244
                %v246 = vld [vmem:[%s186 + $0xe8] sm:%s179]
                %247 = vst [vmem:[%s187 + $0xe8] sm:%s179] %v246
                %v248 = vld [vmem:[%s186 + $0xf0] sm:%s179]
                %249 = vst [vmem:[%s187 + $0xf0] sm:%s179] %v248
                %v250 = vld [vmem:[%s186 + $0xf8] sm:%s179]
                %251 = vst [vmem:[%s187 + $0xf8] sm:%s179] %v250
                %v252 = vld [vmem:[%s186 + $0x200] sm:%s179]
                %253 = vst [vmem:[%s187 + $0x100] sm:%s179] %v252
                %v254 = vld [vmem:[%s186 + $0x208] sm:%s179]
                %255 = vst [vmem:[%s187 + $0x108] sm:%s179] %v254
                %v256 = vld [vmem:[%s186 + $0x210] sm:%s179]
                %257 = vst [vmem:[%s187 + $0x110] sm:%s179] %v256
                %v258 = vld [vmem:[%s186 + $0x218] sm:%s179]
                %259 = vst [vmem:[%s187 + $0x118] sm:%s179] %v258
                %v260 = vld [vmem:[%s186 + $0x220] sm:%s179]
                %261 = vst [vmem:[%s187 + $0x120] sm:%s179] %v260
                %v262 = vld [vmem:[%s186 + $0x228] sm:%s179]
                %263 = vst [vmem:[%s187 + $0x128] sm:%s179] %v262
                %v264 = vld [vmem:[%s186 + $0x230] sm:%s179]
                %265 = vst [vmem:[%s187 + $0x130] sm:%s179] %v264
                %v266 = vld [vmem:[%s186 + $0x238] sm:%s179]
                %267 = vst [vmem:[%s187 + $0x138] sm:%s179] %v266
                %v268 = vld [vmem:[%s186 + $0x240] sm:%s179]
                %269 = vst [vmem:[%s187 + $0x140] sm:%s179] %v268
                %v270 = vld [vmem:[%s186 + $0x248] sm:%s179]
                %271 = vst [vmem:[%s187 + $0x148] sm:%s179] %v270
                %v272 = vld [vmem:[%s186 + $0x250] sm:%s179]
                %273 = vst [vmem:[%s187 + $0x150] sm:%s179] %v272
                %v274 = vld [vmem:[%s186 + $0x258] sm:%s179]
                %275 = vst [vmem:[%s187 + $0x158] sm:%s179] %v274
                %v276 = vld [vmem:[%s186 + $0x260] sm:%s179]
                %277 = vst [vmem:[%s187 + $0x160] sm:%s179] %v276
                %v278 = vld [vmem:[%s186 + $0x268] sm:%s179]
                %279 = vst [vmem:[%s187 + $0x168] sm:%s179] %v278
                %v280 = vld [vmem:[%s186 + $0x270] sm:%s179]
                %281 = vst [vmem:[%s187 + $0x170] sm:%s179] %v280
                %v282 = vld [vmem:[%s186 + $0x278] sm:%s179]
                %283 = vst [vmem:[%s187 + $0x178] sm:%s179] %v282
                %v284 = vld [vmem:[%s186 + $0x280] sm:%s179]
                %285 = vst [vmem:[%s187 + $0x180] sm:%s179] %v284
                %v286 = vld [vmem:[%s186 + $0x288] sm:%s179]
                %287 = vst [vmem:[%s187 + $0x188] sm:%s179] %v286
                %v288 = vld [vmem:[%s186 + $0x290] sm:%s179]
                %289 = vst [vmem:[%s187 + $0x190] sm:%s179] %v288
                %v290 = vld [vmem:[%s186 + $0x298] sm:%s179]
                %291 = vst [vmem:[%s187 + $0x198] sm:%s179] %v290
                %v292 = vld [vmem:[%s186 + $0x2a0] sm:%s179]
                %293 = vst [vmem:[%s187 + $0x1a0] sm:%s179] %v292
                %v294 = vld [vmem:[%s186 + $0x2a8] sm:%s179]
                %295 = vst [vmem:[%s187 + $0x1a8] sm:%s179] %v294
                %v296 = vld [vmem:[%s186 + $0x2b0] sm:%s179]
                %297 = vst [vmem:[%s187 + $0x1b0] sm:%s179] %v296
                %v298 = vld [vmem:[%s186 + $0x2b8] sm:%s179]
                %299 = vst [vmem:[%s187 + $0x1b8] sm:%s179] %v298
                %v300 = vld [vmem:[%s186 + $0x2c0] sm:%s179]
                %301 = vst [vmem:[%s187 + $0x1c0] sm:%s179] %v300
                %v302 = vld [vmem:[%s186 + $0x2c8] sm:%s179]
                %303 = vst [vmem:[%s187 + $0x1c8] sm:%s179] %v302
                %v304 = vld [vmem:[%s186 + $0x2d0] sm:%s179]
                %305 = vst [vmem:[%s187 + $0x1d0] sm:%s179] %v304
                %v306 = vld [vmem:[%s186 + $0x2d8] sm:%s179]
                %307 = vst [vmem:[%s187 + $0x1d8] sm:%s179] %v306
                %v308 = vld [vmem:[%s186 + $0x2e0] sm:%s179]
                %309 = vst [vmem:[%s187 + $0x1e0] sm:%s179] %v308
                %v310 = vld [vmem:[%s186 + $0x2e8] sm:%s179]
                %311 = vst [vmem:[%s187 + $0x1e8] sm:%s179] %v310
                %v312 = vld [vmem:[%s186 + $0x2f0] sm:%s179]
                %313 = vst [vmem:[%s187 + $0x1f0] sm:%s179] %v312
                %v314 = vld [vmem:[%s186 + $0x2f8] sm:%s179]
                %315 = vst [vmem:[%s187 + $0x1f8] sm:%s179] %v314
                %v316 = vld [vmem:[%s186 + $0x400] sm:%s179]
                %317 = vst [vmem:[%s187 + $0x200] sm:%s179] %v316
                %v318 = vld [vmem:[%s186 + $0x408] sm:%s179]
                %319 = vst [vmem:[%s187 + $0x208] sm:%s179] %v318
                %v320 = vld [vmem:[%s186 + $0x410] sm:%s179]
                %321 = vst [vmem:[%s187 + $0x210] sm:%s179] %v320
                %v322 = vld [vmem:[%s186 + $0x418] sm:%s179]
                %323 = vst [vmem:[%s187 + $0x218] sm:%s179] %v322
                %v324 = vld [vmem:[%s186 + $0x420] sm:%s179]
                %325 = vst [vmem:[%s187 + $0x220] sm:%s179] %v324
                %v326 = vld [vmem:[%s186 + $0x428] sm:%s179]
                %327 = vst [vmem:[%s187 + $0x228] sm:%s179] %v326
                %v328 = vld [vmem:[%s186 + $0x430] sm:%s179]
                %329 = vst [vmem:[%s187 + $0x230] sm:%s179] %v328
                %v330 = vld [vmem:[%s186 + $0x438] sm:%s179]
                %331 = vst [vmem:[%s187 + $0x238] sm:%s179] %v330
                %v332 = vld [vmem:[%s186 + $0x440] sm:%s179]
                %333 = vst [vmem:[%s187 + $0x240] sm:%s179] %v332
                %v334 = vld [vmem:[%s186 + $0x448] sm:%s179]
                %335 = vst [vmem:[%s187 + $0x248] sm:%s179] %v334
                %v336 = vld [vmem:[%s186 + $0x450] sm:%s179]
                %337 = vst [vmem:[%s187 + $0x250] sm:%s179] %v336
                %v338 = vld [vmem:[%s186 + $0x458] sm:%s179]
                %339 = vst [vmem:[%s187 + $0x258] sm:%s179] %v338
                %v340 = vld [vmem:[%s186 + $0x460] sm:%s179]
                %341 = vst [vmem:[%s187 + $0x260] sm:%s179] %v340
                %v342 = vld [vmem:[%s186 + $0x468] sm:%s179]
                %343 = vst [vmem:[%s187 + $0x268] sm:%s179] %v342
                %v344 = vld [vmem:[%s186 + $0x470] sm:%s179]
                %345 = vst [vmem:[%s187 + $0x270] sm:%s179] %v344
                %v346 = vld [vmem:[%s186 + $0x478] sm:%s179]
                %347 = vst [vmem:[%s187 + $0x278] sm:%s179] %v346
                %v348 = vld [vmem:[%s186 + $0x480] sm:%s179]
                %349 = vst [vmem:[%s187 + $0x280] sm:%s179] %v348
                %v350 = vld [vmem:[%s186 + $0x488] sm:%s179]
                %351 = vst [vmem:[%s187 + $0x288] sm:%s179] %v350
                %v352 = vld [vmem:[%s186 + $0x490] sm:%s179]
                %353 = vst [vmem:[%s187 + $0x290] sm:%s179] %v352
                %v354 = vld [vmem:[%s186 + $0x498] sm:%s179]
                %355 = vst [vmem:[%s187 + $0x298] sm:%s179] %v354
                %v356 = vld [vmem:[%s186 + $0x4a0] sm:%s179]
                %357 = vst [vmem:[%s187 + $0x2a0] sm:%s179] %v356
                %v358 = vld [vmem:[%s186 + $0x4a8] sm:%s179]
                %359 = vst [vmem:[%s187 + $0x2a8] sm:%s179] %v358
                %v360 = vld [vmem:[%s186 + $0x4b0] sm:%s179]
                %361 = vst [vmem:[%s187 + $0x2b0] sm:%s179] %v360
                %v362 = vld [vmem:[%s186 + $0x4b8] sm:%s179]
                %363 = vst [vmem:[%s187 + $0x2b8] sm:%s179] %v362
                %v364 = vld [vmem:[%s186 + $0x4c0] sm:%s179]
                %365 = vst [vmem:[%s187 + $0x2c0] sm:%s179] %v364
                %v366 = vld [vmem:[%s186 + $0x4c8] sm:%s179]
                %367 = vst [vmem:[%s187 + $0x2c8] sm:%s179] %v366
                %v368 = vld [vmem:[%s186 + $0x4d0] sm:%s179]
                %369 = vst [vmem:[%s187 + $0x2d0] sm:%s179] %v368
                %v370 = vld [vmem:[%s186 + $0x4d8] sm:%s179]
                %371 = vst [vmem:[%s187 + $0x2d8] sm:%s179] %v370
                %v372 = vld [vmem:[%s186 + $0x4e0] sm:%s179]
                %373 = vst [vmem:[%s187 + $0x2e0] sm:%s179] %v372
                %v374 = vld [vmem:[%s186 + $0x4e8] sm:%s179]
                %375 = vst [vmem:[%s187 + $0x2e8] sm:%s179] %v374
                %v376 = vld [vmem:[%s186 + $0x4f0] sm:%s179]
                %377 = vst [vmem:[%s187 + $0x2f0] sm:%s179] %v376
                %v378 = vld [vmem:[%s186 + $0x4f8] sm:%s179]
                %379 = vst [vmem:[%s187 + $0x2f8] sm:%s179] %v378
                %v380 = vld [vmem:[%s186 + $0x600] sm:%s179]
                %381 = vst [vmem:[%s187 + $0x300] sm:%s179] %v380
                %v382 = vld [vmem:[%s186 + $0x608] sm:%s179]
                %383 = vst [vmem:[%s187 + $0x308] sm:%s179] %v382
                %v384 = vld [vmem:[%s186 + $0x610] sm:%s179]
                %385 = vst [vmem:[%s187 + $0x310] sm:%s179] %v384
                %v386 = vld [vmem:[%s186 + $0x618] sm:%s179]
                %387 = vst [vmem:[%s187 + $0x318] sm:%s179] %v386
                %v388 = vld [vmem:[%s186 + $0x620] sm:%s179]
                %389 = vst [vmem:[%s187 + $0x320] sm:%s179] %v388
                %v390 = vld [vmem:[%s186 + $0x628] sm:%s179]
                %391 = vst [vmem:[%s187 + $0x328] sm:%s179] %v390
                %v392 = vld [vmem:[%s186 + $0x630] sm:%s179]
                %393 = vst [vmem:[%s187 + $0x330] sm:%s179] %v392
                %v394 = vld [vmem:[%s186 + $0x638] sm:%s179]
                %395 = vst [vmem:[%s187 + $0x338] sm:%s179] %v394
                %v396 = vld [vmem:[%s186 + $0x640] sm:%s179]
                %397 = vst [vmem:[%s187 + $0x340] sm:%s179] %v396
                %v398 = vld [vmem:[%s186 + $0x648] sm:%s179]
                %399 = vst [vmem:[%s187 + $0x348] sm:%s179] %v398
                %v400 = vld [vmem:[%s186 + $0x650] sm:%s179]
                %401 = vst [vmem:[%s187 + $0x350] sm:%s179] %v400
                %v402 = vld [vmem:[%s186 + $0x658] sm:%s179]
                %403 = vst [vmem:[%s187 + $0x358] sm:%s179] %v402
                %v404 = vld [vmem:[%s186 + $0x660] sm:%s179]
                %405 = vst [vmem:[%s187 + $0x360] sm:%s179] %v404
                %v406 = vld [vmem:[%s186 + $0x668] sm:%s179]
                %407 = vst [vmem:[%s187 + $0x368] sm:%s179] %v406
                %v408 = vld [vmem:[%s186 + $0x670] sm:%s179]
                %409 = vst [vmem:[%s187 + $0x370] sm:%s179] %v408
                %v410 = vld [vmem:[%s186 + $0x678] sm:%s179]
                %411 = vst [vmem:[%s187 + $0x378] sm:%s179] %v410
                %v412 = vld [vmem:[%s186 + $0x680] sm:%s179]
                %413 = vst [vmem:[%s187 + $0x380] sm:%s179] %v412
                %v414 = vld [vmem:[%s186 + $0x688] sm:%s179]
                %415 = vst [vmem:[%s187 + $0x388] sm:%s179] %v414
                %v416 = vld [vmem:[%s186 + $0x690] sm:%s179]
                %417 = vst [vmem:[%s187 + $0x390] sm:%s179] %v416
                %v418 = vld [vmem:[%s186 + $0x698] sm:%s179]
                %419 = vst [vmem:[%s187 + $0x398] sm:%s179] %v418
                %v420 = vld [vmem:[%s186 + $0x6a0] sm:%s179]
                %421 = vst [vmem:[%s187 + $0x3a0] sm:%s179] %v420
                %v422 = vld [vmem:[%s186 + $0x6a8] sm:%s179]
                %423 = vst [vmem:[%s187 + $0x3a8] sm:%s179] %v422
                %v424 = vld [vmem:[%s186 + $0x6b0] sm:%s179]
                %425 = vst [vmem:[%s187 + $0x3b0] sm:%s179] %v424
                %v426 = vld [vmem:[%s186 + $0x6b8] sm:%s179]
                %427 = vst [vmem:[%s187 + $0x3b8] sm:%s179] %v426
                %v428 = vld [vmem:[%s186 + $0x6c0] sm:%s179]
                %429 = vst [vmem:[%s187 + $0x3c0] sm:%s179] %v428
                %v430 = vld [vmem:[%s186 + $0x6c8] sm:%s179]
                %431 = vst [vmem:[%s187 + $0x3c8] sm:%s179] %v430
                %v432 = vld [vmem:[%s186 + $0x6d0] sm:%s179]
                %433 = vst [vmem:[%s187 + $0x3d0] sm:%s179] %v432
                %v434 = vld [vmem:[%s186 + $0x6d8] sm:%s179]
                %435 = vst [vmem:[%s187 + $0x3d8] sm:%s179] %v434
                %v436 = vld [vmem:[%s186 + $0x6e0] sm:%s179]
                %437 = vst [vmem:[%s187 + $0x3e0] sm:%s179] %v436
                %v438 = vld [vmem:[%s186 + $0x6e8] sm:%s179]
                %439 = vst [vmem:[%s187 + $0x3e8] sm:%s179] %v438
                %v440 = vld [vmem:[%s186 + $0x6f0] sm:%s179]
                %441 = vst [vmem:[%s187 + $0x3f0] sm:%s179] %v440
                %v442 = vld [vmem:[%s186 + $0x6f8] sm:%s179]
                %443 = vst [vmem:[%s187 + $0x3f8] sm:%s179] %v442
                %v444 = vld [vmem:[%s186 + $0x800] sm:%s179]
                %445 = vst [vmem:[%s187 + $0x400] sm:%s179] %v444
                %v446 = vld [vmem:[%s186 + $0x808] sm:%s179]
                %447 = vst [vmem:[%s187 + $0x408] sm:%s179] %v446
                %v448 = vld [vmem:[%s186 + $0x810] sm:%s179]
                %449 = vst [vmem:[%s187 + $0x410] sm:%s179] %v448
                %v450 = vld [vmem:[%s186 + $0x818] sm:%s179]
                %451 = vst [vmem:[%s187 + $0x418] sm:%s179] %v450
                %v452 = vld [vmem:[%s186 + $0x820] sm:%s179]
                %453 = vst [vmem:[%s187 + $0x420] sm:%s179] %v452
                %v454 = vld [vmem:[%s186 + $0x828] sm:%s179]
                %455 = vst [vmem:[%s187 + $0x428] sm:%s179] %v454
                %v456 = vld [vmem:[%s186 + $0x830] sm:%s179]
                %457 = vst [vmem:[%s187 + $0x430] sm:%s179] %v456
                %v458 = vld [vmem:[%s186 + $0x838] sm:%s179]
                %459 = vst [vmem:[%s187 + $0x438] sm:%s179] %v458
                %v460 = vld [vmem:[%s186 + $0x840] sm:%s179]
                %461 = vst [vmem:[%s187 + $0x440] sm:%s179] %v460
                %v462 = vld [vmem:[%s186 + $0x848] sm:%s179]
                %463 = vst [vmem:[%s187 + $0x448] sm:%s179] %v462
                %v464 = vld [vmem:[%s186 + $0x850] sm:%s179]
                %465 = vst [vmem:[%s187 + $0x450] sm:%s179] %v464
                %v466 = vld [vmem:[%s186 + $0x858] sm:%s179]
                %467 = vst [vmem:[%s187 + $0x458] sm:%s179] %v466
                %v468 = vld [vmem:[%s186 + $0x860] sm:%s179]
                %469 = vst [vmem:[%s187 + $0x460] sm:%s179] %v468
                %v470 = vld [vmem:[%s186 + $0x868] sm:%s179]
                %471 = vst [vmem:[%s187 + $0x468] sm:%s179] %v470
                %v472 = vld [vmem:[%s186 + $0x870] sm:%s179]
                %473 = vst [vmem:[%s187 + $0x470] sm:%s179] %v472
                %v474 = vld [vmem:[%s186 + $0x878] sm:%s179]
                %475 = vst [vmem:[%s187 + $0x478] sm:%s179] %v474
                %v476 = vld [vmem:[%s186 + $0x880] sm:%s179]
                %477 = vst [vmem:[%s187 + $0x480] sm:%s179] %v476
                %v478 = vld [vmem:[%s186 + $0x888] sm:%s179]
                %479 = vst [vmem:[%s187 + $0x488] sm:%s179] %v478
                %v480 = vld [vmem:[%s186 + $0x890] sm:%s179]
                %481 = vst [vmem:[%s187 + $0x490] sm:%s179] %v480
                %v482 = vld [vmem:[%s186 + $0x898] sm:%s179]
                %483 = vst [vmem:[%s187 + $0x498] sm:%s179] %v482
                %v484 = vld [vmem:[%s186 + $0x8a0] sm:%s179]
                %485 = vst [vmem:[%s187 + $0x4a0] sm:%s179] %v484
                %v486 = vld [vmem:[%s186 + $0x8a8] sm:%s179]
                %487 = vst [vmem:[%s187 + $0x4a8] sm:%s179] %v486
                %v488 = vld [vmem:[%s186 + $0x8b0] sm:%s179]
                %489 = vst [vmem:[%s187 + $0x4b0] sm:%s179] %v488
                %v490 = vld [vmem:[%s186 + $0x8b8] sm:%s179]
                %491 = vst [vmem:[%s187 + $0x4b8] sm:%s179] %v490
                %v492 = vld [vmem:[%s186 + $0x8c0] sm:%s179]
                %493 = vst [vmem:[%s187 + $0x4c0] sm:%s179] %v492
                %v494 = vld [vmem:[%s186 + $0x8c8] sm:%s179]
                %495 = vst [vmem:[%s187 + $0x4c8] sm:%s179] %v494
                %v496 = vld [vmem:[%s186 + $0x8d0] sm:%s179]
                %497 = vst [vmem:[%s187 + $0x4d0] sm:%s179] %v496
                %v498 = vld [vmem:[%s186 + $0x8d8] sm:%s179]
                %499 = vst [vmem:[%s187 + $0x4d8] sm:%s179] %v498
                %v500 = vld [vmem:[%s186 + $0x8e0] sm:%s179]
                %501 = vst [vmem:[%s187 + $0x4e0] sm:%s179] %v500
                %v502 = vld [vmem:[%s186 + $0x8e8] sm:%s179]
                %503 = vst [vmem:[%s187 + $0x4e8] sm:%s179] %v502
                %v504 = vld [vmem:[%s186 + $0x8f0] sm:%s179]
                %505 = vst [vmem:[%s187 + $0x4f0] sm:%s179] %v504
                %v506 = vld [vmem:[%s186 + $0x8f8] sm:%s179]
                %507 = vst [vmem:[%s187 + $0x4f8] sm:%s179] %v506
              $region45: #{pos_emd_forward.1} parent=39 // loop_footer
                %s185 = sadd.s32 1, %s181
              $region46: #{pos_emd_forward.1} parent=39 // loop_footer_branch
                %180 = sbr.rel target = $region42
              $region47: #{pos_emd_forward.1} parent=39 // loop_exit
                _
            $region40: #{pos_emd_forward.1} parent=31 // pred_fallthru
              _
          $region32: #{pos_emd_forward.1} parent=27 // pred_fallthru
            _
          %840 = vnop
        $region28: #{pos_emd_forward.1} parent=23 // pred_fallthru
          _
      $region24: #{pos_emd_forward.1} parent=5 // pred_fallthru
        _
      %p841 = scmp.le.s32.totalorder 1, %s12
      %p842 = scmp.lt.s32.totalorder %s12, 3
      %p843 = pnand %p841, %p842
      %p844 = pneg %p843
      // Predicated region
      $region63: #{pos_emd_forward.1} parent=5 // pred_check
        _
      $region64: #{pos_emd_forward.1} parent=5 // pred_check_branch
        %846 = sbr.rel (%p843) target = $region66
      $region65: #{pos_emd_forward.1} parent=5 // pred_region
        %s847 = ssub.s32 %s12, 1
        %s848 = sand.u32 %s39, 1
        %s849 = sand.u32 %s39, 1
        %s850 = smul.addr %s849, 1280
        %s851 = scalar_lea.vmem [#allocation2], %s850
        // Predicated region
        $region67: #{pos_emd_forward.1} parent=65 // pred_check
          %p852 = pneg %p52
        $region68: #{pos_emd_forward.1} parent=65 // pred_check_branch
          %854 = sbr.rel (%p852) target = $region70
        $region69: #{pos_emd_forward.1} parent=65 // pred_region
          _
        $region70: #{pos_emd_forward.1} parent=65 // pred_fallthru
          _
        %s855 = sand.u32 %s39, 1
        %s856 = sand.u32 %s39, 1
        %s857 = smul.addr %s856, 1280
        %s858 = scalar_lea.vmem [#allocation2], %s857
        %p859 = pneg %p52
        %p860 = pneg %p49
        %p861 = pneg %p73
        %p862 = pneg %p70
        %s863 = smul.u32 5, %s21
        %p864 = scmp.lt.s32.totalorder %s863, 4
        %s865 = scalar_select %p864, %s863, 4
        %s866 = smul.addr %s865, 64
        %s867 = smul.addr %s866, 8
        %s868 = scalar_lea.vmem %s2, %s867
        %p869 = pneg %p99
        %p870 = pneg %p96
        %p871 = pneg %p127
        %p872 = pneg %p124
        %s873 = sand.u32 %s114, 1
        %s874 = scalar_lea.sflag [#allocation4], %s873
        %s875 = sand.u32 %s114, 1
        %s876 = smul.addr %s875, 2560
        %s877 = scalar_lea.vmem [#allocation3], %s876
        %s878 = smul.u32 5, %s21
        %s879 = smul.u32 5, %s21
        %p880 = scmp.lt.s32.totalorder %s879, 4
        %s881 = scalar_select %p880, %s879, 4
        %s882 = smul.addr %s881, 64
        %s883 = smul.addr %s882, 8
        %s884 = scalar_lea.vmem %s2, %s883
        %s885 = smul.u32 5, %s21
        %s886 = smul.u32 5, %s21
        %v887 = vld [vmem:[%s851] sm:$0xff]
        %v888 = vld [vmem:[%s851 + $0x8] sm:$0xff]
        %v889 = vld [vmem:[%s851 + $0x10] sm:$0xff]
        %v890 = vld [vmem:[%s851 + $0x18] sm:$0xff]
        %v891 = vld [vmem:[%s851 + $0x20] sm:$0xff]
        %v892 = vld [vmem:[%s851 + $0x28] sm:$0xff]
        %v893 = vld [vmem:[%s851 + $0x30] sm:$0xff]
        %v894 = vld [vmem:[%s851 + $0x38] sm:$0xff]
        %v895 = vld [vmem:[%s851 + $0x40] sm:$0xff]
        %v896 = vld [vmem:[%s851 + $0x48] sm:$0xff]
        %v897 = vld [vmem:[%s851 + $0x50] sm:$0xff]
        %v898 = vld [vmem:[%s851 + $0x58] sm:$0xff]
        %v899 = vld [vmem:[%s851 + $0x60] sm:$0xff]
        %v900 = vld [vmem:[%s851 + $0x68] sm:$0xff]
        %v901 = vld [vmem:[%s851 + $0x70] sm:$0xff]
        %v902 = vld [vmem:[%s851 + $0x78] sm:$0xff]
        %v903 = vld [vmem:[%s851 + $0x80] sm:$0xff]
        %v904 = vld [vmem:[%s851 + $0x88] sm:$0xff]
        %v905 = vld [vmem:[%s851 + $0x90] sm:$0xff]
        %v906 = vld [vmem:[%s851 + $0x98] sm:$0xff]
        %v907 = vld [vmem:[%s851 + $0xa0] sm:$0xff]
        %v908 = vld [vmem:[%s851 + $0xa8] sm:$0xff]
        %v909 = vld [vmem:[%s851 + $0xb0] sm:$0xff]
        %v910 = vld [vmem:[%s851 + $0xb8] sm:$0xff]
        %v911 = vld [vmem:[%s851 + $0xc0] sm:$0xff]
        %v912 = vld [vmem:[%s851 + $0xc8] sm:$0xff]
        %v913 = vld [vmem:[%s851 + $0xd0] sm:$0xff]
        %v914 = vld [vmem:[%s851 + $0xd8] sm:$0xff]
        %v915 = vld [vmem:[%s851 + $0xe0] sm:$0xff]
        %v916 = vld [vmem:[%s851 + $0xe8] sm:$0xff]
        %v917 = vld [vmem:[%s851 + $0xf0] sm:$0xff]
        %v918 = vld [vmem:[%s851 + $0xf8] sm:$0xff]
        %v919 = vld [vmem:[%s851 + $0x100] sm:$0xff]
        %v920 = vld [vmem:[%s851 + $0x108] sm:$0xff]
        %v921 = vld [vmem:[%s851 + $0x110] sm:$0xff]
        %v922 = vld [vmem:[%s851 + $0x118] sm:$0xff]
        %v923 = vld [vmem:[%s851 + $0x120] sm:$0xff]
        %v924 = vld [vmem:[%s851 + $0x128] sm:$0xff]
        %v925 = vld [vmem:[%s851 + $0x130] sm:$0xff]
        %v926 = vld [vmem:[%s851 + $0x138] sm:$0xff]
        %v927 = vld [vmem:[%s851 + $0x140] sm:$0xff]
        %v928 = vld [vmem:[%s851 + $0x148] sm:$0xff]
        %v929 = vld [vmem:[%s851 + $0x150] sm:$0xff]
        %v930 = vld [vmem:[%s851 + $0x158] sm:$0xff]
        %v931 = vld [vmem:[%s851 + $0x160] sm:$0xff]
        %v932 = vld [vmem:[%s851 + $0x168] sm:$0xff]
        %v933 = vld [vmem:[%s851 + $0x170] sm:$0xff]
        %v934 = vld [vmem:[%s851 + $0x178] sm:$0xff]
        %v935 = vld [vmem:[%s851 + $0x180] sm:$0xff]
        %v936 = vld [vmem:[%s851 + $0x188] sm:$0xff]
        %v937 = vld [vmem:[%s851 + $0x190] sm:$0xff]
        %v938 = vld [vmem:[%s851 + $0x198] sm:$0xff]
        %v939 = vld [vmem:[%s851 + $0x1a0] sm:$0xff]
        %v940 = vld [vmem:[%s851 + $0x1a8] sm:$0xff]
        %v941 = vld [vmem:[%s851 + $0x1b0] sm:$0xff]
        %v942 = vld [vmem:[%s851 + $0x1b8] sm:$0xff]
        %v943 = vld [vmem:[%s851 + $0x1c0] sm:$0xff]
        %v944 = vld [vmem:[%s851 + $0x1c8] sm:$0xff]
        %v945 = vld [vmem:[%s851 + $0x1d0] sm:$0xff]
        %v946 = vld [vmem:[%s851 + $0x1d8] sm:$0xff]
        %v947 = vld [vmem:[%s851 + $0x1e0] sm:$0xff]
        %v948 = vld [vmem:[%s851 + $0x1e8] sm:$0xff]
        %v949 = vld [vmem:[%s851 + $0x1f0] sm:$0xff]
        %v950 = vld [vmem:[%s851 + $0x1f8] sm:$0xff]
        %v951 = vld [vmem:[%s851 + $0x200] sm:$0xff]
        %v952 = vld [vmem:[%s851 + $0x208] sm:$0xff]
        %v953 = vld [vmem:[%s851 + $0x210] sm:$0xff]
        %v954 = vld [vmem:[%s851 + $0x218] sm:$0xff]
        %v955 = vld [vmem:[%s851 + $0x220] sm:$0xff]
        %v956 = vld [vmem:[%s851 + $0x228] sm:$0xff]
        %v957 = vld [vmem:[%s851 + $0x230] sm:$0xff]
        %v958 = vld [vmem:[%s851 + $0x238] sm:$0xff]
        %v959 = vld [vmem:[%s851 + $0x240] sm:$0xff]
        %v960 = vld [vmem:[%s851 + $0x248] sm:$0xff]
        %v961 = vld [vmem:[%s851 + $0x250] sm:$0xff]
        %v962 = vld [vmem:[%s851 + $0x258] sm:$0xff]
        %v963 = vld [vmem:[%s851 + $0x260] sm:$0xff]
        %v964 = vld [vmem:[%s851 + $0x268] sm:$0xff]
        %v965 = vld [vmem:[%s851 + $0x270] sm:$0xff]
        %v966 = vld [vmem:[%s851 + $0x278] sm:$0xff]
        %v967 = vld [vmem:[%s851 + $0x280] sm:$0xff]
        %v968 = vld [vmem:[%s851 + $0x288] sm:$0xff]
        %v969 = vld [vmem:[%s851 + $0x290] sm:$0xff]
        %v970 = vld [vmem:[%s851 + $0x298] sm:$0xff]
        %v971 = vld [vmem:[%s851 + $0x2a0] sm:$0xff]
        %v972 = vld [vmem:[%s851 + $0x2a8] sm:$0xff]
        %v973 = vld [vmem:[%s851 + $0x2b0] sm:$0xff]
        %v974 = vld [vmem:[%s851 + $0x2b8] sm:$0xff]
        %v975 = vld [vmem:[%s851 + $0x2c0] sm:$0xff]
        %v976 = vld [vmem:[%s851 + $0x2c8] sm:$0xff]
        %v977 = vld [vmem:[%s851 + $0x2d0] sm:$0xff]
        %v978 = vld [vmem:[%s851 + $0x2d8] sm:$0xff]
        %v979 = vld [vmem:[%s851 + $0x2e0] sm:$0xff]
        %v980 = vld [vmem:[%s851 + $0x2e8] sm:$0xff]
        %v981 = vld [vmem:[%s851 + $0x2f0] sm:$0xff]
        %v982 = vld [vmem:[%s851 + $0x2f8] sm:$0xff]
        %v983 = vld [vmem:[%s851 + $0x300] sm:$0xff]
        %v984 = vld [vmem:[%s851 + $0x308] sm:$0xff]
        %v985 = vld [vmem:[%s851 + $0x310] sm:$0xff]
        %v986 = vld [vmem:[%s851 + $0x318] sm:$0xff]
        %v987 = vld [vmem:[%s851 + $0x320] sm:$0xff]
        %v988 = vld [vmem:[%s851 + $0x328] sm:$0xff]
        %v989 = vld [vmem:[%s851 + $0x330] sm:$0xff]
        %v990 = vld [vmem:[%s851 + $0x338] sm:$0xff]
        %v991 = vld [vmem:[%s851 + $0x340] sm:$0xff]
        %v992 = vld [vmem:[%s851 + $0x348] sm:$0xff]
        %v993 = vld [vmem:[%s851 + $0x350] sm:$0xff]
        %v994 = vld [vmem:[%s851 + $0x358] sm:$0xff]
        %v995 = vld [vmem:[%s851 + $0x360] sm:$0xff]
        %v996 = vld [vmem:[%s851 + $0x368] sm:$0xff]
        %v997 = vld [vmem:[%s851 + $0x370] sm:$0xff]
        %v998 = vld [vmem:[%s851 + $0x378] sm:$0xff]
        %v999 = vld [vmem:[%s851 + $0x380] sm:$0xff]
        %v1000 = vld [vmem:[%s851 + $0x388] sm:$0xff]
        %v1001 = vld [vmem:[%s851 + $0x390] sm:$0xff]
        %v1002 = vld [vmem:[%s851 + $0x398] sm:$0xff]
        %v1003 = vld [vmem:[%s851 + $0x3a0] sm:$0xff]
        %v1004 = vld [vmem:[%s851 + $0x3a8] sm:$0xff]
        %v1005 = vld [vmem:[%s851 + $0x3b0] sm:$0xff]
        %v1006 = vld [vmem:[%s851 + $0x3b8] sm:$0xff]
        %v1007 = vld [vmem:[%s851 + $0x3c0] sm:$0xff]
        %v1008 = vld [vmem:[%s851 + $0x3c8] sm:$0xff]
        %v1009 = vld [vmem:[%s851 + $0x3d0] sm:$0xff]
        %v1010 = vld [vmem:[%s851 + $0x3d8] sm:$0xff]
        %v1011 = vld [vmem:[%s851 + $0x3e0] sm:$0xff]
        %v1012 = vld [vmem:[%s851 + $0x3e8] sm:$0xff]
        %v1013 = vld [vmem:[%s851 + $0x3f0] sm:$0xff]
        %v1014 = vld [vmem:[%s851 + $0x3f8] sm:$0xff]
        %v1015 = vld [vmem:[%s851 + $0x400] sm:$0xff]
        %v1016 = vld [vmem:[%s851 + $0x408] sm:$0xff]
        %v1017 = vld [vmem:[%s851 + $0x410] sm:$0xff]
        %v1018 = vld [vmem:[%s851 + $0x418] sm:$0xff]
        %v1019 = vld [vmem:[%s851 + $0x420] sm:$0xff]
        %v1020 = vld [vmem:[%s851 + $0x428] sm:$0xff]
        %v1021 = vld [vmem:[%s851 + $0x430] sm:$0xff]
        %v1022 = vld [vmem:[%s851 + $0x438] sm:$0xff]
        %v1023 = vld [vmem:[%s851 + $0x440] sm:$0xff]
        %v1024 = vld [vmem:[%s851 + $0x448] sm:$0xff]
        %v1025 = vld [vmem:[%s851 + $0x450] sm:$0xff]
        %v1026 = vld [vmem:[%s851 + $0x458] sm:$0xff]
        %v1027 = vld [vmem:[%s851 + $0x460] sm:$0xff]
        %v1028 = vld [vmem:[%s851 + $0x468] sm:$0xff]
        %v1029 = vld [vmem:[%s851 + $0x470] sm:$0xff]
        %v1030 = vld [vmem:[%s851 + $0x478] sm:$0xff]
        %v1031 = vld [vmem:[%s851 + $0x480] sm:$0xff]
        %v1032 = vld [vmem:[%s851 + $0x488] sm:$0xff]
        %v1033 = vld [vmem:[%s851 + $0x490] sm:$0xff]
        %v1034 = vld [vmem:[%s851 + $0x498] sm:$0xff]
        %v1035 = vld [vmem:[%s851 + $0x4a0] sm:$0xff]
        %v1036 = vld [vmem:[%s851 + $0x4a8] sm:$0xff]
        %v1037 = vld [vmem:[%s851 + $0x4b0] sm:$0xff]
        %v1038 = vld [vmem:[%s851 + $0x4b8] sm:$0xff]
        %v1039 = vld [vmem:[%s851 + $0x4c0] sm:$0xff]
        %v1040 = vld [vmem:[%s851 + $0x4c8] sm:$0xff]
        %v1041 = vld [vmem:[%s851 + $0x4d0] sm:$0xff]
        %v1042 = vld [vmem:[%s851 + $0x4d8] sm:$0xff]
        %v1043 = vld [vmem:[%s851 + $0x4e0] sm:$0xff]
        %v1044 = vld [vmem:[%s851 + $0x4e8] sm:$0xff]
        %v1045 = vld [vmem:[%s851 + $0x4f0] sm:$0xff]
        %v1046 = vld [vmem:[%s851 + $0x4f8] sm:$0xff]
        %v1047 = vld [vmem:[%s1] sm:$0xff]
        %v1048 = vld [vmem:[%s1 + $0x8] sm:$0xff]
        %v1049 = vld [vmem:[%s1 + $0x10] sm:$0xff]
        %v1050 = vld [vmem:[%s1 + $0x18] sm:$0xff]
        %v1051 = vld [vmem:[%s1 + $0x20] sm:$0xff]
        %v1052 = vld [vmem:[%s1 + $0x28] sm:$0xff]
        %v1053 = vld [vmem:[%s1 + $0x30] sm:$0xff]
        %v1054 = vld [vmem:[%s1 + $0x38] sm:$0xff]
        %v1055 = vld [vmem:[%s1 + $0x40] sm:$0xff]
        %v1056 = vld [vmem:[%s1 + $0x48] sm:$0xff]
        %v1057 = vld [vmem:[%s1 + $0x50] sm:$0xff]
        %v1058 = vld [vmem:[%s1 + $0x58] sm:$0xff]
        %v1059 = vld [vmem:[%s1 + $0x60] sm:$0xff]
        %v1060 = vld [vmem:[%s1 + $0x68] sm:$0xff]
        %v1061 = vld [vmem:[%s1 + $0x70] sm:$0xff]
        %v1062 = vld [vmem:[%s1 + $0x78] sm:$0xff]
        %v1063 = vld [vmem:[%s1 + $0x80] sm:$0xff]
        %v1064 = vld [vmem:[%s1 + $0x88] sm:$0xff]
        %v1065 = vld [vmem:[%s1 + $0x90] sm:$0xff]
        %v1066 = vld [vmem:[%s1 + $0x98] sm:$0xff]
        %v1067 = vld [vmem:[%s1 + $0xa0] sm:$0xff]
        %v1068 = vld [vmem:[%s1 + $0xa8] sm:$0xff]
        %v1069 = vld [vmem:[%s1 + $0xb0] sm:$0xff]
        %v1070 = vld [vmem:[%s1 + $0xb8] sm:$0xff]
        %v1071 = vld [vmem:[%s1 + $0xc0] sm:$0xff]
        %v1072 = vld [vmem:[%s1 + $0xc8] sm:$0xff]
        %v1073 = vld [vmem:[%s1 + $0xd0] sm:$0xff]
        %v1074 = vld [vmem:[%s1 + $0xd8] sm:$0xff]
        %v1075 = vld [vmem:[%s1 + $0xe0] sm:$0xff]
        %v1076 = vld [vmem:[%s1 + $0xe8] sm:$0xff]
        %v1077 = vld [vmem:[%s1 + $0xf0] sm:$0xff]
        %v1078 = vld [vmem:[%s1 + $0xf8] sm:$0xff]
        %v1239 = vunpack.c.l.b16 %v887
        %v1240 = vunpack.c.h.b16 %v887
        %v1241 = vunpack.c.l.b16 %v888
        %v1242 = vunpack.c.h.b16 %v888
        %v1243 = vunpack.c.l.b16 %v889
        %v1244 = vunpack.c.h.b16 %v889
        %v1245 = vunpack.c.l.b16 %v890
        %v1246 = vunpack.c.h.b16 %v890
        %v1247 = vunpack.c.l.b16 %v891
        %v1248 = vunpack.c.h.b16 %v891
        %v1249 = vunpack.c.l.b16 %v892
        %v1250 = vunpack.c.h.b16 %v892
        %v1251 = vunpack.c.l.b16 %v893
        %v1252 = vunpack.c.h.b16 %v893
        %v1253 = vunpack.c.l.b16 %v894
        %v1254 = vunpack.c.h.b16 %v894
        %v1255 = vunpack.c.l.b16 %v895
        %v1256 = vunpack.c.h.b16 %v895
        %v1257 = vunpack.c.l.b16 %v896
        %v1258 = vunpack.c.h.b16 %v896
        %v1259 = vunpack.c.l.b16 %v897
        %v1260 = vunpack.c.h.b16 %v897
        %v1261 = vunpack.c.l.b16 %v898
        %v1262 = vunpack.c.h.b16 %v898
        %v1263 = vunpack.c.l.b16 %v899
        %v1264 = vunpack.c.h.b16 %v899
        %v1265 = vunpack.c.l.b16 %v900
        %v1266 = vunpack.c.h.b16 %v900
        %v1267 = vunpack.c.l.b16 %v901
        %v1268 = vunpack.c.h.b16 %v901
        %v1269 = vunpack.c.l.b16 %v902
        %v1270 = vunpack.c.h.b16 %v902
        %v1271 = vunpack.c.l.b16 %v903
        %v1272 = vunpack.c.h.b16 %v903
        %v1273 = vunpack.c.l.b16 %v904
        %v1274 = vunpack.c.h.b16 %v904
        %v1275 = vunpack.c.l.b16 %v905
        %v1276 = vunpack.c.h.b16 %v905
        %v1277 = vunpack.c.l.b16 %v906
        %v1278 = vunpack.c.h.b16 %v906
        %v1279 = vunpack.c.l.b16 %v907
        %v1280 = vunpack.c.h.b16 %v907
        %v1281 = vunpack.c.l.b16 %v908
        %v1282 = vunpack.c.h.b16 %v908
        %v1283 = vunpack.c.l.b16 %v909
        %v1284 = vunpack.c.h.b16 %v909
        %v1285 = vunpack.c.l.b16 %v910
        %v1286 = vunpack.c.h.b16 %v910
        %v1287 = vunpack.c.l.b16 %v911
        %v1288 = vunpack.c.h.b16 %v911
        %v1289 = vunpack.c.l.b16 %v912
        %v1290 = vunpack.c.h.b16 %v912
        %v1291 = vunpack.c.l.b16 %v913
        %v1292 = vunpack.c.h.b16 %v913
        %v1293 = vunpack.c.l.b16 %v914
        %v1294 = vunpack.c.h.b16 %v914
        %v1295 = vunpack.c.l.b16 %v915
        %v1296 = vunpack.c.h.b16 %v915
        %v1297 = vunpack.c.l.b16 %v916
        %v1298 = vunpack.c.h.b16 %v916
        %v1299 = vunpack.c.l.b16 %v917
        %v1300 = vunpack.c.h.b16 %v917
        %v1301 = vunpack.c.l.b16 %v918
        %v1302 = vunpack.c.h.b16 %v918
        %v1303 = vunpack.c.l.b16 %v919
        %v1304 = vunpack.c.h.b16 %v919
        %v1305 = vunpack.c.l.b16 %v920
        %v1306 = vunpack.c.h.b16 %v920
        %v1307 = vunpack.c.l.b16 %v921
        %v1308 = vunpack.c.h.b16 %v921
        %v1309 = vunpack.c.l.b16 %v922
        %v1310 = vunpack.c.h.b16 %v922
        %v1311 = vunpack.c.l.b16 %v923
        %v1312 = vunpack.c.h.b16 %v923
        %v1313 = vunpack.c.l.b16 %v924
        %v1314 = vunpack.c.h.b16 %v924
        %v1315 = vunpack.c.l.b16 %v925
        %v1316 = vunpack.c.h.b16 %v925
        %v1317 = vunpack.c.l.b16 %v926
        %v1318 = vunpack.c.h.b16 %v926
        %v1319 = vunpack.c.l.b16 %v927
        %v1320 = vunpack.c.h.b16 %v927
        %v1321 = vunpack.c.l.b16 %v928
        %v1322 = vunpack.c.h.b16 %v928
        %v1323 = vunpack.c.l.b16 %v929
        %v1324 = vunpack.c.h.b16 %v929
        %v1325 = vunpack.c.l.b16 %v930
        %v1326 = vunpack.c.h.b16 %v930
        %v1327 = vunpack.c.l.b16 %v931
        %v1328 = vunpack.c.h.b16 %v931
        %v1329 = vunpack.c.l.b16 %v932
        %v1330 = vunpack.c.h.b16 %v932
        %v1331 = vunpack.c.l.b16 %v933
        %v1332 = vunpack.c.h.b16 %v933
        %v1333 = vunpack.c.l.b16 %v934
        %v1334 = vunpack.c.h.b16 %v934
        %v1335 = vunpack.c.l.b16 %v935
        %v1336 = vunpack.c.h.b16 %v935
        %v1337 = vunpack.c.l.b16 %v936
        %v1338 = vunpack.c.h.b16 %v936
        %v1339 = vunpack.c.l.b16 %v937
        %v1340 = vunpack.c.h.b16 %v937
        %v1341 = vunpack.c.l.b16 %v938
        %v1342 = vunpack.c.h.b16 %v938
        %v1343 = vunpack.c.l.b16 %v939
        %v1344 = vunpack.c.h.b16 %v939
        %v1345 = vunpack.c.l.b16 %v940
        %v1346 = vunpack.c.h.b16 %v940
        %v1347 = vunpack.c.l.b16 %v941
        %v1348 = vunpack.c.h.b16 %v941
        %v1349 = vunpack.c.l.b16 %v942
        %v1350 = vunpack.c.h.b16 %v942
        %v1351 = vunpack.c.l.b16 %v943
        %v1352 = vunpack.c.h.b16 %v943
        %v1353 = vunpack.c.l.b16 %v944
        %v1354 = vunpack.c.h.b16 %v944
        %v1355 = vunpack.c.l.b16 %v945
        %v1356 = vunpack.c.h.b16 %v945
        %v1357 = vunpack.c.l.b16 %v946
        %v1358 = vunpack.c.h.b16 %v946
        %v1359 = vunpack.c.l.b16 %v947
        %v1360 = vunpack.c.h.b16 %v947
        %v1361 = vunpack.c.l.b16 %v948
        %v1362 = vunpack.c.h.b16 %v948
        %v1363 = vunpack.c.l.b16 %v949
        %v1364 = vunpack.c.h.b16 %v949
        %v1365 = vunpack.c.l.b16 %v950
        %v1366 = vunpack.c.h.b16 %v950
        %v1367 = vunpack.c.l.b16 %v951
        %v1368 = vunpack.c.h.b16 %v951
        %v1369 = vunpack.c.l.b16 %v952
        %v1370 = vunpack.c.h.b16 %v952
        %v1371 = vunpack.c.l.b16 %v953
        %v1372 = vunpack.c.h.b16 %v953
        %v1373 = vunpack.c.l.b16 %v954
        %v1374 = vunpack.c.h.b16 %v954
        %v1375 = vunpack.c.l.b16 %v955
        %v1376 = vunpack.c.h.b16 %v955
        %v1377 = vunpack.c.l.b16 %v956
        %v1378 = vunpack.c.h.b16 %v956
        %v1379 = vunpack.c.l.b16 %v957
        %v1380 = vunpack.c.h.b16 %v957
        %v1381 = vunpack.c.l.b16 %v958
        %v1382 = vunpack.c.h.b16 %v958
        %v1383 = vunpack.c.l.b16 %v959
        %v1384 = vunpack.c.h.b16 %v959
        %v1385 = vunpack.c.l.b16 %v960
        %v1386 = vunpack.c.h.b16 %v960
        %v1387 = vunpack.c.l.b16 %v961
        %v1388 = vunpack.c.h.b16 %v961
        %v1389 = vunpack.c.l.b16 %v962
        %v1390 = vunpack.c.h.b16 %v962
        %v1391 = vunpack.c.l.b16 %v963
        %v1392 = vunpack.c.h.b16 %v963
        %v1393 = vunpack.c.l.b16 %v964
        %v1394 = vunpack.c.h.b16 %v964
        %v1395 = vunpack.c.l.b16 %v965
        %v1396 = vunpack.c.h.b16 %v965
        %v1397 = vunpack.c.l.b16 %v966
        %v1398 = vunpack.c.h.b16 %v966
        %v1399 = vunpack.c.l.b16 %v967
        %v1400 = vunpack.c.h.b16 %v967
        %v1401 = vunpack.c.l.b16 %v968
        %v1402 = vunpack.c.h.b16 %v968
        %v1403 = vunpack.c.l.b16 %v969
        %v1404 = vunpack.c.h.b16 %v969
        %v1405 = vunpack.c.l.b16 %v970
        %v1406 = vunpack.c.h.b16 %v970
        %v1407 = vunpack.c.l.b16 %v971
        %v1408 = vunpack.c.h.b16 %v971
        %v1409 = vunpack.c.l.b16 %v972
        %v1410 = vunpack.c.h.b16 %v972
        %v1411 = vunpack.c.l.b16 %v973
        %v1412 = vunpack.c.h.b16 %v973
        %v1413 = vunpack.c.l.b16 %v974
        %v1414 = vunpack.c.h.b16 %v974
        %v1415 = vunpack.c.l.b16 %v975
        %v1416 = vunpack.c.h.b16 %v975
        %v1417 = vunpack.c.l.b16 %v976
        %v1418 = vunpack.c.h.b16 %v976
        %v1419 = vunpack.c.l.b16 %v977
        %v1420 = vunpack.c.h.b16 %v977
        %v1421 = vunpack.c.l.b16 %v978
        %v1422 = vunpack.c.h.b16 %v978
        %v1423 = vunpack.c.l.b16 %v979
        %v1424 = vunpack.c.h.b16 %v979
        %v1425 = vunpack.c.l.b16 %v980
        %v1426 = vunpack.c.h.b16 %v980
        %v1427 = vunpack.c.l.b16 %v981
        %v1428 = vunpack.c.h.b16 %v981
        %v1429 = vunpack.c.l.b16 %v982
        %v1430 = vunpack.c.h.b16 %v982
        %v1431 = vunpack.c.l.b16 %v983
        %v1432 = vunpack.c.h.b16 %v983
        %v1433 = vunpack.c.l.b16 %v984
        %v1434 = vunpack.c.h.b16 %v984
        %v1435 = vunpack.c.l.b16 %v985
        %v1436 = vunpack.c.h.b16 %v985
        %v1437 = vunpack.c.l.b16 %v986
        %v1438 = vunpack.c.h.b16 %v986
        %v1439 = vunpack.c.l.b16 %v987
        %v1440 = vunpack.c.h.b16 %v987
        %v1441 = vunpack.c.l.b16 %v988
        %v1442 = vunpack.c.h.b16 %v988
        %v1443 = vunpack.c.l.b16 %v989
        %v1444 = vunpack.c.h.b16 %v989
        %v1445 = vunpack.c.l.b16 %v990
        %v1446 = vunpack.c.h.b16 %v990
        %v1447 = vunpack.c.l.b16 %v991
        %v1448 = vunpack.c.h.b16 %v991
        %v1449 = vunpack.c.l.b16 %v992
        %v1450 = vunpack.c.h.b16 %v992
        %v1451 = vunpack.c.l.b16 %v993
        %v1452 = vunpack.c.h.b16 %v993
        %v1453 = vunpack.c.l.b16 %v994
        %v1454 = vunpack.c.h.b16 %v994
        %v1455 = vunpack.c.l.b16 %v995
        %v1456 = vunpack.c.h.b16 %v995
        %v1457 = vunpack.c.l.b16 %v996
        %v1458 = vunpack.c.h.b16 %v996
        %v1459 = vunpack.c.l.b16 %v997
        %v1460 = vunpack.c.h.b16 %v997
        %v1461 = vunpack.c.l.b16 %v998
        %v1462 = vunpack.c.h.b16 %v998
        %v1463 = vunpack.c.l.b16 %v999
        %v1464 = vunpack.c.h.b16 %v999
        %v1465 = vunpack.c.l.b16 %v1000
        %v1466 = vunpack.c.h.b16 %v1000
        %v1467 = vunpack.c.l.b16 %v1001
        %v1468 = vunpack.c.h.b16 %v1001
        %v1469 = vunpack.c.l.b16 %v1002
        %v1470 = vunpack.c.h.b16 %v1002
        %v1471 = vunpack.c.l.b16 %v1003
        %v1472 = vunpack.c.h.b16 %v1003
        %v1473 = vunpack.c.l.b16 %v1004
        %v1474 = vunpack.c.h.b16 %v1004
        %v1475 = vunpack.c.l.b16 %v1005
        %v1476 = vunpack.c.h.b16 %v1005
        %v1477 = vunpack.c.l.b16 %v1006
        %v1478 = vunpack.c.h.b16 %v1006
        %v1479 = vunpack.c.l.b16 %v1007
        %v1480 = vunpack.c.h.b16 %v1007
        %v1481 = vunpack.c.l.b16 %v1008
        %v1482 = vunpack.c.h.b16 %v1008
        %v1483 = vunpack.c.l.b16 %v1009
        %v1484 = vunpack.c.h.b16 %v1009
        %v1485 = vunpack.c.l.b16 %v1010
        %v1486 = vunpack.c.h.b16 %v1010
        %v1487 = vunpack.c.l.b16 %v1011
        %v1488 = vunpack.c.h.b16 %v1011
        %v1489 = vunpack.c.l.b16 %v1012
        %v1490 = vunpack.c.h.b16 %v1012
        %v1491 = vunpack.c.l.b16 %v1013
        %v1492 = vunpack.c.h.b16 %v1013
        %v1493 = vunpack.c.l.b16 %v1014
        %v1494 = vunpack.c.h.b16 %v1014
        %v1495 = vunpack.c.l.b16 %v1015
        %v1496 = vunpack.c.h.b16 %v1015
        %v1497 = vunpack.c.l.b16 %v1016
        %v1498 = vunpack.c.h.b16 %v1016
        %v1499 = vunpack.c.l.b16 %v1017
        %v1500 = vunpack.c.h.b16 %v1017
        %v1501 = vunpack.c.l.b16 %v1018
        %v1502 = vunpack.c.h.b16 %v1018
        %v1503 = vunpack.c.l.b16 %v1019
        %v1504 = vunpack.c.h.b16 %v1019
        %v1505 = vunpack.c.l.b16 %v1020
        %v1506 = vunpack.c.h.b16 %v1020
        %v1507 = vunpack.c.l.b16 %v1021
        %v1508 = vunpack.c.h.b16 %v1021
        %v1509 = vunpack.c.l.b16 %v1022
        %v1510 = vunpack.c.h.b16 %v1022
        %v1511 = vunpack.c.l.b16 %v1023
        %v1512 = vunpack.c.h.b16 %v1023
        %v1513 = vunpack.c.l.b16 %v1024
        %v1514 = vunpack.c.h.b16 %v1024
        %v1515 = vunpack.c.l.b16 %v1025
        %v1516 = vunpack.c.h.b16 %v1025
        %v1517 = vunpack.c.l.b16 %v1026
        %v1518 = vunpack.c.h.b16 %v1026
        %v1519 = vunpack.c.l.b16 %v1027
        %v1520 = vunpack.c.h.b16 %v1027
        %v1521 = vunpack.c.l.b16 %v1028
        %v1522 = vunpack.c.h.b16 %v1028
        %v1523 = vunpack.c.l.b16 %v1029
        %v1524 = vunpack.c.h.b16 %v1029
        %v1525 = vunpack.c.l.b16 %v1030
        %v1526 = vunpack.c.h.b16 %v1030
        %v1527 = vunpack.c.l.b16 %v1031
        %v1528 = vunpack.c.h.b16 %v1031
        %v1529 = vunpack.c.l.b16 %v1032
        %v1530 = vunpack.c.h.b16 %v1032
        %v1531 = vunpack.c.l.b16 %v1033
        %v1532 = vunpack.c.h.b16 %v1033
        %v1533 = vunpack.c.l.b16 %v1034
        %v1534 = vunpack.c.h.b16 %v1034
        %v1535 = vunpack.c.l.b16 %v1035
        %v1536 = vunpack.c.h.b16 %v1035
        %v1537 = vunpack.c.l.b16 %v1036
        %v1538 = vunpack.c.h.b16 %v1036
        %v1539 = vunpack.c.l.b16 %v1037
        %v1540 = vunpack.c.h.b16 %v1037
        %v1541 = vunpack.c.l.b16 %v1038
        %v1542 = vunpack.c.h.b16 %v1038
        %v1543 = vunpack.c.l.b16 %v1039
        %v1544 = vunpack.c.h.b16 %v1039
        %v1545 = vunpack.c.l.b16 %v1040
        %v1546 = vunpack.c.h.b16 %v1040
        %v1547 = vunpack.c.l.b16 %v1041
        %v1548 = vunpack.c.h.b16 %v1041
        %v1549 = vunpack.c.l.b16 %v1042
        %v1550 = vunpack.c.h.b16 %v1042
        %v1551 = vunpack.c.l.b16 %v1043
        %v1552 = vunpack.c.h.b16 %v1043
        %v1553 = vunpack.c.l.b16 %v1044
        %v1554 = vunpack.c.h.b16 %v1044
        %v1555 = vunpack.c.l.b16 %v1045
        %v1556 = vunpack.c.h.b16 %v1045
        %v1557 = vunpack.c.l.b16 %v1046
        %v1558 = vunpack.c.h.b16 %v1046
        %v1559 = vpack.c.b16 %v1241, %v1239
        %v1560 = vpack.c.b16 %v1242, %v1240
        %v1561 = vpack.c.b16 %v1245, %v1243
        %v1562 = vpack.c.b16 %v1246, %v1244
        %v1563 = vpack.c.b16 %v1249, %v1247
        %v1564 = vpack.c.b16 %v1250, %v1248
        %v1565 = vpack.c.b16 %v1253, %v1251
        %v1566 = vpack.c.b16 %v1254, %v1252
        %v1567 = vpack.c.b16 %v1257, %v1255
        %v1568 = vpack.c.b16 %v1258, %v1256
        %v1569 = vpack.c.b16 %v1261, %v1259
        %v1570 = vpack.c.b16 %v1262, %v1260
        %v1571 = vpack.c.b16 %v1265, %v1263
        %v1572 = vpack.c.b16 %v1266, %v1264
        %v1573 = vpack.c.b16 %v1269, %v1267
        %v1574 = vpack.c.b16 %v1270, %v1268
        %v1575 = vpack.c.b16 %v1273, %v1271
        %v1576 = vpack.c.b16 %v1274, %v1272
        %v1577 = vpack.c.b16 %v1277, %v1275
        %v1578 = vpack.c.b16 %v1278, %v1276
        %v1579 = vpack.c.b16 %v1281, %v1279
        %v1580 = vpack.c.b16 %v1282, %v1280
        %v1581 = vpack.c.b16 %v1285, %v1283
        %v1582 = vpack.c.b16 %v1286, %v1284
        %v1583 = vpack.c.b16 %v1289, %v1287
        %v1584 = vpack.c.b16 %v1290, %v1288
        %v1585 = vpack.c.b16 %v1293, %v1291
        %v1586 = vpack.c.b16 %v1294, %v1292
        %v1587 = vpack.c.b16 %v1297, %v1295
        %v1588 = vpack.c.b16 %v1298, %v1296
        %v1589 = vpack.c.b16 %v1301, %v1299
        %v1590 = vpack.c.b16 %v1302, %v1300
        %v1591 = vpack.c.b16 %v1305, %v1303
        %v1592 = vpack.c.b16 %v1306, %v1304
        %v1593 = vpack.c.b16 %v1309, %v1307
        %v1594 = vpack.c.b16 %v1310, %v1308
        %v1595 = vpack.c.b16 %v1313, %v1311
        %v1596 = vpack.c.b16 %v1314, %v1312
        %v1597 = vpack.c.b16 %v1317, %v1315
        %v1598 = vpack.c.b16 %v1318, %v1316
        %v1599 = vpack.c.b16 %v1321, %v1319
        %v1600 = vpack.c.b16 %v1322, %v1320
        %v1601 = vpack.c.b16 %v1325, %v1323
        %v1602 = vpack.c.b16 %v1326, %v1324
        %v1603 = vpack.c.b16 %v1329, %v1327
        %v1604 = vpack.c.b16 %v1330, %v1328
        %v1605 = vpack.c.b16 %v1333, %v1331
        %v1606 = vpack.c.b16 %v1334, %v1332
        %v1607 = vpack.c.b16 %v1337, %v1335
        %v1608 = vpack.c.b16 %v1338, %v1336
        %v1609 = vpack.c.b16 %v1341, %v1339
        %v1610 = vpack.c.b16 %v1342, %v1340
        %v1611 = vpack.c.b16 %v1345, %v1343
        %v1612 = vpack.c.b16 %v1346, %v1344
        %v1613 = vpack.c.b16 %v1349, %v1347
        %v1614 = vpack.c.b16 %v1350, %v1348
        %v1615 = vpack.c.b16 %v1353, %v1351
        %v1616 = vpack.c.b16 %v1354, %v1352
        %v1617 = vpack.c.b16 %v1357, %v1355
        %v1618 = vpack.c.b16 %v1358, %v1356
        %v1619 = vpack.c.b16 %v1361, %v1359
        %v1620 = vpack.c.b16 %v1362, %v1360
        %v1621 = vpack.c.b16 %v1365, %v1363
        %v1622 = vpack.c.b16 %v1366, %v1364
        %v1623 = vpack.c.b16 %v1369, %v1367
        %v1624 = vpack.c.b16 %v1370, %v1368
        %v1625 = vpack.c.b16 %v1373, %v1371
        %v1626 = vpack.c.b16 %v1374, %v1372
        %v1627 = vpack.c.b16 %v1377, %v1375
        %v1628 = vpack.c.b16 %v1378, %v1376
        %v1629 = vpack.c.b16 %v1381, %v1379
        %v1630 = vpack.c.b16 %v1382, %v1380
        %v1631 = vpack.c.b16 %v1385, %v1383
        %v1632 = vpack.c.b16 %v1386, %v1384
        %v1633 = vpack.c.b16 %v1389, %v1387
        %v1634 = vpack.c.b16 %v1390, %v1388
        %v1635 = vpack.c.b16 %v1393, %v1391
        %v1636 = vpack.c.b16 %v1394, %v1392
        %v1637 = vpack.c.b16 %v1397, %v1395
        %v1638 = vpack.c.b16 %v1398, %v1396
        %v1639 = vpack.c.b16 %v1401, %v1399
        %v1640 = vpack.c.b16 %v1402, %v1400
        %v1641 = vpack.c.b16 %v1405, %v1403
        %v1642 = vpack.c.b16 %v1406, %v1404
        %v1643 = vpack.c.b16 %v1409, %v1407
        %v1644 = vpack.c.b16 %v1410, %v1408
        %v1645 = vpack.c.b16 %v1413, %v1411
        %v1646 = vpack.c.b16 %v1414, %v1412
        %v1647 = vpack.c.b16 %v1417, %v1415
        %v1648 = vpack.c.b16 %v1418, %v1416
        %v1649 = vpack.c.b16 %v1421, %v1419
        %v1650 = vpack.c.b16 %v1422, %v1420
        %v1651 = vpack.c.b16 %v1425, %v1423
        %v1652 = vpack.c.b16 %v1426, %v1424
        %v1653 = vpack.c.b16 %v1429, %v1427
        %v1654 = vpack.c.b16 %v1430, %v1428
        %v1655 = vpack.c.b16 %v1433, %v1431
        %v1656 = vpack.c.b16 %v1434, %v1432
        %v1657 = vpack.c.b16 %v1437, %v1435
        %v1658 = vpack.c.b16 %v1438, %v1436
        %v1659 = vpack.c.b16 %v1441, %v1439
        %v1660 = vpack.c.b16 %v1442, %v1440
        %v1661 = vpack.c.b16 %v1445, %v1443
        %v1662 = vpack.c.b16 %v1446, %v1444
        %v1663 = vpack.c.b16 %v1449, %v1447
        %v1664 = vpack.c.b16 %v1450, %v1448
        %v1665 = vpack.c.b16 %v1453, %v1451
        %v1666 = vpack.c.b16 %v1454, %v1452
        %v1667 = vpack.c.b16 %v1457, %v1455
        %v1668 = vpack.c.b16 %v1458, %v1456
        %v1669 = vpack.c.b16 %v1461, %v1459
        %v1670 = vpack.c.b16 %v1462, %v1460
        %v1671 = vpack.c.b16 %v1465, %v1463
        %v1672 = vpack.c.b16 %v1466, %v1464
        %v1673 = vpack.c.b16 %v1469, %v1467
        %v1674 = vpack.c.b16 %v1470, %v1468
        %v1675 = vpack.c.b16 %v1473, %v1471
        %v1676 = vpack.c.b16 %v1474, %v1472
        %v1677 = vpack.c.b16 %v1477, %v1475
        %v1678 = vpack.c.b16 %v1478, %v1476
        %v1679 = vpack.c.b16 %v1481, %v1479
        %v1680 = vpack.c.b16 %v1482, %v1480
        %v1681 = vpack.c.b16 %v1485, %v1483
        %v1682 = vpack.c.b16 %v1486, %v1484
        %v1683 = vpack.c.b16 %v1489, %v1487
        %v1684 = vpack.c.b16 %v1490, %v1488
        %v1685 = vpack.c.b16 %v1493, %v1491
        %v1686 = vpack.c.b16 %v1494, %v1492
        %v1687 = vpack.c.b16 %v1497, %v1495
        %v1688 = vpack.c.b16 %v1498, %v1496
        %v1689 = vpack.c.b16 %v1501, %v1499
        %v1690 = vpack.c.b16 %v1502, %v1500
        %v1691 = vpack.c.b16 %v1505, %v1503
        %v1692 = vpack.c.b16 %v1506, %v1504
        %v1693 = vpack.c.b16 %v1509, %v1507
        %v1694 = vpack.c.b16 %v1510, %v1508
        %v1695 = vpack.c.b16 %v1513, %v1511
        %v1696 = vpack.c.b16 %v1514, %v1512
        %v1697 = vpack.c.b16 %v1517, %v1515
        %v1698 = vpack.c.b16 %v1518, %v1516
        %v1699 = vpack.c.b16 %v1521, %v1519
        %v1700 = vpack.c.b16 %v1522, %v1520
        %v1701 = vpack.c.b16 %v1525, %v1523
        %v1702 = vpack.c.b16 %v1526, %v1524
        %v1703 = vpack.c.b16 %v1529, %v1527
        %v1704 = vpack.c.b16 %v1530, %v1528
        %v1705 = vpack.c.b16 %v1533, %v1531
        %v1706 = vpack.c.b16 %v1534, %v1532
        %v1707 = vpack.c.b16 %v1537, %v1535
        %v1708 = vpack.c.b16 %v1538, %v1536
        %v1709 = vpack.c.b16 %v1541, %v1539
        %v1710 = vpack.c.b16 %v1542, %v1540
        %v1711 = vpack.c.b16 %v1545, %v1543
        %v1712 = vpack.c.b16 %v1546, %v1544
        %v1713 = vpack.c.b16 %v1549, %v1547
        %v1714 = vpack.c.b16 %v1550, %v1548
        %v1715 = vpack.c.b16 %v1553, %v1551
        %v1716 = vpack.c.b16 %v1554, %v1552
        %v1717 = vpack.c.b16 %v1557, %v1555
        %v1718 = vpack.c.b16 %v1558, %v1556
        %v1911 = vunpack.c.l.b16 %v1047
        %v1912 = vunpack.c.h.b16 %v1047
        %v1913 = vunpack.c.l.b16 %v1048
        %v1914 = vunpack.c.h.b16 %v1048
        %v1915 = vunpack.c.l.b16 %v1049
        %v1916 = vunpack.c.h.b16 %v1049
        %v1917 = vunpack.c.l.b16 %v1050
        %v1918 = vunpack.c.h.b16 %v1050
        %v1919 = vunpack.c.l.b16 %v1051
        %v1920 = vunpack.c.h.b16 %v1051
        %v1921 = vunpack.c.l.b16 %v1052
        %v1922 = vunpack.c.h.b16 %v1052
        %v1923 = vunpack.c.l.b16 %v1053
        %v1924 = vunpack.c.h.b16 %v1053
        %v1925 = vunpack.c.l.b16 %v1054
        %v1926 = vunpack.c.h.b16 %v1054
        %v1927 = vunpack.c.l.b16 %v1055
        %v1928 = vunpack.c.h.b16 %v1055
        %v1929 = vunpack.c.l.b16 %v1056
        %v1930 = vunpack.c.h.b16 %v1056
        %v1931 = vunpack.c.l.b16 %v1057
        %v1932 = vunpack.c.h.b16 %v1057
        %v1933 = vunpack.c.l.b16 %v1058
        %v1934 = vunpack.c.h.b16 %v1058
        %v1935 = vunpack.c.l.b16 %v1059
        %v1936 = vunpack.c.h.b16 %v1059
        %v1937 = vunpack.c.l.b16 %v1060
        %v1938 = vunpack.c.h.b16 %v1060
        %v1939 = vunpack.c.l.b16 %v1061
        %v1940 = vunpack.c.h.b16 %v1061
        %v1941 = vunpack.c.l.b16 %v1062
        %v1942 = vunpack.c.h.b16 %v1062
        %v1943 = vunpack.c.l.b16 %v1063
        %v1944 = vunpack.c.h.b16 %v1063
        %v1945 = vunpack.c.l.b16 %v1064
        %v1946 = vunpack.c.h.b16 %v1064
        %v1947 = vunpack.c.l.b16 %v1065
        %v1948 = vunpack.c.h.b16 %v1065
        %v1949 = vunpack.c.l.b16 %v1066
        %v1950 = vunpack.c.h.b16 %v1066
        %v1951 = vunpack.c.l.b16 %v1067
        %v1952 = vunpack.c.h.b16 %v1067
        %v1953 = vunpack.c.l.b16 %v1068
        %v1954 = vunpack.c.h.b16 %v1068
        %v1955 = vunpack.c.l.b16 %v1069
        %v1956 = vunpack.c.h.b16 %v1069
        %v1957 = vunpack.c.l.b16 %v1070
        %v1958 = vunpack.c.h.b16 %v1070
        %v1959 = vunpack.c.l.b16 %v1071
        %v1960 = vunpack.c.h.b16 %v1071
        %v1961 = vunpack.c.l.b16 %v1072
        %v1962 = vunpack.c.h.b16 %v1072
        %v1963 = vunpack.c.l.b16 %v1073
        %v1964 = vunpack.c.h.b16 %v1073
        %v1965 = vunpack.c.l.b16 %v1074
        %v1966 = vunpack.c.h.b16 %v1074
        %v1967 = vunpack.c.l.b16 %v1075
        %v1968 = vunpack.c.h.b16 %v1075
        %v1969 = vunpack.c.l.b16 %v1076
        %v1970 = vunpack.c.h.b16 %v1076
        %v1971 = vunpack.c.l.b16 %v1077
        %v1972 = vunpack.c.h.b16 %v1077
        %v1973 = vunpack.c.l.b16 %v1078
        %v1974 = vunpack.c.h.b16 %v1078
        %v1975 = vpack.c.b16 %v1913, %v1911
        %v1976 = vpack.c.b16 %v1914, %v1912
        %v1977 = vpack.c.b16 %v1917, %v1915
        %v1978 = vpack.c.b16 %v1918, %v1916
        %v1979 = vpack.c.b16 %v1921, %v1919
        %v1980 = vpack.c.b16 %v1922, %v1920
        %v1981 = vpack.c.b16 %v1925, %v1923
        %v1982 = vpack.c.b16 %v1926, %v1924
        %v1983 = vpack.c.b16 %v1929, %v1927
        %v1984 = vpack.c.b16 %v1930, %v1928
        %v1985 = vpack.c.b16 %v1933, %v1931
        %v1986 = vpack.c.b16 %v1934, %v1932
        %v1987 = vpack.c.b16 %v1937, %v1935
        %v1988 = vpack.c.b16 %v1938, %v1936
        %v1989 = vpack.c.b16 %v1941, %v1939
        %v1990 = vpack.c.b16 %v1942, %v1940
        %v1991 = vpack.c.b16 %v1945, %v1943
        %v1992 = vpack.c.b16 %v1946, %v1944
        %v1993 = vpack.c.b16 %v1949, %v1947
        %v1994 = vpack.c.b16 %v1950, %v1948
        %v1995 = vpack.c.b16 %v1953, %v1951
        %v1996 = vpack.c.b16 %v1954, %v1952
        %v1997 = vpack.c.b16 %v1957, %v1955
        %v1998 = vpack.c.b16 %v1958, %v1956
        %v1999 = vpack.c.b16 %v1961, %v1959
        %v2000 = vpack.c.b16 %v1962, %v1960
        %v2001 = vpack.c.b16 %v1965, %v1963
        %v2002 = vpack.c.b16 %v1966, %v1964
        %v2003 = vpack.c.b16 %v1969, %v1967
        %v2004 = vpack.c.b16 %v1970, %v1968
        %v2005 = vpack.c.b16 %v1973, %v1971
        %v2006 = vpack.c.b16 %v1974, %v1972
        %2039 = vmatpush.bf16.msra.mxu0 %v1989
        %2040 = vmatpush.bf16.msra.mxu0 %v1987
        %2041 = vmatpush.bf16.msra.mxu0 %v1985
        %2042 = vmatpush.bf16.msra.mxu0 %v1983
        %2043 = vmatpush.bf16.msra.mxu0 %v1981
        %2044 = vmatpush.bf16.msra.mxu0 %v1979
        %2045 = vmatpush.bf16.msra.mxu0 %v1977
        %2046 = vmatpush.bf16.msra.mxu0 %v1975
        %2047 = vmatmul.bf16.gmra.mxu0 %v1559
        %v2048 = vpop.f32.mrf.mxu0
        %v2049 = vadd.f32 0.0, %v2048
        %v2050 = vpop.f32.mrf.mxu0
        %v2051 = vadd.f32 0.0, %v2050
        %2052 = vmatmul.bf16.gmra.mxu0 %v1561
        %v2053 = vpop.f32.mrf.mxu0
        %v2054 = vadd.f32 0.0, %v2053
        %v2055 = vpop.f32.mrf.mxu0
        %v2056 = vadd.f32 0.0, %v2055
        %2057 = vmatmul.bf16.gmra.mxu0 %v1563
        %v2058 = vpop.f32.mrf.mxu0
        %v2059 = vadd.f32 0.0, %v2058
        %v2060 = vpop.f32.mrf.mxu0
        %v2061 = vadd.f32 0.0, %v2060
        %2062 = vmatmul.bf16.gmra.mxu0 %v1565
        %v2063 = vpop.f32.mrf.mxu0
        %v2064 = vadd.f32 0.0, %v2063
        %v2065 = vpop.f32.mrf.mxu0
        %v2066 = vadd.f32 0.0, %v2065
        %2067 = vmatmul.bf16.gmra.mxu0 %v1567
        %v2068 = vpop.f32.mrf.mxu0
        %v2069 = vadd.f32 0.0, %v2068
        %v2070 = vpop.f32.mrf.mxu0
        %v2071 = vadd.f32 0.0, %v2070
        %2072 = vmatmul.bf16.gmra.mxu0 %v1569
        %v2073 = vpop.f32.mrf.mxu0
        %v2074 = vadd.f32 0.0, %v2073
        %v2075 = vpop.f32.mrf.mxu0
        %v2076 = vadd.f32 0.0, %v2075
        %2077 = vmatmul.bf16.gmra.mxu0 %v1571
        %v2078 = vpop.f32.mrf.mxu0
        %v2079 = vadd.f32 0.0, %v2078
        %v2080 = vpop.f32.mrf.mxu0
        %v2081 = vadd.f32 0.0, %v2080
        %2082 = vmatmul.bf16.gmra.mxu0 %v1573
        %v2083 = vpop.f32.mrf.mxu0
        %v2084 = vadd.f32 0.0, %v2083
        %v2085 = vpop.f32.mrf.mxu0
        %v2086 = vadd.f32 0.0, %v2085
        %2087 = vmatmul.bf16.gmra.mxu0 %v1575
        %v2088 = vpop.f32.mrf.mxu0
        %v2089 = vadd.f32 0.0, %v2088
        %v2090 = vpop.f32.mrf.mxu0
        %v2091 = vadd.f32 0.0, %v2090
        %2092 = vmatmul.bf16.gmra.mxu0 %v1577
        %v2093 = vpop.f32.mrf.mxu0
        %v2094 = vadd.f32 0.0, %v2093
        %v2095 = vpop.f32.mrf.mxu0
        %v2096 = vadd.f32 0.0, %v2095
        %2097 = vmatmul.bf16.gmra.mxu0 %v1579
        %v2098 = vpop.f32.mrf.mxu0
        %v2099 = vadd.f32 0.0, %v2098
        %v2100 = vpop.f32.mrf.mxu0
        %v2101 = vadd.f32 0.0, %v2100
        %2102 = vmatmul.bf16.gmra.mxu0 %v1581
        %v2103 = vpop.f32.mrf.mxu0
        %v2104 = vadd.f32 0.0, %v2103
        %v2105 = vpop.f32.mrf.mxu0
        %v2106 = vadd.f32 0.0, %v2105
        %2107 = vmatmul.bf16.gmra.mxu0 %v1583
        %v2108 = vpop.f32.mrf.mxu0
        %v2109 = vadd.f32 0.0, %v2108
        %v2110 = vpop.f32.mrf.mxu0
        %v2111 = vadd.f32 0.0, %v2110
        %2112 = vmatmul.bf16.gmra.mxu0 %v1585
        %v2113 = vpop.f32.mrf.mxu0
        %v2114 = vadd.f32 0.0, %v2113
        %v2115 = vpop.f32.mrf.mxu0
        %v2116 = vadd.f32 0.0, %v2115
        %2117 = vmatmul.bf16.gmra.mxu0 %v1587
        %v2118 = vpop.f32.mrf.mxu0
        %v2119 = vadd.f32 0.0, %v2118
        %v2120 = vpop.f32.mrf.mxu0
        %v2121 = vadd.f32 0.0, %v2120
        %2122 = vmatmul.bf16.gmra.mxu0 %v1589
        %v2123 = vpop.f32.mrf.mxu0
        %v2124 = vadd.f32 0.0, %v2123
        %v2125 = vpop.f32.mrf.mxu0
        %v2126 = vadd.f32 0.0, %v2125
        %2127 = vmatmul.bf16.gmra.mxu0 %v1591
        %v2128 = vpop.f32.mrf.mxu0
        %v2129 = vadd.f32 0.0, %v2128
        %v2130 = vpop.f32.mrf.mxu0
        %v2131 = vadd.f32 0.0, %v2130
        %2132 = vmatmul.bf16.gmra.mxu0 %v1593
        %v2133 = vpop.f32.mrf.mxu0
        %v2134 = vadd.f32 0.0, %v2133
        %v2135 = vpop.f32.mrf.mxu0
        %v2136 = vadd.f32 0.0, %v2135
        %2137 = vmatmul.bf16.gmra.mxu0 %v1595
        %v2138 = vpop.f32.mrf.mxu0
        %v2139 = vadd.f32 0.0, %v2138
        %v2140 = vpop.f32.mrf.mxu0
        %v2141 = vadd.f32 0.0, %v2140
        %2142 = vmatmul.bf16.gmra.mxu0 %v1597
        %v2143 = vpop.f32.mrf.mxu0
        %v2144 = vadd.f32 0.0, %v2143
        %v2145 = vpop.f32.mrf.mxu0
        %v2146 = vadd.f32 0.0, %v2145
        %2147 = vmatmul.bf16.gmra.mxu0 %v1599
        %v2148 = vpop.f32.mrf.mxu0
        %v2149 = vadd.f32 0.0, %v2148
        %v2150 = vpop.f32.mrf.mxu0
        %v2151 = vadd.f32 0.0, %v2150
        %2152 = vmatmul.bf16.gmra.mxu0 %v1601
        %v2153 = vpop.f32.mrf.mxu0
        %v2154 = vadd.f32 0.0, %v2153
        %v2155 = vpop.f32.mrf.mxu0
        %v2156 = vadd.f32 0.0, %v2155
        %2157 = vmatmul.bf16.gmra.mxu0 %v1603
        %v2158 = vpop.f32.mrf.mxu0
        %v2159 = vadd.f32 0.0, %v2158
        %v2160 = vpop.f32.mrf.mxu0
        %v2161 = vadd.f32 0.0, %v2160
        %2162 = vmatmul.bf16.gmra.mxu0 %v1605
        %v2163 = vpop.f32.mrf.mxu0
        %v2164 = vadd.f32 0.0, %v2163
        %v2165 = vpop.f32.mrf.mxu0
        %v2166 = vadd.f32 0.0, %v2165
        %2167 = vmatmul.bf16.gmra.mxu0 %v1607
        %v2168 = vpop.f32.mrf.mxu0
        %v2169 = vadd.f32 0.0, %v2168
        %v2170 = vpop.f32.mrf.mxu0
        %v2171 = vadd.f32 0.0, %v2170
        %2172 = vmatmul.bf16.gmra.mxu0 %v1609
        %v2173 = vpop.f32.mrf.mxu0
        %v2174 = vadd.f32 0.0, %v2173
        %v2175 = vpop.f32.mrf.mxu0
        %v2176 = vadd.f32 0.0, %v2175
        %2177 = vmatmul.bf16.gmra.mxu0 %v1611
        %v2178 = vpop.f32.mrf.mxu0
        %v2179 = vadd.f32 0.0, %v2178
        %v2180 = vpop.f32.mrf.mxu0
        %v2181 = vadd.f32 0.0, %v2180
        %2182 = vmatmul.bf16.gmra.mxu0 %v1613
        %v2183 = vpop.f32.mrf.mxu0
        %v2184 = vadd.f32 0.0, %v2183
        %v2185 = vpop.f32.mrf.mxu0
        %v2186 = vadd.f32 0.0, %v2185
        %2187 = vmatmul.bf16.gmra.mxu0 %v1615
        %v2188 = vpop.f32.mrf.mxu0
        %v2189 = vadd.f32 0.0, %v2188
        %v2190 = vpop.f32.mrf.mxu0
        %v2191 = vadd.f32 0.0, %v2190
        %2192 = vmatmul.bf16.gmra.mxu0 %v1617
        %v2193 = vpop.f32.mrf.mxu0
        %v2194 = vadd.f32 0.0, %v2193
        %v2195 = vpop.f32.mrf.mxu0
        %v2196 = vadd.f32 0.0, %v2195
        %2197 = vmatmul.bf16.gmra.mxu0 %v1619
        %v2198 = vpop.f32.mrf.mxu0
        %v2199 = vadd.f32 0.0, %v2198
        %v2200 = vpop.f32.mrf.mxu0
        %v2201 = vadd.f32 0.0, %v2200
        %2202 = vmatmul.bf16.gmra.mxu0 %v1621
        %v2203 = vpop.f32.mrf.mxu0
        %v2204 = vadd.f32 0.0, %v2203
        %v2205 = vpop.f32.mrf.mxu0
        %v2206 = vadd.f32 0.0, %v2205
        %2207 = vmatmul.bf16.gmra.mxu0 %v1623
        %v2208 = vpop.f32.mrf.mxu0
        %v2209 = vadd.f32 0.0, %v2208
        %v2210 = vpop.f32.mrf.mxu0
        %v2211 = vadd.f32 0.0, %v2210
        %2212 = vmatmul.bf16.gmra.mxu0 %v1625
        %v2213 = vpop.f32.mrf.mxu0
        %v2214 = vadd.f32 0.0, %v2213
        %v2215 = vpop.f32.mrf.mxu0
        %v2216 = vadd.f32 0.0, %v2215
        %2217 = vmatmul.bf16.gmra.mxu0 %v1627
        %v2218 = vpop.f32.mrf.mxu0
        %v2219 = vadd.f32 0.0, %v2218
        %v2220 = vpop.f32.mrf.mxu0
        %v2221 = vadd.f32 0.0, %v2220
        %2222 = vmatmul.bf16.gmra.mxu0 %v1629
        %v2223 = vpop.f32.mrf.mxu0
        %v2224 = vadd.f32 0.0, %v2223
        %v2225 = vpop.f32.mrf.mxu0
        %v2226 = vadd.f32 0.0, %v2225
        %2227 = vmatmul.bf16.gmra.mxu0 %v1631
        %v2228 = vpop.f32.mrf.mxu0
        %v2229 = vadd.f32 0.0, %v2228
        %v2230 = vpop.f32.mrf.mxu0
        %v2231 = vadd.f32 0.0, %v2230
        %2232 = vmatmul.bf16.gmra.mxu0 %v1633
        %v2233 = vpop.f32.mrf.mxu0
        %v2234 = vadd.f32 0.0, %v2233
        %v2235 = vpop.f32.mrf.mxu0
        %v2236 = vadd.f32 0.0, %v2235
        %2237 = vmatmul.bf16.gmra.mxu0 %v1635
        %v2238 = vpop.f32.mrf.mxu0
        %v2239 = vadd.f32 0.0, %v2238
        %v2240 = vpop.f32.mrf.mxu0
        %v2241 = vadd.f32 0.0, %v2240
        %2242 = vmatmul.bf16.gmra.mxu0 %v1637
        %v2243 = vpop.f32.mrf.mxu0
        %v2244 = vadd.f32 0.0, %v2243
        %v2245 = vpop.f32.mrf.mxu0
        %v2246 = vadd.f32 0.0, %v2245
        %2247 = vmatmul.bf16.gmra.mxu0 %v1639
        %v2248 = vpop.f32.mrf.mxu0
        %v2249 = vadd.f32 0.0, %v2248
        %v2250 = vpop.f32.mrf.mxu0
        %v2251 = vadd.f32 0.0, %v2250
        %2252 = vmatmul.bf16.gmra.mxu0 %v1641
        %v2253 = vpop.f32.mrf.mxu0
        %v2254 = vadd.f32 0.0, %v2253
        %v2255 = vpop.f32.mrf.mxu0
        %v2256 = vadd.f32 0.0, %v2255
        %2257 = vmatmul.bf16.gmra.mxu0 %v1643
        %v2258 = vpop.f32.mrf.mxu0
        %v2259 = vadd.f32 0.0, %v2258
        %v2260 = vpop.f32.mrf.mxu0
        %v2261 = vadd.f32 0.0, %v2260
        %2262 = vmatmul.bf16.gmra.mxu0 %v1645
        %v2263 = vpop.f32.mrf.mxu0
        %v2264 = vadd.f32 0.0, %v2263
        %v2265 = vpop.f32.mrf.mxu0
        %v2266 = vadd.f32 0.0, %v2265
        %2267 = vmatmul.bf16.gmra.mxu0 %v1647
        %v2268 = vpop.f32.mrf.mxu0
        %v2269 = vadd.f32 0.0, %v2268
        %v2270 = vpop.f32.mrf.mxu0
        %v2271 = vadd.f32 0.0, %v2270
        %2272 = vmatmul.bf16.gmra.mxu0 %v1649
        %v2273 = vpop.f32.mrf.mxu0
        %v2274 = vadd.f32 0.0, %v2273
        %v2275 = vpop.f32.mrf.mxu0
        %v2276 = vadd.f32 0.0, %v2275
        %2277 = vmatmul.bf16.gmra.mxu0 %v1651
        %v2278 = vpop.f32.mrf.mxu0
        %v2279 = vadd.f32 0.0, %v2278
        %v2280 = vpop.f32.mrf.mxu0
        %v2281 = vadd.f32 0.0, %v2280
        %2282 = vmatmul.bf16.gmra.mxu0 %v1653
        %v2283 = vpop.f32.mrf.mxu0
        %v2284 = vadd.f32 0.0, %v2283
        %v2285 = vpop.f32.mrf.mxu0
        %v2286 = vadd.f32 0.0, %v2285
        %2287 = vmatmul.bf16.gmra.mxu0 %v1655
        %v2288 = vpop.f32.mrf.mxu0
        %v2289 = vadd.f32 0.0, %v2288
        %v2290 = vpop.f32.mrf.mxu0
        %v2291 = vadd.f32 0.0, %v2290
        %2292 = vmatmul.bf16.gmra.mxu0 %v1657
        %v2293 = vpop.f32.mrf.mxu0
        %v2294 = vadd.f32 0.0, %v2293
        %v2295 = vpop.f32.mrf.mxu0
        %v2296 = vadd.f32 0.0, %v2295
        %2297 = vmatmul.bf16.gmra.mxu0 %v1659
        %v2298 = vpop.f32.mrf.mxu0
        %v2299 = vadd.f32 0.0, %v2298
        %v2300 = vpop.f32.mrf.mxu0
        %v2301 = vadd.f32 0.0, %v2300
        %2302 = vmatmul.bf16.gmra.mxu0 %v1661
        %v2303 = vpop.f32.mrf.mxu0
        %v2304 = vadd.f32 0.0, %v2303
        %v2305 = vpop.f32.mrf.mxu0
        %v2306 = vadd.f32 0.0, %v2305
        %2307 = vmatmul.bf16.gmra.mxu0 %v1663
        %v2308 = vpop.f32.mrf.mxu0
        %v2309 = vadd.f32 0.0, %v2308
        %v2310 = vpop.f32.mrf.mxu0
        %v2311 = vadd.f32 0.0, %v2310
        %2312 = vmatmul.bf16.gmra.mxu0 %v1665
        %v2313 = vpop.f32.mrf.mxu0
        %v2314 = vadd.f32 0.0, %v2313
        %v2315 = vpop.f32.mrf.mxu0
        %v2316 = vadd.f32 0.0, %v2315
        %2317 = vmatmul.bf16.gmra.mxu0 %v1667
        %v2318 = vpop.f32.mrf.mxu0
        %v2319 = vadd.f32 0.0, %v2318
        %v2320 = vpop.f32.mrf.mxu0
        %v2321 = vadd.f32 0.0, %v2320
        %2322 = vmatmul.bf16.gmra.mxu0 %v1669
        %v2323 = vpop.f32.mrf.mxu0
        %v2324 = vadd.f32 0.0, %v2323
        %v2325 = vpop.f32.mrf.mxu0
        %v2326 = vadd.f32 0.0, %v2325
        %2327 = vmatmul.bf16.gmra.mxu0 %v1671
        %v2328 = vpop.f32.mrf.mxu0
        %v2329 = vadd.f32 0.0, %v2328
        %v2330 = vpop.f32.mrf.mxu0
        %v2331 = vadd.f32 0.0, %v2330
        %2332 = vmatmul.bf16.gmra.mxu0 %v1673
        %v2333 = vpop.f32.mrf.mxu0
        %v2334 = vadd.f32 0.0, %v2333
        %v2335 = vpop.f32.mrf.mxu0
        %v2336 = vadd.f32 0.0, %v2335
        %2337 = vmatmul.bf16.gmra.mxu0 %v1675
        %v2338 = vpop.f32.mrf.mxu0
        %v2339 = vadd.f32 0.0, %v2338
        %v2340 = vpop.f32.mrf.mxu0
        %v2341 = vadd.f32 0.0, %v2340
        %2342 = vmatmul.bf16.gmra.mxu0 %v1677
        %v2343 = vpop.f32.mrf.mxu0
        %v2344 = vadd.f32 0.0, %v2343
        %v2345 = vpop.f32.mrf.mxu0
        %v2346 = vadd.f32 0.0, %v2345
        %2347 = vmatmul.bf16.gmra.mxu0 %v1679
        %v2348 = vpop.f32.mrf.mxu0
        %v2349 = vadd.f32 0.0, %v2348
        %v2350 = vpop.f32.mrf.mxu0
        %v2351 = vadd.f32 0.0, %v2350
        %2352 = vmatmul.bf16.gmra.mxu0 %v1681
        %v2353 = vpop.f32.mrf.mxu0
        %v2354 = vadd.f32 0.0, %v2353
        %v2355 = vpop.f32.mrf.mxu0
        %v2356 = vadd.f32 0.0, %v2355
        %2357 = vmatmul.bf16.gmra.mxu0 %v1683
        %v2358 = vpop.f32.mrf.mxu0
        %v2359 = vadd.f32 0.0, %v2358
        %v2360 = vpop.f32.mrf.mxu0
        %v2361 = vadd.f32 0.0, %v2360
        %2362 = vmatmul.bf16.gmra.mxu0 %v1685
        %v2363 = vpop.f32.mrf.mxu0
        %v2364 = vadd.f32 0.0, %v2363
        %v2365 = vpop.f32.mrf.mxu0
        %v2366 = vadd.f32 0.0, %v2365
        %2367 = vmatmul.bf16.gmra.mxu0 %v1687
        %v2368 = vpop.f32.mrf.mxu0
        %v2369 = vadd.f32 0.0, %v2368
        %v2370 = vpop.f32.mrf.mxu0
        %v2371 = vadd.f32 0.0, %v2370
        %2372 = vmatmul.bf16.gmra.mxu0 %v1689
        %v2373 = vpop.f32.mrf.mxu0
        %v2374 = vadd.f32 0.0, %v2373
        %v2375 = vpop.f32.mrf.mxu0
        %v2376 = vadd.f32 0.0, %v2375
        %2377 = vmatmul.bf16.gmra.mxu0 %v1691
        %v2378 = vpop.f32.mrf.mxu0
        %v2379 = vadd.f32 0.0, %v2378
        %v2380 = vpop.f32.mrf.mxu0
        %v2381 = vadd.f32 0.0, %v2380
        %2382 = vmatmul.bf16.gmra.mxu0 %v1693
        %v2383 = vpop.f32.mrf.mxu0
        %v2384 = vadd.f32 0.0, %v2383
        %v2385 = vpop.f32.mrf.mxu0
        %v2386 = vadd.f32 0.0, %v2385
        %2387 = vmatmul.bf16.gmra.mxu0 %v1695
        %v2388 = vpop.f32.mrf.mxu0
        %v2389 = vadd.f32 0.0, %v2388
        %v2390 = vpop.f32.mrf.mxu0
        %v2391 = vadd.f32 0.0, %v2390
        %2392 = vmatmul.bf16.gmra.mxu0 %v1697
        %v2393 = vpop.f32.mrf.mxu0
        %v2394 = vadd.f32 0.0, %v2393
        %v2395 = vpop.f32.mrf.mxu0
        %v2396 = vadd.f32 0.0, %v2395
        %2397 = vmatmul.bf16.gmra.mxu0 %v1699
        %v2398 = vpop.f32.mrf.mxu0
        %v2399 = vadd.f32 0.0, %v2398
        %v2400 = vpop.f32.mrf.mxu0
        %v2401 = vadd.f32 0.0, %v2400
        %2402 = vmatmul.bf16.gmra.mxu0 %v1701
        %v2403 = vpop.f32.mrf.mxu0
        %v2404 = vadd.f32 0.0, %v2403
        %v2405 = vpop.f32.mrf.mxu0
        %v2406 = vadd.f32 0.0, %v2405
        %2407 = vmatmul.bf16.gmra.mxu0 %v1703
        %v2408 = vpop.f32.mrf.mxu0
        %v2409 = vadd.f32 0.0, %v2408
        %v2410 = vpop.f32.mrf.mxu0
        %v2411 = vadd.f32 0.0, %v2410
        %2412 = vmatmul.bf16.gmra.mxu0 %v1705
        %v2413 = vpop.f32.mrf.mxu0
        %v2414 = vadd.f32 0.0, %v2413
        %v2415 = vpop.f32.mrf.mxu0
        %v2416 = vadd.f32 0.0, %v2415
        %2417 = vmatmul.bf16.gmra.mxu0 %v1707
        %v2418 = vpop.f32.mrf.mxu0
        %v2419 = vadd.f32 0.0, %v2418
        %v2420 = vpop.f32.mrf.mxu0
        %v2421 = vadd.f32 0.0, %v2420
        %2422 = vmatmul.bf16.gmra.mxu0 %v1709
        %v2423 = vpop.f32.mrf.mxu0
        %v2424 = vadd.f32 0.0, %v2423
        %v2425 = vpop.f32.mrf.mxu0
        %v2426 = vadd.f32 0.0, %v2425
        %2427 = vmatmul.bf16.gmra.mxu0 %v1711
        %v2428 = vpop.f32.mrf.mxu0
        %v2429 = vadd.f32 0.0, %v2428
        %v2430 = vpop.f32.mrf.mxu0
        %v2431 = vadd.f32 0.0, %v2430
        %2432 = vmatmul.bf16.gmra.mxu0 %v1713
        %v2433 = vpop.f32.mrf.mxu0
        %v2434 = vadd.f32 0.0, %v2433
        %v2435 = vpop.f32.mrf.mxu0
        %v2436 = vadd.f32 0.0, %v2435
        %2437 = vmatmul.bf16.gmra.mxu0 %v1715
        %v2438 = vpop.f32.mrf.mxu0
        %v2439 = vadd.f32 0.0, %v2438
        %v2440 = vpop.f32.mrf.mxu0
        %v2441 = vadd.f32 0.0, %v2440
        %2442 = vmatmul.bf16.gmra.mxu0 %v1717
        %v2443 = vpop.f32.mrf.mxu0
        %v2444 = vadd.f32 0.0, %v2443
        %v2445 = vpop.f32.mrf.mxu0
        %v2446 = vadd.f32 0.0, %v2445
        %2447 = vdwg.mxu0
        %2448 = vmatpush.bf16.msra.mxu0 %v2005
        %2449 = vmatpush.bf16.msra.mxu0 %v2003
        %2450 = vmatpush.bf16.msra.mxu0 %v2001
        %2451 = vmatpush.bf16.msra.mxu0 %v1999
        %2452 = vmatpush.bf16.msra.mxu0 %v1997
        %2453 = vmatpush.bf16.msra.mxu0 %v1995
        %2454 = vmatpush.bf16.msra.mxu0 %v1993
        %2455 = vmatpush.bf16.msra.mxu0 %v1991
        %2456 = vmatmul.bf16.gmra.mxu0 %v1560
        %v2457 = vpop.f32.mrf.mxu0
        %v2458 = vadd.f32 %v2049, %v2457
        %v2459 = vpop.f32.mrf.mxu0
        %v2460 = vadd.f32 %v2051, %v2459
        %2461 = vmatmul.bf16.gmra.mxu0 %v1562
        %v2462 = vpop.f32.mrf.mxu0
        %v2463 = vadd.f32 %v2054, %v2462
        %v2464 = vpop.f32.mrf.mxu0
        %v2465 = vadd.f32 %v2056, %v2464
        %2466 = vmatmul.bf16.gmra.mxu0 %v1564
        %v2467 = vpop.f32.mrf.mxu0
        %v2468 = vadd.f32 %v2059, %v2467
        %v2469 = vpop.f32.mrf.mxu0
        %v2470 = vadd.f32 %v2061, %v2469
        %2471 = vmatmul.bf16.gmra.mxu0 %v1566
        %v2472 = vpop.f32.mrf.mxu0
        %v2473 = vadd.f32 %v2064, %v2472
        %v2474 = vpop.f32.mrf.mxu0
        %v2475 = vadd.f32 %v2066, %v2474
        %2476 = vmatmul.bf16.gmra.mxu0 %v1568
        %v2477 = vpop.f32.mrf.mxu0
        %v2478 = vadd.f32 %v2069, %v2477
        %v2479 = vpop.f32.mrf.mxu0
        %v2480 = vadd.f32 %v2071, %v2479
        %2481 = vmatmul.bf16.gmra.mxu0 %v1570
        %v2482 = vpop.f32.mrf.mxu0
        %v2483 = vadd.f32 %v2074, %v2482
        %v2484 = vpop.f32.mrf.mxu0
        %v2485 = vadd.f32 %v2076, %v2484
        %2486 = vmatmul.bf16.gmra.mxu0 %v1572
        %v2487 = vpop.f32.mrf.mxu0
        %v2488 = vadd.f32 %v2079, %v2487
        %v2489 = vpop.f32.mrf.mxu0
        %v2490 = vadd.f32 %v2081, %v2489
        %2491 = vmatmul.bf16.gmra.mxu0 %v1574
        %v2492 = vpop.f32.mrf.mxu0
        %v2493 = vadd.f32 %v2084, %v2492
        %v2494 = vpop.f32.mrf.mxu0
        %v2495 = vadd.f32 %v2086, %v2494
        %2496 = vmatmul.bf16.gmra.mxu0 %v1576
        %v2497 = vpop.f32.mrf.mxu0
        %v2498 = vadd.f32 %v2089, %v2497
        %v2499 = vpop.f32.mrf.mxu0
        %v2500 = vadd.f32 %v2091, %v2499
        %2501 = vmatmul.bf16.gmra.mxu0 %v1578
        %v2502 = vpop.f32.mrf.mxu0
        %v2503 = vadd.f32 %v2094, %v2502
        %v2504 = vpop.f32.mrf.mxu0
        %v2505 = vadd.f32 %v2096, %v2504
        %2506 = vmatmul.bf16.gmra.mxu0 %v1580
        %v2507 = vpop.f32.mrf.mxu0
        %v2508 = vadd.f32 %v2099, %v2507
        %v2509 = vpop.f32.mrf.mxu0
        %v2510 = vadd.f32 %v2101, %v2509
        %2511 = vmatmul.bf16.gmra.mxu0 %v1582
        %v2512 = vpop.f32.mrf.mxu0
        %v2513 = vadd.f32 %v2104, %v2512
        %v2514 = vpop.f32.mrf.mxu0
        %v2515 = vadd.f32 %v2106, %v2514
        %2516 = vmatmul.bf16.gmra.mxu0 %v1584
        %v2517 = vpop.f32.mrf.mxu0
        %v2518 = vadd.f32 %v2109, %v2517
        %v2519 = vpop.f32.mrf.mxu0
        %v2520 = vadd.f32 %v2111, %v2519
        %2521 = vmatmul.bf16.gmra.mxu0 %v1586
        %v2522 = vpop.f32.mrf.mxu0
        %v2523 = vadd.f32 %v2114, %v2522
        %v2524 = vpop.f32.mrf.mxu0
        %v2525 = vadd.f32 %v2116, %v2524
        %2526 = vmatmul.bf16.gmra.mxu0 %v1588
        %v2527 = vpop.f32.mrf.mxu0
        %v2528 = vadd.f32 %v2119, %v2527
        %v2529 = vpop.f32.mrf.mxu0
        %v2530 = vadd.f32 %v2121, %v2529
        %2531 = vmatmul.bf16.gmra.mxu0 %v1590
        %v2532 = vpop.f32.mrf.mxu0
        %v2533 = vadd.f32 %v2124, %v2532
        %v2534 = vpop.f32.mrf.mxu0
        %v2535 = vadd.f32 %v2126, %v2534
        %2536 = vmatmul.bf16.gmra.mxu0 %v1592
        %v2537 = vpop.f32.mrf.mxu0
        %v2538 = vadd.f32 %v2129, %v2537
        %v2539 = vpop.f32.mrf.mxu0
        %v2540 = vadd.f32 %v2131, %v2539
        %2541 = vmatmul.bf16.gmra.mxu0 %v1594
        %v2542 = vpop.f32.mrf.mxu0
        %v2543 = vadd.f32 %v2134, %v2542
        %v2544 = vpop.f32.mrf.mxu0
        %v2545 = vadd.f32 %v2136, %v2544
        %2546 = vmatmul.bf16.gmra.mxu0 %v1596
        %v2547 = vpop.f32.mrf.mxu0
        %v2548 = vadd.f32 %v2139, %v2547
        %v2549 = vpop.f32.mrf.mxu0
        %v2550 = vadd.f32 %v2141, %v2549
        %2551 = vmatmul.bf16.gmra.mxu0 %v1598
        %v2552 = vpop.f32.mrf.mxu0
        %v2553 = vadd.f32 %v2144, %v2552
        %v2554 = vpop.f32.mrf.mxu0
        %v2555 = vadd.f32 %v2146, %v2554
        %2556 = vmatmul.bf16.gmra.mxu0 %v1600
        %v2557 = vpop.f32.mrf.mxu0
        %v2558 = vadd.f32 %v2149, %v2557
        %v2559 = vpop.f32.mrf.mxu0
        %v2560 = vadd.f32 %v2151, %v2559
        %2561 = vmatmul.bf16.gmra.mxu0 %v1602
        %v2562 = vpop.f32.mrf.mxu0
        %v2563 = vadd.f32 %v2154, %v2562
        %v2564 = vpop.f32.mrf.mxu0
        %v2565 = vadd.f32 %v2156, %v2564
        %2566 = vmatmul.bf16.gmra.mxu0 %v1604
        %v2567 = vpop.f32.mrf.mxu0
        %v2568 = vadd.f32 %v2159, %v2567
        %v2569 = vpop.f32.mrf.mxu0
        %v2570 = vadd.f32 %v2161, %v2569
        %2571 = vmatmul.bf16.gmra.mxu0 %v1606
        %v2572 = vpop.f32.mrf.mxu0
        %v2573 = vadd.f32 %v2164, %v2572
        %v2574 = vpop.f32.mrf.mxu0
        %v2575 = vadd.f32 %v2166, %v2574
        %2576 = vmatmul.bf16.gmra.mxu0 %v1608
        %v2577 = vpop.f32.mrf.mxu0
        %v2578 = vadd.f32 %v2169, %v2577
        %v2579 = vpop.f32.mrf.mxu0
        %v2580 = vadd.f32 %v2171, %v2579
        %2581 = vmatmul.bf16.gmra.mxu0 %v1610
        %v2582 = vpop.f32.mrf.mxu0
        %v2583 = vadd.f32 %v2174, %v2582
        %v2584 = vpop.f32.mrf.mxu0
        %v2585 = vadd.f32 %v2176, %v2584
        %2586 = vmatmul.bf16.gmra.mxu0 %v1612
        %v2587 = vpop.f32.mrf.mxu0
        %v2588 = vadd.f32 %v2179, %v2587
        %v2589 = vpop.f32.mrf.mxu0
        %v2590 = vadd.f32 %v2181, %v2589
        %2591 = vmatmul.bf16.gmra.mxu0 %v1614
        %v2592 = vpop.f32.mrf.mxu0
        %v2593 = vadd.f32 %v2184, %v2592
        %v2594 = vpop.f32.mrf.mxu0
        %v2595 = vadd.f32 %v2186, %v2594
        %2596 = vmatmul.bf16.gmra.mxu0 %v1616
        %v2597 = vpop.f32.mrf.mxu0
        %v2598 = vadd.f32 %v2189, %v2597
        %v2599 = vpop.f32.mrf.mxu0
        %v2600 = vadd.f32 %v2191, %v2599
        %2601 = vmatmul.bf16.gmra.mxu0 %v1618
        %v2602 = vpop.f32.mrf.mxu0
        %v2603 = vadd.f32 %v2194, %v2602
        %v2604 = vpop.f32.mrf.mxu0
        %v2605 = vadd.f32 %v2196, %v2604
        %2606 = vmatmul.bf16.gmra.mxu0 %v1620
        %v2607 = vpop.f32.mrf.mxu0
        %v2608 = vadd.f32 %v2199, %v2607
        %v2609 = vpop.f32.mrf.mxu0
        %v2610 = vadd.f32 %v2201, %v2609
        %2611 = vmatmul.bf16.gmra.mxu0 %v1622
        %v2612 = vpop.f32.mrf.mxu0
        %v2613 = vadd.f32 %v2204, %v2612
        %v2614 = vpop.f32.mrf.mxu0
        %v2615 = vadd.f32 %v2206, %v2614
        %2616 = vmatmul.bf16.gmra.mxu0 %v1624
        %v2617 = vpop.f32.mrf.mxu0
        %v2618 = vadd.f32 %v2209, %v2617
        %v2619 = vpop.f32.mrf.mxu0
        %v2620 = vadd.f32 %v2211, %v2619
        %2621 = vmatmul.bf16.gmra.mxu0 %v1626
        %v2622 = vpop.f32.mrf.mxu0
        %v2623 = vadd.f32 %v2214, %v2622
        %v2624 = vpop.f32.mrf.mxu0
        %v2625 = vadd.f32 %v2216, %v2624
        %2626 = vmatmul.bf16.gmra.mxu0 %v1628
        %v2627 = vpop.f32.mrf.mxu0
        %v2628 = vadd.f32 %v2219, %v2627
        %v2629 = vpop.f32.mrf.mxu0
        %v2630 = vadd.f32 %v2221, %v2629
        %2631 = vmatmul.bf16.gmra.mxu0 %v1630
        %v2632 = vpop.f32.mrf.mxu0
        %v2633 = vadd.f32 %v2224, %v2632
        %v2634 = vpop.f32.mrf.mxu0
        %v2635 = vadd.f32 %v2226, %v2634
        %2636 = vmatmul.bf16.gmra.mxu0 %v1632
        %v2637 = vpop.f32.mrf.mxu0
        %v2638 = vadd.f32 %v2229, %v2637
        %v2639 = vpop.f32.mrf.mxu0
        %v2640 = vadd.f32 %v2231, %v2639
        %2641 = vmatmul.bf16.gmra.mxu0 %v1634
        %v2642 = vpop.f32.mrf.mxu0
        %v2643 = vadd.f32 %v2234, %v2642
        %v2644 = vpop.f32.mrf.mxu0
        %v2645 = vadd.f32 %v2236, %v2644
        %2646 = vmatmul.bf16.gmra.mxu0 %v1636
        %v2647 = vpop.f32.mrf.mxu0
        %v2648 = vadd.f32 %v2239, %v2647
        %v2649 = vpop.f32.mrf.mxu0
        %v2650 = vadd.f32 %v2241, %v2649
        %2651 = vmatmul.bf16.gmra.mxu0 %v1638
        %v2652 = vpop.f32.mrf.mxu0
        %v2653 = vadd.f32 %v2244, %v2652
        %v2654 = vpop.f32.mrf.mxu0
        %v2655 = vadd.f32 %v2246, %v2654
        %2656 = vmatmul.bf16.gmra.mxu0 %v1640
        %v2657 = vpop.f32.mrf.mxu0
        %v2658 = vadd.f32 %v2249, %v2657
        %v2659 = vpop.f32.mrf.mxu0
        %v2660 = vadd.f32 %v2251, %v2659
        %2661 = vmatmul.bf16.gmra.mxu0 %v1642
        %v2662 = vpop.f32.mrf.mxu0
        %v2663 = vadd.f32 %v2254, %v2662
        %v2664 = vpop.f32.mrf.mxu0
        %v2665 = vadd.f32 %v2256, %v2664
        %2666 = vmatmul.bf16.gmra.mxu0 %v1644
        %v2667 = vpop.f32.mrf.mxu0
        %v2668 = vadd.f32 %v2259, %v2667
        %v2669 = vpop.f32.mrf.mxu0
        %v2670 = vadd.f32 %v2261, %v2669
        %2671 = vmatmul.bf16.gmra.mxu0 %v1646
        %v2672 = vpop.f32.mrf.mxu0
        %v2673 = vadd.f32 %v2264, %v2672
        %v2674 = vpop.f32.mrf.mxu0
        %v2675 = vadd.f32 %v2266, %v2674
        %2676 = vmatmul.bf16.gmra.mxu0 %v1648
        %v2677 = vpop.f32.mrf.mxu0
        %v2678 = vadd.f32 %v2269, %v2677
        %v2679 = vpop.f32.mrf.mxu0
        %v2680 = vadd.f32 %v2271, %v2679
        %2681 = vmatmul.bf16.gmra.mxu0 %v1650
        %v2682 = vpop.f32.mrf.mxu0
        %v2683 = vadd.f32 %v2274, %v2682
        %v2684 = vpop.f32.mrf.mxu0
        %v2685 = vadd.f32 %v2276, %v2684
        %2686 = vmatmul.bf16.gmra.mxu0 %v1652
        %v2687 = vpop.f32.mrf.mxu0
        %v2688 = vadd.f32 %v2279, %v2687
        %v2689 = vpop.f32.mrf.mxu0
        %v2690 = vadd.f32 %v2281, %v2689
        %2691 = vmatmul.bf16.gmra.mxu0 %v1654
        %v2692 = vpop.f32.mrf.mxu0
        %v2693 = vadd.f32 %v2284, %v2692
        %v2694 = vpop.f32.mrf.mxu0
        %v2695 = vadd.f32 %v2286, %v2694
        %2696 = vmatmul.bf16.gmra.mxu0 %v1656
        %v2697 = vpop.f32.mrf.mxu0
        %v2698 = vadd.f32 %v2289, %v2697
        %v2699 = vpop.f32.mrf.mxu0
        %v2700 = vadd.f32 %v2291, %v2699
        %2701 = vmatmul.bf16.gmra.mxu0 %v1658
        %v2702 = vpop.f32.mrf.mxu0
        %v2703 = vadd.f32 %v2294, %v2702
        %v2704 = vpop.f32.mrf.mxu0
        %v2705 = vadd.f32 %v2296, %v2704
        %2706 = vmatmul.bf16.gmra.mxu0 %v1660
        %v2707 = vpop.f32.mrf.mxu0
        %v2708 = vadd.f32 %v2299, %v2707
        %v2709 = vpop.f32.mrf.mxu0
        %v2710 = vadd.f32 %v2301, %v2709
        %2711 = vmatmul.bf16.gmra.mxu0 %v1662
        %v2712 = vpop.f32.mrf.mxu0
        %v2713 = vadd.f32 %v2304, %v2712
        %v2714 = vpop.f32.mrf.mxu0
        %v2715 = vadd.f32 %v2306, %v2714
        %2716 = vmatmul.bf16.gmra.mxu0 %v1664
        %v2717 = vpop.f32.mrf.mxu0
        %v2718 = vadd.f32 %v2309, %v2717
        %v2719 = vpop.f32.mrf.mxu0
        %v2720 = vadd.f32 %v2311, %v2719
        %2721 = vmatmul.bf16.gmra.mxu0 %v1666
        %v2722 = vpop.f32.mrf.mxu0
        %v2723 = vadd.f32 %v2314, %v2722
        %v2724 = vpop.f32.mrf.mxu0
        %v2725 = vadd.f32 %v2316, %v2724
        %2726 = vmatmul.bf16.gmra.mxu0 %v1668
        %v2727 = vpop.f32.mrf.mxu0
        %v2728 = vadd.f32 %v2319, %v2727
        %v2729 = vpop.f32.mrf.mxu0
        %v2730 = vadd.f32 %v2321, %v2729
        %2731 = vmatmul.bf16.gmra.mxu0 %v1670
        %v2732 = vpop.f32.mrf.mxu0
        %v2733 = vadd.f32 %v2324, %v2732
        %v2734 = vpop.f32.mrf.mxu0
        %v2735 = vadd.f32 %v2326, %v2734
        %2736 = vmatmul.bf16.gmra.mxu0 %v1672
        %v2737 = vpop.f32.mrf.mxu0
        %v2738 = vadd.f32 %v2329, %v2737
        %v2739 = vpop.f32.mrf.mxu0
        %v2740 = vadd.f32 %v2331, %v2739
        %2741 = vmatmul.bf16.gmra.mxu0 %v1674
        %v2742 = vpop.f32.mrf.mxu0
        %v2743 = vadd.f32 %v2334, %v2742
        %v2744 = vpop.f32.mrf.mxu0
        %v2745 = vadd.f32 %v2336, %v2744
        %2746 = vmatmul.bf16.gmra.mxu0 %v1676
        %v2747 = vpop.f32.mrf.mxu0
        %v2748 = vadd.f32 %v2339, %v2747
        %v2749 = vpop.f32.mrf.mxu0
        %v2750 = vadd.f32 %v2341, %v2749
        %2751 = vmatmul.bf16.gmra.mxu0 %v1678
        %v2752 = vpop.f32.mrf.mxu0
        %v2753 = vadd.f32 %v2344, %v2752
        %v2754 = vpop.f32.mrf.mxu0
        %v2755 = vadd.f32 %v2346, %v2754
        %2756 = vmatmul.bf16.gmra.mxu0 %v1680
        %v2757 = vpop.f32.mrf.mxu0
        %v2758 = vadd.f32 %v2349, %v2757
        %v2759 = vpop.f32.mrf.mxu0
        %v2760 = vadd.f32 %v2351, %v2759
        %2761 = vmatmul.bf16.gmra.mxu0 %v1682
        %v2762 = vpop.f32.mrf.mxu0
        %v2763 = vadd.f32 %v2354, %v2762
        %v2764 = vpop.f32.mrf.mxu0
        %v2765 = vadd.f32 %v2356, %v2764
        %2766 = vmatmul.bf16.gmra.mxu0 %v1684
        %v2767 = vpop.f32.mrf.mxu0
        %v2768 = vadd.f32 %v2359, %v2767
        %v2769 = vpop.f32.mrf.mxu0
        %v2770 = vadd.f32 %v2361, %v2769
        %2771 = vmatmul.bf16.gmra.mxu0 %v1686
        %v2772 = vpop.f32.mrf.mxu0
        %v2773 = vadd.f32 %v2364, %v2772
        %v2774 = vpop.f32.mrf.mxu0
        %v2775 = vadd.f32 %v2366, %v2774
        %2776 = vmatmul.bf16.gmra.mxu0 %v1688
        %v2777 = vpop.f32.mrf.mxu0
        %v2778 = vadd.f32 %v2369, %v2777
        %v2779 = vpop.f32.mrf.mxu0
        %v2780 = vadd.f32 %v2371, %v2779
        %2781 = vmatmul.bf16.gmra.mxu0 %v1690
        %v2782 = vpop.f32.mrf.mxu0
        %v2783 = vadd.f32 %v2374, %v2782
        %v2784 = vpop.f32.mrf.mxu0
        %v2785 = vadd.f32 %v2376, %v2784
        %2786 = vmatmul.bf16.gmra.mxu0 %v1692
        %v2787 = vpop.f32.mrf.mxu0
        %v2788 = vadd.f32 %v2379, %v2787
        %v2789 = vpop.f32.mrf.mxu0
        %v2790 = vadd.f32 %v2381, %v2789
        %2791 = vmatmul.bf16.gmra.mxu0 %v1694
        %v2792 = vpop.f32.mrf.mxu0
        %v2793 = vadd.f32 %v2384, %v2792
        %v2794 = vpop.f32.mrf.mxu0
        %v2795 = vadd.f32 %v2386, %v2794
        %2796 = vmatmul.bf16.gmra.mxu0 %v1696
        %v2797 = vpop.f32.mrf.mxu0
        %v2798 = vadd.f32 %v2389, %v2797
        %v2799 = vpop.f32.mrf.mxu0
        %v2800 = vadd.f32 %v2391, %v2799
        %2801 = vmatmul.bf16.gmra.mxu0 %v1698
        %v2802 = vpop.f32.mrf.mxu0
        %v2803 = vadd.f32 %v2394, %v2802
        %v2804 = vpop.f32.mrf.mxu0
        %v2805 = vadd.f32 %v2396, %v2804
        %2806 = vmatmul.bf16.gmra.mxu0 %v1700
        %v2807 = vpop.f32.mrf.mxu0
        %v2808 = vadd.f32 %v2399, %v2807
        %v2809 = vpop.f32.mrf.mxu0
        %v2810 = vadd.f32 %v2401, %v2809
        %2811 = vmatmul.bf16.gmra.mxu0 %v1702
        %v2812 = vpop.f32.mrf.mxu0
        %v2813 = vadd.f32 %v2404, %v2812
        %v2814 = vpop.f32.mrf.mxu0
        %v2815 = vadd.f32 %v2406, %v2814
        %2816 = vmatmul.bf16.gmra.mxu0 %v1704
        %v2817 = vpop.f32.mrf.mxu0
        %v2818 = vadd.f32 %v2409, %v2817
        %v2819 = vpop.f32.mrf.mxu0
        %v2820 = vadd.f32 %v2411, %v2819
        %2821 = vmatmul.bf16.gmra.mxu0 %v1706
        %v2822 = vpop.f32.mrf.mxu0
        %v2823 = vadd.f32 %v2414, %v2822
        %v2824 = vpop.f32.mrf.mxu0
        %v2825 = vadd.f32 %v2416, %v2824
        %2826 = vmatmul.bf16.gmra.mxu0 %v1708
        %v2827 = vpop.f32.mrf.mxu0
        %v2828 = vadd.f32 %v2419, %v2827
        %v2829 = vpop.f32.mrf.mxu0
        %v2830 = vadd.f32 %v2421, %v2829
        %2831 = vmatmul.bf16.gmra.mxu0 %v1710
        %v2832 = vpop.f32.mrf.mxu0
        %v2833 = vadd.f32 %v2424, %v2832
        %v2834 = vpop.f32.mrf.mxu0
        %v2835 = vadd.f32 %v2426, %v2834
        %2836 = vmatmul.bf16.gmra.mxu0 %v1712
        %v2837 = vpop.f32.mrf.mxu0
        %v2838 = vadd.f32 %v2429, %v2837
        %v2839 = vpop.f32.mrf.mxu0
        %v2840 = vadd.f32 %v2431, %v2839
        %2841 = vmatmul.bf16.gmra.mxu0 %v1714
        %v2842 = vpop.f32.mrf.mxu0
        %v2843 = vadd.f32 %v2434, %v2842
        %v2844 = vpop.f32.mrf.mxu0
        %v2845 = vadd.f32 %v2436, %v2844
        %2846 = vmatmul.bf16.gmra.mxu0 %v1716
        %v2847 = vpop.f32.mrf.mxu0
        %v2848 = vadd.f32 %v2439, %v2847
        %v2849 = vpop.f32.mrf.mxu0
        %v2850 = vadd.f32 %v2441, %v2849
        %2851 = vmatmul.bf16.gmra.mxu0 %v1718
        %v2852 = vpop.f32.mrf.mxu0
        %v2853 = vadd.f32 %v2444, %v2852
        %v2854 = vpop.f32.mrf.mxu0
        %v2855 = vadd.f32 %v2446, %v2854
        %2856 = vdwg.mxu0
        %2857 = vmatpush.bf16.msra.mxu0 %v1990
        %2858 = vmatpush.bf16.msra.mxu0 %v1988
        %2859 = vmatpush.bf16.msra.mxu0 %v1986
        %2860 = vmatpush.bf16.msra.mxu0 %v1984
        %2861 = vmatpush.bf16.msra.mxu0 %v1982
        %2862 = vmatpush.bf16.msra.mxu0 %v1980
        %2863 = vmatpush.bf16.msra.mxu0 %v1978
        %2864 = vmatpush.bf16.msra.mxu0 %v1976
        %2865 = vmatmul.bf16.gmra.mxu0 %v1559
        %v2866 = vpop.f32.mrf.mxu0
        %v2867 = vadd.f32 0.0, %v2866
        %v2868 = vpop.f32.mrf.mxu0
        %v2869 = vadd.f32 0.0, %v2868
        %2870 = vmatmul.bf16.gmra.mxu0 %v1561
        %v2871 = vpop.f32.mrf.mxu0
        %v2872 = vadd.f32 0.0, %v2871
        %v2873 = vpop.f32.mrf.mxu0
        %v2874 = vadd.f32 0.0, %v2873
        %2875 = vmatmul.bf16.gmra.mxu0 %v1563
        %v2876 = vpop.f32.mrf.mxu0
        %v2877 = vadd.f32 0.0, %v2876
        %v2878 = vpop.f32.mrf.mxu0
        %v2879 = vadd.f32 0.0, %v2878
        %2880 = vmatmul.bf16.gmra.mxu0 %v1565
        %v2881 = vpop.f32.mrf.mxu0
        %v2882 = vadd.f32 0.0, %v2881
        %v2883 = vpop.f32.mrf.mxu0
        %v2884 = vadd.f32 0.0, %v2883
        %2885 = vmatmul.bf16.gmra.mxu0 %v1567
        %v2886 = vpop.f32.mrf.mxu0
        %v2887 = vadd.f32 0.0, %v2886
        %v2888 = vpop.f32.mrf.mxu0
        %v2889 = vadd.f32 0.0, %v2888
        %2890 = vmatmul.bf16.gmra.mxu0 %v1569
        %v2891 = vpop.f32.mrf.mxu0
        %v2892 = vadd.f32 0.0, %v2891
        %v2893 = vpop.f32.mrf.mxu0
        %v2894 = vadd.f32 0.0, %v2893
        %2895 = vmatmul.bf16.gmra.mxu0 %v1571
        %v2896 = vpop.f32.mrf.mxu0
        %v2897 = vadd.f32 0.0, %v2896
        %v2898 = vpop.f32.mrf.mxu0
        %v2899 = vadd.f32 0.0, %v2898
        %2900 = vmatmul.bf16.gmra.mxu0 %v1573
        %v2901 = vpop.f32.mrf.mxu0
        %v2902 = vadd.f32 0.0, %v2901
        %v2903 = vpop.f32.mrf.mxu0
        %v2904 = vadd.f32 0.0, %v2903
        %2905 = vmatmul.bf16.gmra.mxu0 %v1575
        %v2906 = vpop.f32.mrf.mxu0
        %v2907 = vadd.f32 0.0, %v2906
        %v2908 = vpop.f32.mrf.mxu0
        %v2909 = vadd.f32 0.0, %v2908
        %2910 = vmatmul.bf16.gmra.mxu0 %v1577
        %v2911 = vpop.f32.mrf.mxu0
        %v2912 = vadd.f32 0.0, %v2911
        %v2913 = vpop.f32.mrf.mxu0
        %v2914 = vadd.f32 0.0, %v2913
        %2915 = vmatmul.bf16.gmra.mxu0 %v1579
        %v2916 = vpop.f32.mrf.mxu0
        %v2917 = vadd.f32 0.0, %v2916
        %v2918 = vpop.f32.mrf.mxu0
        %v2919 = vadd.f32 0.0, %v2918
        %2920 = vmatmul.bf16.gmra.mxu0 %v1581
        %v2921 = vpop.f32.mrf.mxu0
        %v2922 = vadd.f32 0.0, %v2921
        %v2923 = vpop.f32.mrf.mxu0
        %v2924 = vadd.f32 0.0, %v2923
        %2925 = vmatmul.bf16.gmra.mxu0 %v1583
        %v2926 = vpop.f32.mrf.mxu0
        %v2927 = vadd.f32 0.0, %v2926
        %v2928 = vpop.f32.mrf.mxu0
        %v2929 = vadd.f32 0.0, %v2928
        %2930 = vmatmul.bf16.gmra.mxu0 %v1585
        %v2931 = vpop.f32.mrf.mxu0
        %v2932 = vadd.f32 0.0, %v2931
        %v2933 = vpop.f32.mrf.mxu0
        %v2934 = vadd.f32 0.0, %v2933
        %2935 = vmatmul.bf16.gmra.mxu0 %v1587
        %v2936 = vpop.f32.mrf.mxu0
        %v2937 = vadd.f32 0.0, %v2936
        %v2938 = vpop.f32.mrf.mxu0
        %v2939 = vadd.f32 0.0, %v2938
        %2940 = vmatmul.bf16.gmra.mxu0 %v1589
        %v2941 = vpop.f32.mrf.mxu0
        %v2942 = vadd.f32 0.0, %v2941
        %v2943 = vpop.f32.mrf.mxu0
        %v2944 = vadd.f32 0.0, %v2943
        %2945 = vmatmul.bf16.gmra.mxu0 %v1591
        %v2946 = vpop.f32.mrf.mxu0
        %v2947 = vadd.f32 0.0, %v2946
        %v2948 = vpop.f32.mrf.mxu0
        %v2949 = vadd.f32 0.0, %v2948
        %2950 = vmatmul.bf16.gmra.mxu0 %v1593
        %v2951 = vpop.f32.mrf.mxu0
        %v2952 = vadd.f32 0.0, %v2951
        %v2953 = vpop.f32.mrf.mxu0
        %v2954 = vadd.f32 0.0, %v2953
        %2955 = vmatmul.bf16.gmra.mxu0 %v1595
        %v2956 = vpop.f32.mrf.mxu0
        %v2957 = vadd.f32 0.0, %v2956
        %v2958 = vpop.f32.mrf.mxu0
        %v2959 = vadd.f32 0.0, %v2958
        %2960 = vmatmul.bf16.gmra.mxu0 %v1597
        %v2961 = vpop.f32.mrf.mxu0
        %v2962 = vadd.f32 0.0, %v2961
        %v2963 = vpop.f32.mrf.mxu0
        %v2964 = vadd.f32 0.0, %v2963
        %2965 = vmatmul.bf16.gmra.mxu0 %v1599
        %v2966 = vpop.f32.mrf.mxu0
        %v2967 = vadd.f32 0.0, %v2966
        %v2968 = vpop.f32.mrf.mxu0
        %v2969 = vadd.f32 0.0, %v2968
        %2970 = vmatmul.bf16.gmra.mxu0 %v1601
        %v2971 = vpop.f32.mrf.mxu0
        %v2972 = vadd.f32 0.0, %v2971
        %v2973 = vpop.f32.mrf.mxu0
        %v2974 = vadd.f32 0.0, %v2973
        %2975 = vmatmul.bf16.gmra.mxu0 %v1603
        %v2976 = vpop.f32.mrf.mxu0
        %v2977 = vadd.f32 0.0, %v2976
        %v2978 = vpop.f32.mrf.mxu0
        %v2979 = vadd.f32 0.0, %v2978
        %2980 = vmatmul.bf16.gmra.mxu0 %v1605
        %v2981 = vpop.f32.mrf.mxu0
        %v2982 = vadd.f32 0.0, %v2981
        %v2983 = vpop.f32.mrf.mxu0
        %v2984 = vadd.f32 0.0, %v2983
        %2985 = vmatmul.bf16.gmra.mxu0 %v1607
        %v2986 = vpop.f32.mrf.mxu0
        %v2987 = vadd.f32 0.0, %v2986
        %v2988 = vpop.f32.mrf.mxu0
        %v2989 = vadd.f32 0.0, %v2988
        %2990 = vmatmul.bf16.gmra.mxu0 %v1609
        %v2991 = vpop.f32.mrf.mxu0
        %v2992 = vadd.f32 0.0, %v2991
        %v2993 = vpop.f32.mrf.mxu0
        %v2994 = vadd.f32 0.0, %v2993
        %2995 = vmatmul.bf16.gmra.mxu0 %v1611
        %v2996 = vpop.f32.mrf.mxu0
        %v2997 = vadd.f32 0.0, %v2996
        %v2998 = vpop.f32.mrf.mxu0
        %v2999 = vadd.f32 0.0, %v2998
        %3000 = vmatmul.bf16.gmra.mxu0 %v1613
        %v3001 = vpop.f32.mrf.mxu0
        %v3002 = vadd.f32 0.0, %v3001
        %v3003 = vpop.f32.mrf.mxu0
        %v3004 = vadd.f32 0.0, %v3003
        %3005 = vmatmul.bf16.gmra.mxu0 %v1615
        %v3006 = vpop.f32.mrf.mxu0
        %v3007 = vadd.f32 0.0, %v3006
        %v3008 = vpop.f32.mrf.mxu0
        %v3009 = vadd.f32 0.0, %v3008
        %3010 = vmatmul.bf16.gmra.mxu0 %v1617
        %v3011 = vpop.f32.mrf.mxu0
        %v3012 = vadd.f32 0.0, %v3011
        %v3013 = vpop.f32.mrf.mxu0
        %v3014 = vadd.f32 0.0, %v3013
        %3015 = vmatmul.bf16.gmra.mxu0 %v1619
        %v3016 = vpop.f32.mrf.mxu0
        %v3017 = vadd.f32 0.0, %v3016
        %v3018 = vpop.f32.mrf.mxu0
        %v3019 = vadd.f32 0.0, %v3018
        %3020 = vmatmul.bf16.gmra.mxu0 %v1621
        %v3021 = vpop.f32.mrf.mxu0
        %v3022 = vadd.f32 0.0, %v3021
        %v3023 = vpop.f32.mrf.mxu0
        %v3024 = vadd.f32 0.0, %v3023
        %3025 = vmatmul.bf16.gmra.mxu0 %v1623
        %v3026 = vpop.f32.mrf.mxu0
        %v3027 = vadd.f32 0.0, %v3026
        %v3028 = vpop.f32.mrf.mxu0
        %v3029 = vadd.f32 0.0, %v3028
        %3030 = vmatmul.bf16.gmra.mxu0 %v1625
        %v3031 = vpop.f32.mrf.mxu0
        %v3032 = vadd.f32 0.0, %v3031
        %v3033 = vpop.f32.mrf.mxu0
        %v3034 = vadd.f32 0.0, %v3033
        %3035 = vmatmul.bf16.gmra.mxu0 %v1627
        %v3036 = vpop.f32.mrf.mxu0
        %v3037 = vadd.f32 0.0, %v3036
        %v3038 = vpop.f32.mrf.mxu0
        %v3039 = vadd.f32 0.0, %v3038
        %3040 = vmatmul.bf16.gmra.mxu0 %v1629
        %v3041 = vpop.f32.mrf.mxu0
        %v3042 = vadd.f32 0.0, %v3041
        %v3043 = vpop.f32.mrf.mxu0
        %v3044 = vadd.f32 0.0, %v3043
        %3045 = vmatmul.bf16.gmra.mxu0 %v1631
        %v3046 = vpop.f32.mrf.mxu0
        %v3047 = vadd.f32 0.0, %v3046
        %v3048 = vpop.f32.mrf.mxu0
        %v3049 = vadd.f32 0.0, %v3048
        %3050 = vmatmul.bf16.gmra.mxu0 %v1633
        %v3051 = vpop.f32.mrf.mxu0
        %v3052 = vadd.f32 0.0, %v3051
        %v3053 = vpop.f32.mrf.mxu0
        %v3054 = vadd.f32 0.0, %v3053
        %3055 = vmatmul.bf16.gmra.mxu0 %v1635
        %v3056 = vpop.f32.mrf.mxu0
        %v3057 = vadd.f32 0.0, %v3056
        %v3058 = vpop.f32.mrf.mxu0
        %v3059 = vadd.f32 0.0, %v3058
        %3060 = vmatmul.bf16.gmra.mxu0 %v1637
        %v3061 = vpop.f32.mrf.mxu0
        %v3062 = vadd.f32 0.0, %v3061
        %v3063 = vpop.f32.mrf.mxu0
        %v3064 = vadd.f32 0.0, %v3063
        %3065 = vmatmul.bf16.gmra.mxu0 %v1639
        %v3066 = vpop.f32.mrf.mxu0
        %v3067 = vadd.f32 0.0, %v3066
        %v3068 = vpop.f32.mrf.mxu0
        %v3069 = vadd.f32 0.0, %v3068
        %3070 = vmatmul.bf16.gmra.mxu0 %v1641
        %v3071 = vpop.f32.mrf.mxu0
        %v3072 = vadd.f32 0.0, %v3071
        %v3073 = vpop.f32.mrf.mxu0
        %v3074 = vadd.f32 0.0, %v3073
        %3075 = vmatmul.bf16.gmra.mxu0 %v1643
        %v3076 = vpop.f32.mrf.mxu0
        %v3077 = vadd.f32 0.0, %v3076
        %v3078 = vpop.f32.mrf.mxu0
        %v3079 = vadd.f32 0.0, %v3078
        %3080 = vmatmul.bf16.gmra.mxu0 %v1645
        %v3081 = vpop.f32.mrf.mxu0
        %v3082 = vadd.f32 0.0, %v3081
        %v3083 = vpop.f32.mrf.mxu0
        %v3084 = vadd.f32 0.0, %v3083
        %3085 = vmatmul.bf16.gmra.mxu0 %v1647
        %v3086 = vpop.f32.mrf.mxu0
        %v3087 = vadd.f32 0.0, %v3086
        %v3088 = vpop.f32.mrf.mxu0
        %v3089 = vadd.f32 0.0, %v3088
        %3090 = vmatmul.bf16.gmra.mxu0 %v1649
        %v3091 = vpop.f32.mrf.mxu0
        %v3092 = vadd.f32 0.0, %v3091
        %v3093 = vpop.f32.mrf.mxu0
        %v3094 = vadd.f32 0.0, %v3093
        %3095 = vmatmul.bf16.gmra.mxu0 %v1651
        %v3096 = vpop.f32.mrf.mxu0
        %v3097 = vadd.f32 0.0, %v3096
        %v3098 = vpop.f32.mrf.mxu0
        %v3099 = vadd.f32 0.0, %v3098
        %3100 = vmatmul.bf16.gmra.mxu0 %v1653
        %v3101 = vpop.f32.mrf.mxu0
        %v3102 = vadd.f32 0.0, %v3101
        %v3103 = vpop.f32.mrf.mxu0
        %v3104 = vadd.f32 0.0, %v3103
        %3105 = vmatmul.bf16.gmra.mxu0 %v1655
        %v3106 = vpop.f32.mrf.mxu0
        %v3107 = vadd.f32 0.0, %v3106
        %v3108 = vpop.f32.mrf.mxu0
        %v3109 = vadd.f32 0.0, %v3108
        %3110 = vmatmul.bf16.gmra.mxu0 %v1657
        %v3111 = vpop.f32.mrf.mxu0
        %v3112 = vadd.f32 0.0, %v3111
        %v3113 = vpop.f32.mrf.mxu0
        %v3114 = vadd.f32 0.0, %v3113
        %3115 = vmatmul.bf16.gmra.mxu0 %v1659
        %v3116 = vpop.f32.mrf.mxu0
        %v3117 = vadd.f32 0.0, %v3116
        %v3118 = vpop.f32.mrf.mxu0
        %v3119 = vadd.f32 0.0, %v3118
        %3120 = vmatmul.bf16.gmra.mxu0 %v1661
        %v3121 = vpop.f32.mrf.mxu0
        %v3122 = vadd.f32 0.0, %v3121
        %v3123 = vpop.f32.mrf.mxu0
        %v3124 = vadd.f32 0.0, %v3123
        %3125 = vmatmul.bf16.gmra.mxu0 %v1663
        %v3126 = vpop.f32.mrf.mxu0
        %v3127 = vadd.f32 0.0, %v3126
        %v3128 = vpop.f32.mrf.mxu0
        %v3129 = vadd.f32 0.0, %v3128
        %3130 = vmatmul.bf16.gmra.mxu0 %v1665
        %v3131 = vpop.f32.mrf.mxu0
        %v3132 = vadd.f32 0.0, %v3131
        %v3133 = vpop.f32.mrf.mxu0
        %v3134 = vadd.f32 0.0, %v3133
        %3135 = vmatmul.bf16.gmra.mxu0 %v1667
        %v3136 = vpop.f32.mrf.mxu0
        %v3137 = vadd.f32 0.0, %v3136
        %v3138 = vpop.f32.mrf.mxu0
        %v3139 = vadd.f32 0.0, %v3138
        %3140 = vmatmul.bf16.gmra.mxu0 %v1669
        %v3141 = vpop.f32.mrf.mxu0
        %v3142 = vadd.f32 0.0, %v3141
        %v3143 = vpop.f32.mrf.mxu0
        %v3144 = vadd.f32 0.0, %v3143
        %3145 = vmatmul.bf16.gmra.mxu0 %v1671
        %v3146 = vpop.f32.mrf.mxu0
        %v3147 = vadd.f32 0.0, %v3146
        %v3148 = vpop.f32.mrf.mxu0
        %v3149 = vadd.f32 0.0, %v3148
        %3150 = vmatmul.bf16.gmra.mxu0 %v1673
        %v3151 = vpop.f32.mrf.mxu0
        %v3152 = vadd.f32 0.0, %v3151
        %v3153 = vpop.f32.mrf.mxu0
        %v3154 = vadd.f32 0.0, %v3153
        %3155 = vmatmul.bf16.gmra.mxu0 %v1675
        %v3156 = vpop.f32.mrf.mxu0
        %v3157 = vadd.f32 0.0, %v3156
        %v3158 = vpop.f32.mrf.mxu0
        %v3159 = vadd.f32 0.0, %v3158
        %3160 = vmatmul.bf16.gmra.mxu0 %v1677
        %v3161 = vpop.f32.mrf.mxu0
        %v3162 = vadd.f32 0.0, %v3161
        %v3163 = vpop.f32.mrf.mxu0
        %v3164 = vadd.f32 0.0, %v3163
        %3165 = vmatmul.bf16.gmra.mxu0 %v1679
        %v3166 = vpop.f32.mrf.mxu0
        %v3167 = vadd.f32 0.0, %v3166
        %v3168 = vpop.f32.mrf.mxu0
        %v3169 = vadd.f32 0.0, %v3168
        %3170 = vmatmul.bf16.gmra.mxu0 %v1681
        %v3171 = vpop.f32.mrf.mxu0
        %v3172 = vadd.f32 0.0, %v3171
        %v3173 = vpop.f32.mrf.mxu0
        %v3174 = vadd.f32 0.0, %v3173
        %3175 = vmatmul.bf16.gmra.mxu0 %v1683
        %v3176 = vpop.f32.mrf.mxu0
        %v3177 = vadd.f32 0.0, %v3176
        %v3178 = vpop.f32.mrf.mxu0
        %v3179 = vadd.f32 0.0, %v3178
        %3180 = vmatmul.bf16.gmra.mxu0 %v1685
        %v3181 = vpop.f32.mrf.mxu0
        %v3182 = vadd.f32 0.0, %v3181
        %v3183 = vpop.f32.mrf.mxu0
        %v3184 = vadd.f32 0.0, %v3183
        %3185 = vmatmul.bf16.gmra.mxu0 %v1687
        %v3186 = vpop.f32.mrf.mxu0
        %v3187 = vadd.f32 0.0, %v3186
        %v3188 = vpop.f32.mrf.mxu0
        %v3189 = vadd.f32 0.0, %v3188
        %3190 = vmatmul.bf16.gmra.mxu0 %v1689
        %v3191 = vpop.f32.mrf.mxu0
        %v3192 = vadd.f32 0.0, %v3191
        %v3193 = vpop.f32.mrf.mxu0
        %v3194 = vadd.f32 0.0, %v3193
        %3195 = vmatmul.bf16.gmra.mxu0 %v1691
        %v3196 = vpop.f32.mrf.mxu0
        %v3197 = vadd.f32 0.0, %v3196
        %v3198 = vpop.f32.mrf.mxu0
        %v3199 = vadd.f32 0.0, %v3198
        %3200 = vmatmul.bf16.gmra.mxu0 %v1693
        %v3201 = vpop.f32.mrf.mxu0
        %v3202 = vadd.f32 0.0, %v3201
        %v3203 = vpop.f32.mrf.mxu0
        %v3204 = vadd.f32 0.0, %v3203
        %3205 = vmatmul.bf16.gmra.mxu0 %v1695
        %v3206 = vpop.f32.mrf.mxu0
        %v3207 = vadd.f32 0.0, %v3206
        %v3208 = vpop.f32.mrf.mxu0
        %v3209 = vadd.f32 0.0, %v3208
        %3210 = vmatmul.bf16.gmra.mxu0 %v1697
        %v3211 = vpop.f32.mrf.mxu0
        %v3212 = vadd.f32 0.0, %v3211
        %v3213 = vpop.f32.mrf.mxu0
        %v3214 = vadd.f32 0.0, %v3213
        %3215 = vmatmul.bf16.gmra.mxu0 %v1699
        %v3216 = vpop.f32.mrf.mxu0
        %v3217 = vadd.f32 0.0, %v3216
        %v3218 = vpop.f32.mrf.mxu0
        %v3219 = vadd.f32 0.0, %v3218
        %3220 = vmatmul.bf16.gmra.mxu0 %v1701
        %v3221 = vpop.f32.mrf.mxu0
        %v3222 = vadd.f32 0.0, %v3221
        %v3223 = vpop.f32.mrf.mxu0
        %v3224 = vadd.f32 0.0, %v3223
        %3225 = vmatmul.bf16.gmra.mxu0 %v1703
        %v3226 = vpop.f32.mrf.mxu0
        %v3227 = vadd.f32 0.0, %v3226
        %v3228 = vpop.f32.mrf.mxu0
        %v3229 = vadd.f32 0.0, %v3228
        %3230 = vmatmul.bf16.gmra.mxu0 %v1705
        %v3231 = vpop.f32.mrf.mxu0
        %v3232 = vadd.f32 0.0, %v3231
        %v3233 = vpop.f32.mrf.mxu0
        %v3234 = vadd.f32 0.0, %v3233
        %3235 = vmatmul.bf16.gmra.mxu0 %v1707
        %v3236 = vpop.f32.mrf.mxu0
        %v3237 = vadd.f32 0.0, %v3236
        %v3238 = vpop.f32.mrf.mxu0
        %v3239 = vadd.f32 0.0, %v3238
        %3240 = vmatmul.bf16.gmra.mxu0 %v1709
        %v3241 = vpop.f32.mrf.mxu0
        %v3242 = vadd.f32 0.0, %v3241
        %v3243 = vpop.f32.mrf.mxu0
        %v3244 = vadd.f32 0.0, %v3243
        %3245 = vmatmul.bf16.gmra.mxu0 %v1711
        %v3246 = vpop.f32.mrf.mxu0
        %v3247 = vadd.f32 0.0, %v3246
        %v3248 = vpop.f32.mrf.mxu0
        %v3249 = vadd.f32 0.0, %v3248
        %3250 = vmatmul.bf16.gmra.mxu0 %v1713
        %v3251 = vpop.f32.mrf.mxu0
        %v3252 = vadd.f32 0.0, %v3251
        %v3253 = vpop.f32.mrf.mxu0
        %v3254 = vadd.f32 0.0, %v3253
        %3255 = vmatmul.bf16.gmra.mxu0 %v1715
        %v3256 = vpop.f32.mrf.mxu0
        %v3257 = vadd.f32 0.0, %v3256
        %v3258 = vpop.f32.mrf.mxu0
        %v3259 = vadd.f32 0.0, %v3258
        %3260 = vmatmul.bf16.gmra.mxu0 %v1717
        %v3261 = vpop.f32.mrf.mxu0
        %v3262 = vadd.f32 0.0, %v3261
        %v3263 = vpop.f32.mrf.mxu0
        %v3264 = vadd.f32 0.0, %v3263
        %3265 = vdwg.mxu0
        %3266 = vmatpush.bf16.msra.mxu0 %v2006
        %3267 = vmatpush.bf16.msra.mxu0 %v2004
        %3268 = vmatpush.bf16.msra.mxu0 %v2002
        %3269 = vmatpush.bf16.msra.mxu0 %v2000
        %3270 = vmatpush.bf16.msra.mxu0 %v1998
        %3271 = vmatpush.bf16.msra.mxu0 %v1996
        %3272 = vmatpush.bf16.msra.mxu0 %v1994
        %3273 = vmatpush.bf16.msra.mxu0 %v1992
        %3274 = vmatmul.bf16.gmra.mxu0 %v1560
        %v3275 = vpop.f32.mrf.mxu0
        %v3276 = vadd.f32 %v2867, %v3275
        %v3277 = vpop.f32.mrf.mxu0
        %v3278 = vadd.f32 %v2869, %v3277
        %3279 = vmatmul.bf16.gmra.mxu0 %v1562
        %v3280 = vpop.f32.mrf.mxu0
        %v3281 = vadd.f32 %v2872, %v3280
        %v3282 = vpop.f32.mrf.mxu0
        %v3283 = vadd.f32 %v2874, %v3282
        %3284 = vmatmul.bf16.gmra.mxu0 %v1564
        %v3285 = vpop.f32.mrf.mxu0
        %v3286 = vadd.f32 %v2877, %v3285
        %v3287 = vpop.f32.mrf.mxu0
        %v3288 = vadd.f32 %v2879, %v3287
        %3289 = vmatmul.bf16.gmra.mxu0 %v1566
        %v3290 = vpop.f32.mrf.mxu0
        %v3291 = vadd.f32 %v2882, %v3290
        %v3292 = vpop.f32.mrf.mxu0
        %v3293 = vadd.f32 %v2884, %v3292
        %3294 = vmatmul.bf16.gmra.mxu0 %v1568
        %v3295 = vpop.f32.mrf.mxu0
        %v3296 = vadd.f32 %v2887, %v3295
        %v3297 = vpop.f32.mrf.mxu0
        %v3298 = vadd.f32 %v2889, %v3297
        %3299 = vmatmul.bf16.gmra.mxu0 %v1570
        %v3300 = vpop.f32.mrf.mxu0
        %v3301 = vadd.f32 %v2892, %v3300
        %v3302 = vpop.f32.mrf.mxu0
        %v3303 = vadd.f32 %v2894, %v3302
        %3304 = vmatmul.bf16.gmra.mxu0 %v1572
        %v3305 = vpop.f32.mrf.mxu0
        %v3306 = vadd.f32 %v2897, %v3305
        %v3307 = vpop.f32.mrf.mxu0
        %v3308 = vadd.f32 %v2899, %v3307
        %3309 = vmatmul.bf16.gmra.mxu0 %v1574
        %v3310 = vpop.f32.mrf.mxu0
        %v3311 = vadd.f32 %v2902, %v3310
        %v3312 = vpop.f32.mrf.mxu0
        %v3313 = vadd.f32 %v2904, %v3312
        %3314 = vmatmul.bf16.gmra.mxu0 %v1576
        %v3315 = vpop.f32.mrf.mxu0
        %v3316 = vadd.f32 %v2907, %v3315
        %v3317 = vpop.f32.mrf.mxu0
        %v3318 = vadd.f32 %v2909, %v3317
        %3319 = vmatmul.bf16.gmra.mxu0 %v1578
        %v3320 = vpop.f32.mrf.mxu0
        %v3321 = vadd.f32 %v2912, %v3320
        %v3322 = vpop.f32.mrf.mxu0
        %v3323 = vadd.f32 %v2914, %v3322
        %3324 = vmatmul.bf16.gmra.mxu0 %v1580
        %v3325 = vpop.f32.mrf.mxu0
        %v3326 = vadd.f32 %v2917, %v3325
        %v3327 = vpop.f32.mrf.mxu0
        %v3328 = vadd.f32 %v2919, %v3327
        %3329 = vmatmul.bf16.gmra.mxu0 %v1582
        %v3330 = vpop.f32.mrf.mxu0
        %v3331 = vadd.f32 %v2922, %v3330
        %v3332 = vpop.f32.mrf.mxu0
        %v3333 = vadd.f32 %v2924, %v3332
        %3334 = vmatmul.bf16.gmra.mxu0 %v1584
        %v3335 = vpop.f32.mrf.mxu0
        %v3336 = vadd.f32 %v2927, %v3335
        %v3337 = vpop.f32.mrf.mxu0
        %v3338 = vadd.f32 %v2929, %v3337
        %3339 = vmatmul.bf16.gmra.mxu0 %v1586
        %v3340 = vpop.f32.mrf.mxu0
        %v3341 = vadd.f32 %v2932, %v3340
        %v3342 = vpop.f32.mrf.mxu0
        %v3343 = vadd.f32 %v2934, %v3342
        %3344 = vmatmul.bf16.gmra.mxu0 %v1588
        %v3345 = vpop.f32.mrf.mxu0
        %v3346 = vadd.f32 %v2937, %v3345
        %v3347 = vpop.f32.mrf.mxu0
        %v3348 = vadd.f32 %v2939, %v3347
        %3349 = vmatmul.bf16.gmra.mxu0 %v1590
        %v3350 = vpop.f32.mrf.mxu0
        %v3351 = vadd.f32 %v2942, %v3350
        %v3352 = vpop.f32.mrf.mxu0
        %v3353 = vadd.f32 %v2944, %v3352
        %3354 = vmatmul.bf16.gmra.mxu0 %v1592
        %v3355 = vpop.f32.mrf.mxu0
        %v3356 = vadd.f32 %v2947, %v3355
        %v3357 = vpop.f32.mrf.mxu0
        %v3358 = vadd.f32 %v2949, %v3357
        %3359 = vmatmul.bf16.gmra.mxu0 %v1594
        %v3360 = vpop.f32.mrf.mxu0
        %v3361 = vadd.f32 %v2952, %v3360
        %v3362 = vpop.f32.mrf.mxu0
        %v3363 = vadd.f32 %v2954, %v3362
        %3364 = vmatmul.bf16.gmra.mxu0 %v1596
        %v3365 = vpop.f32.mrf.mxu0
        %v3366 = vadd.f32 %v2957, %v3365
        %v3367 = vpop.f32.mrf.mxu0
        %v3368 = vadd.f32 %v2959, %v3367
        %3369 = vmatmul.bf16.gmra.mxu0 %v1598
        %v3370 = vpop.f32.mrf.mxu0
        %v3371 = vadd.f32 %v2962, %v3370
        %v3372 = vpop.f32.mrf.mxu0
        %v3373 = vadd.f32 %v2964, %v3372
        %3374 = vmatmul.bf16.gmra.mxu0 %v1600
        %v3375 = vpop.f32.mrf.mxu0
        %v3376 = vadd.f32 %v2967, %v3375
        %v3377 = vpop.f32.mrf.mxu0
        %v3378 = vadd.f32 %v2969, %v3377
        %3379 = vmatmul.bf16.gmra.mxu0 %v1602
        %v3380 = vpop.f32.mrf.mxu0
        %v3381 = vadd.f32 %v2972, %v3380
        %v3382 = vpop.f32.mrf.mxu0
        %v3383 = vadd.f32 %v2974, %v3382
        %3384 = vmatmul.bf16.gmra.mxu0 %v1604
        %v3385 = vpop.f32.mrf.mxu0
        %v3386 = vadd.f32 %v2977, %v3385
        %v3387 = vpop.f32.mrf.mxu0
        %v3388 = vadd.f32 %v2979, %v3387
        %3389 = vmatmul.bf16.gmra.mxu0 %v1606
        %v3390 = vpop.f32.mrf.mxu0
        %v3391 = vadd.f32 %v2982, %v3390
        %v3392 = vpop.f32.mrf.mxu0
        %v3393 = vadd.f32 %v2984, %v3392
        %3394 = vmatmul.bf16.gmra.mxu0 %v1608
        %v3395 = vpop.f32.mrf.mxu0
        %v3396 = vadd.f32 %v2987, %v3395
        %v3397 = vpop.f32.mrf.mxu0
        %v3398 = vadd.f32 %v2989, %v3397
        %3399 = vmatmul.bf16.gmra.mxu0 %v1610
        %v3400 = vpop.f32.mrf.mxu0
        %v3401 = vadd.f32 %v2992, %v3400
        %v3402 = vpop.f32.mrf.mxu0
        %v3403 = vadd.f32 %v2994, %v3402
        %3404 = vmatmul.bf16.gmra.mxu0 %v1612
        %v3405 = vpop.f32.mrf.mxu0
        %v3406 = vadd.f32 %v2997, %v3405
        %v3407 = vpop.f32.mrf.mxu0
        %v3408 = vadd.f32 %v2999, %v3407
        %3409 = vmatmul.bf16.gmra.mxu0 %v1614
        %v3410 = vpop.f32.mrf.mxu0
        %v3411 = vadd.f32 %v3002, %v3410
        %v3412 = vpop.f32.mrf.mxu0
        %v3413 = vadd.f32 %v3004, %v3412
        %3414 = vmatmul.bf16.gmra.mxu0 %v1616
        %v3415 = vpop.f32.mrf.mxu0
        %v3416 = vadd.f32 %v3007, %v3415
        %v3417 = vpop.f32.mrf.mxu0
        %v3418 = vadd.f32 %v3009, %v3417
        %3419 = vmatmul.bf16.gmra.mxu0 %v1618
        %v3420 = vpop.f32.mrf.mxu0
        %v3421 = vadd.f32 %v3012, %v3420
        %v3422 = vpop.f32.mrf.mxu0
        %v3423 = vadd.f32 %v3014, %v3422
        %3424 = vmatmul.bf16.gmra.mxu0 %v1620
        %v3425 = vpop.f32.mrf.mxu0
        %v3426 = vadd.f32 %v3017, %v3425
        %v3427 = vpop.f32.mrf.mxu0
        %v3428 = vadd.f32 %v3019, %v3427
        %3429 = vmatmul.bf16.gmra.mxu0 %v1622
        %v3430 = vpop.f32.mrf.mxu0
        %v3431 = vadd.f32 %v3022, %v3430
        %v3432 = vpop.f32.mrf.mxu0
        %v3433 = vadd.f32 %v3024, %v3432
        %3434 = vmatmul.bf16.gmra.mxu0 %v1624
        %v3435 = vpop.f32.mrf.mxu0
        %v3436 = vadd.f32 %v3027, %v3435
        %v3437 = vpop.f32.mrf.mxu0
        %v3438 = vadd.f32 %v3029, %v3437
        %3439 = vmatmul.bf16.gmra.mxu0 %v1626
        %v3440 = vpop.f32.mrf.mxu0
        %v3441 = vadd.f32 %v3032, %v3440
        %v3442 = vpop.f32.mrf.mxu0
        %v3443 = vadd.f32 %v3034, %v3442
        %3444 = vmatmul.bf16.gmra.mxu0 %v1628
        %v3445 = vpop.f32.mrf.mxu0
        %v3446 = vadd.f32 %v3037, %v3445
        %v3447 = vpop.f32.mrf.mxu0
        %v3448 = vadd.f32 %v3039, %v3447
        %3449 = vmatmul.bf16.gmra.mxu0 %v1630
        %v3450 = vpop.f32.mrf.mxu0
        %v3451 = vadd.f32 %v3042, %v3450
        %v3452 = vpop.f32.mrf.mxu0
        %v3453 = vadd.f32 %v3044, %v3452
        %3454 = vmatmul.bf16.gmra.mxu0 %v1632
        %v3455 = vpop.f32.mrf.mxu0
        %v3456 = vadd.f32 %v3047, %v3455
        %v3457 = vpop.f32.mrf.mxu0
        %v3458 = vadd.f32 %v3049, %v3457
        %3459 = vmatmul.bf16.gmra.mxu0 %v1634
        %v3460 = vpop.f32.mrf.mxu0
        %v3461 = vadd.f32 %v3052, %v3460
        %v3462 = vpop.f32.mrf.mxu0
        %v3463 = vadd.f32 %v3054, %v3462
        %3464 = vmatmul.bf16.gmra.mxu0 %v1636
        %v3465 = vpop.f32.mrf.mxu0
        %v3466 = vadd.f32 %v3057, %v3465
        %v3467 = vpop.f32.mrf.mxu0
        %v3468 = vadd.f32 %v3059, %v3467
        %3469 = vmatmul.bf16.gmra.mxu0 %v1638
        %v3470 = vpop.f32.mrf.mxu0
        %v3471 = vadd.f32 %v3062, %v3470
        %v3472 = vpop.f32.mrf.mxu0
        %v3473 = vadd.f32 %v3064, %v3472
        %3474 = vmatmul.bf16.gmra.mxu0 %v1640
        %v3475 = vpop.f32.mrf.mxu0
        %v3476 = vadd.f32 %v3067, %v3475
        %v3477 = vpop.f32.mrf.mxu0
        %v3478 = vadd.f32 %v3069, %v3477
        %3479 = vmatmul.bf16.gmra.mxu0 %v1642
        %v3480 = vpop.f32.mrf.mxu0
        %v3481 = vadd.f32 %v3072, %v3480
        %v3482 = vpop.f32.mrf.mxu0
        %v3483 = vadd.f32 %v3074, %v3482
        %3484 = vmatmul.bf16.gmra.mxu0 %v1644
        %v3485 = vpop.f32.mrf.mxu0
        %v3486 = vadd.f32 %v3077, %v3485
        %v3487 = vpop.f32.mrf.mxu0
        %v3488 = vadd.f32 %v3079, %v3487
        %3489 = vmatmul.bf16.gmra.mxu0 %v1646
        %v3490 = vpop.f32.mrf.mxu0
        %v3491 = vadd.f32 %v3082, %v3490
        %v3492 = vpop.f32.mrf.mxu0
        %v3493 = vadd.f32 %v3084, %v3492
        %3494 = vmatmul.bf16.gmra.mxu0 %v1648
        %v3495 = vpop.f32.mrf.mxu0
        %v3496 = vadd.f32 %v3087, %v3495
        %v3497 = vpop.f32.mrf.mxu0
        %v3498 = vadd.f32 %v3089, %v3497
        %3499 = vmatmul.bf16.gmra.mxu0 %v1650
        %v3500 = vpop.f32.mrf.mxu0
        %v3501 = vadd.f32 %v3092, %v3500
        %v3502 = vpop.f32.mrf.mxu0
        %v3503 = vadd.f32 %v3094, %v3502
        %3504 = vmatmul.bf16.gmra.mxu0 %v1652
        %v3505 = vpop.f32.mrf.mxu0
        %v3506 = vadd.f32 %v3097, %v3505
        %v3507 = vpop.f32.mrf.mxu0
        %v3508 = vadd.f32 %v3099, %v3507
        %3509 = vmatmul.bf16.gmra.mxu0 %v1654
        %v3510 = vpop.f32.mrf.mxu0
        %v3511 = vadd.f32 %v3102, %v3510
        %v3512 = vpop.f32.mrf.mxu0
        %v3513 = vadd.f32 %v3104, %v3512
        %3514 = vmatmul.bf16.gmra.mxu0 %v1656
        %v3515 = vpop.f32.mrf.mxu0
        %v3516 = vadd.f32 %v3107, %v3515
        %v3517 = vpop.f32.mrf.mxu0
        %v3518 = vadd.f32 %v3109, %v3517
        %3519 = vmatmul.bf16.gmra.mxu0 %v1658
        %v3520 = vpop.f32.mrf.mxu0
        %v3521 = vadd.f32 %v3112, %v3520
        %v3522 = vpop.f32.mrf.mxu0
        %v3523 = vadd.f32 %v3114, %v3522
        %3524 = vmatmul.bf16.gmra.mxu0 %v1660
        %v3525 = vpop.f32.mrf.mxu0
        %v3526 = vadd.f32 %v3117, %v3525
        %v3527 = vpop.f32.mrf.mxu0
        %v3528 = vadd.f32 %v3119, %v3527
        %3529 = vmatmul.bf16.gmra.mxu0 %v1662
        %v3530 = vpop.f32.mrf.mxu0
        %v3531 = vadd.f32 %v3122, %v3530
        %v3532 = vpop.f32.mrf.mxu0
        %v3533 = vadd.f32 %v3124, %v3532
        %3534 = vmatmul.bf16.gmra.mxu0 %v1664
        %v3535 = vpop.f32.mrf.mxu0
        %v3536 = vadd.f32 %v3127, %v3535
        %v3537 = vpop.f32.mrf.mxu0
        %v3538 = vadd.f32 %v3129, %v3537
        %3539 = vmatmul.bf16.gmra.mxu0 %v1666
        %v3540 = vpop.f32.mrf.mxu0
        %v3541 = vadd.f32 %v3132, %v3540
        %v3542 = vpop.f32.mrf.mxu0
        %v3543 = vadd.f32 %v3134, %v3542
        %3544 = vmatmul.bf16.gmra.mxu0 %v1668
        %v3545 = vpop.f32.mrf.mxu0
        %v3546 = vadd.f32 %v3137, %v3545
        %v3547 = vpop.f32.mrf.mxu0
        %v3548 = vadd.f32 %v3139, %v3547
        %3549 = vmatmul.bf16.gmra.mxu0 %v1670
        %v3550 = vpop.f32.mrf.mxu0
        %v3551 = vadd.f32 %v3142, %v3550
        %v3552 = vpop.f32.mrf.mxu0
        %v3553 = vadd.f32 %v3144, %v3552
        %3554 = vmatmul.bf16.gmra.mxu0 %v1672
        %v3555 = vpop.f32.mrf.mxu0
        %v3556 = vadd.f32 %v3147, %v3555
        %v3557 = vpop.f32.mrf.mxu0
        %v3558 = vadd.f32 %v3149, %v3557
        %3559 = vmatmul.bf16.gmra.mxu0 %v1674
        %v3560 = vpop.f32.mrf.mxu0
        %v3561 = vadd.f32 %v3152, %v3560
        %v3562 = vpop.f32.mrf.mxu0
        %v3563 = vadd.f32 %v3154, %v3562
        %3564 = vmatmul.bf16.gmra.mxu0 %v1676
        %v3565 = vpop.f32.mrf.mxu0
        %v3566 = vadd.f32 %v3157, %v3565
        %v3567 = vpop.f32.mrf.mxu0
        %v3568 = vadd.f32 %v3159, %v3567
        %3569 = vmatmul.bf16.gmra.mxu0 %v1678
        %v3570 = vpop.f32.mrf.mxu0
        %v3571 = vadd.f32 %v3162, %v3570
        %v3572 = vpop.f32.mrf.mxu0
        %v3573 = vadd.f32 %v3164, %v3572
        %3574 = vmatmul.bf16.gmra.mxu0 %v1680
        %v3575 = vpop.f32.mrf.mxu0
        %v3576 = vadd.f32 %v3167, %v3575
        %v3577 = vpop.f32.mrf.mxu0
        %v3578 = vadd.f32 %v3169, %v3577
        %3579 = vmatmul.bf16.gmra.mxu0 %v1682
        %v3580 = vpop.f32.mrf.mxu0
        %v3581 = vadd.f32 %v3172, %v3580
        %v3582 = vpop.f32.mrf.mxu0
        %v3583 = vadd.f32 %v3174, %v3582
        %3584 = vmatmul.bf16.gmra.mxu0 %v1684
        %v3585 = vpop.f32.mrf.mxu0
        %v3586 = vadd.f32 %v3177, %v3585
        %v3587 = vpop.f32.mrf.mxu0
        %v3588 = vadd.f32 %v3179, %v3587
        %3589 = vmatmul.bf16.gmra.mxu0 %v1686
        %v3590 = vpop.f32.mrf.mxu0
        %v3591 = vadd.f32 %v3182, %v3590
        %v3592 = vpop.f32.mrf.mxu0
        %v3593 = vadd.f32 %v3184, %v3592
        %3594 = vmatmul.bf16.gmra.mxu0 %v1688
        %v3595 = vpop.f32.mrf.mxu0
        %v3596 = vadd.f32 %v3187, %v3595
        %v3597 = vpop.f32.mrf.mxu0
        %v3598 = vadd.f32 %v3189, %v3597
        %3599 = vmatmul.bf16.gmra.mxu0 %v1690
        %v3600 = vpop.f32.mrf.mxu0
        %v3601 = vadd.f32 %v3192, %v3600
        %v3602 = vpop.f32.mrf.mxu0
        %v3603 = vadd.f32 %v3194, %v3602
        %3604 = vmatmul.bf16.gmra.mxu0 %v1692
        %v3605 = vpop.f32.mrf.mxu0
        %v3606 = vadd.f32 %v3197, %v3605
        %v3607 = vpop.f32.mrf.mxu0
        %v3608 = vadd.f32 %v3199, %v3607
        %3609 = vmatmul.bf16.gmra.mxu0 %v1694
        %v3610 = vpop.f32.mrf.mxu0
        %v3611 = vadd.f32 %v3202, %v3610
        %v3612 = vpop.f32.mrf.mxu0
        %v3613 = vadd.f32 %v3204, %v3612
        %3614 = vmatmul.bf16.gmra.mxu0 %v1696
        %v3615 = vpop.f32.mrf.mxu0
        %v3616 = vadd.f32 %v3207, %v3615
        %v3617 = vpop.f32.mrf.mxu0
        %v3618 = vadd.f32 %v3209, %v3617
        %3619 = vmatmul.bf16.gmra.mxu0 %v1698
        %v3620 = vpop.f32.mrf.mxu0
        %v3621 = vadd.f32 %v3212, %v3620
        %v3622 = vpop.f32.mrf.mxu0
        %v3623 = vadd.f32 %v3214, %v3622
        %3624 = vmatmul.bf16.gmra.mxu0 %v1700
        %v3625 = vpop.f32.mrf.mxu0
        %v3626 = vadd.f32 %v3217, %v3625
        %v3627 = vpop.f32.mrf.mxu0
        %v3628 = vadd.f32 %v3219, %v3627
        %3629 = vmatmul.bf16.gmra.mxu0 %v1702
        %v3630 = vpop.f32.mrf.mxu0
        %v3631 = vadd.f32 %v3222, %v3630
        %v3632 = vpop.f32.mrf.mxu0
        %v3633 = vadd.f32 %v3224, %v3632
        %3634 = vmatmul.bf16.gmra.mxu0 %v1704
        %v3635 = vpop.f32.mrf.mxu0
        %v3636 = vadd.f32 %v3227, %v3635
        %v3637 = vpop.f32.mrf.mxu0
        %v3638 = vadd.f32 %v3229, %v3637
        %3639 = vmatmul.bf16.gmra.mxu0 %v1706
        %v3640 = vpop.f32.mrf.mxu0
        %v3641 = vadd.f32 %v3232, %v3640
        %v3642 = vpop.f32.mrf.mxu0
        %v3643 = vadd.f32 %v3234, %v3642
        %3644 = vmatmul.bf16.gmra.mxu0 %v1708
        %v3645 = vpop.f32.mrf.mxu0
        %v3646 = vadd.f32 %v3237, %v3645
        %v3647 = vpop.f32.mrf.mxu0
        %v3648 = vadd.f32 %v3239, %v3647
        %3649 = vmatmul.bf16.gmra.mxu0 %v1710
        %v3650 = vpop.f32.mrf.mxu0
        %v3651 = vadd.f32 %v3242, %v3650
        %v3652 = vpop.f32.mrf.mxu0
        %v3653 = vadd.f32 %v3244, %v3652
        %3654 = vmatmul.bf16.gmra.mxu0 %v1712
        %v3655 = vpop.f32.mrf.mxu0
        %v3656 = vadd.f32 %v3247, %v3655
        %v3657 = vpop.f32.mrf.mxu0
        %v3658 = vadd.f32 %v3249, %v3657
        %3659 = vmatmul.bf16.gmra.mxu0 %v1714
        %v3660 = vpop.f32.mrf.mxu0
        %v3661 = vadd.f32 %v3252, %v3660
        %v3662 = vpop.f32.mrf.mxu0
        %v3663 = vadd.f32 %v3254, %v3662
        %3664 = vmatmul.bf16.gmra.mxu0 %v1716
        %v3665 = vpop.f32.mrf.mxu0
        %v3666 = vadd.f32 %v3257, %v3665
        %v3667 = vpop.f32.mrf.mxu0
        %v3668 = vadd.f32 %v3259, %v3667
        %3669 = vmatmul.bf16.gmra.mxu0 %v1718
        %v3670 = vpop.f32.mrf.mxu0
        %v3671 = vadd.f32 %v3262, %v3670
        %v3672 = vpop.f32.mrf.mxu0
        %v3673 = vadd.f32 %v3264, %v3672
        %3674 = vdwg.mxu0
        %v3675 = vld [vmem:[%s884] sm:$0xff]
        %v3676 = vld [vmem:[%s884 + $0x8] sm:$0xff]
        %v3677 = vld [vmem:[%s884 + $0x10] sm:$0xff]
        %v3678 = vld [vmem:[%s884 + $0x18] sm:$0xff]
        %v3679 = vld [vmem:[%s884 + $0x20] sm:$0xff]
        %v3680 = vld [vmem:[%s884 + $0x28] sm:$0xff]
        %v3681 = vld [vmem:[%s884 + $0x30] sm:$0xff]
        %v3682 = vld [vmem:[%s884 + $0x38] sm:$0xff]
        %v3683 = vld [vmem:[%s884 + $0x40] sm:$0xff]
        %v3684 = vld [vmem:[%s884 + $0x48] sm:$0xff]
        %v3685 = vld [vmem:[%s884 + $0x50] sm:$0xff]
        %v3686 = vld [vmem:[%s884 + $0x58] sm:$0xff]
        %v3687 = vld [vmem:[%s884 + $0x60] sm:$0xff]
        %v3688 = vld [vmem:[%s884 + $0x68] sm:$0xff]
        %v3689 = vld [vmem:[%s884 + $0x70] sm:$0xff]
        %v3690 = vld [vmem:[%s884 + $0x78] sm:$0xff]
        %v3691 = vld [vmem:[%s884 + $0x80] sm:$0xff]
        %v3692 = vld [vmem:[%s884 + $0x88] sm:$0xff]
        %v3693 = vld [vmem:[%s884 + $0x90] sm:$0xff]
        %v3694 = vld [vmem:[%s884 + $0x98] sm:$0xff]
        %v3695 = vld [vmem:[%s884 + $0xa0] sm:$0xff]
        %v3696 = vld [vmem:[%s884 + $0xa8] sm:$0xff]
        %v3697 = vld [vmem:[%s884 + $0xb0] sm:$0xff]
        %v3698 = vld [vmem:[%s884 + $0xb8] sm:$0xff]
        %v3699 = vld [vmem:[%s884 + $0xc0] sm:$0xff]
        %v3700 = vld [vmem:[%s884 + $0xc8] sm:$0xff]
        %v3701 = vld [vmem:[%s884 + $0xd0] sm:$0xff]
        %v3702 = vld [vmem:[%s884 + $0xd8] sm:$0xff]
        %v3703 = vld [vmem:[%s884 + $0xe0] sm:$0xff]
        %v3704 = vld [vmem:[%s884 + $0xe8] sm:$0xff]
        %v3705 = vld [vmem:[%s884 + $0xf0] sm:$0xff]
        %v3706 = vld [vmem:[%s884 + $0xf8] sm:$0xff]
        %v3707 = vld [vmem:[%s884 + $0x100] sm:$0xff]
        %v3708 = vld [vmem:[%s884 + $0x108] sm:$0xff]
        %v3709 = vld [vmem:[%s884 + $0x110] sm:$0xff]
        %v3710 = vld [vmem:[%s884 + $0x118] sm:$0xff]
        %v3711 = vld [vmem:[%s884 + $0x120] sm:$0xff]
        %v3712 = vld [vmem:[%s884 + $0x128] sm:$0xff]
        %v3713 = vld [vmem:[%s884 + $0x130] sm:$0xff]
        %v3714 = vld [vmem:[%s884 + $0x138] sm:$0xff]
        %v3715 = vld [vmem:[%s884 + $0x140] sm:$0xff]
        %v3716 = vld [vmem:[%s884 + $0x148] sm:$0xff]
        %v3717 = vld [vmem:[%s884 + $0x150] sm:$0xff]
        %v3718 = vld [vmem:[%s884 + $0x158] sm:$0xff]
        %v3719 = vld [vmem:[%s884 + $0x160] sm:$0xff]
        %v3720 = vld [vmem:[%s884 + $0x168] sm:$0xff]
        %v3721 = vld [vmem:[%s884 + $0x170] sm:$0xff]
        %v3722 = vld [vmem:[%s884 + $0x178] sm:$0xff]
        %v3723 = vld [vmem:[%s884 + $0x180] sm:$0xff]
        %v3724 = vld [vmem:[%s884 + $0x188] sm:$0xff]
        %v3725 = vld [vmem:[%s884 + $0x190] sm:$0xff]
        %v3726 = vld [vmem:[%s884 + $0x198] sm:$0xff]
        %v3727 = vld [vmem:[%s884 + $0x1a0] sm:$0xff]
        %v3728 = vld [vmem:[%s884 + $0x1a8] sm:$0xff]
        %v3729 = vld [vmem:[%s884 + $0x1b0] sm:$0xff]
        %v3730 = vld [vmem:[%s884 + $0x1b8] sm:$0xff]
        %v3731 = vld [vmem:[%s884 + $0x1c0] sm:$0xff]
        %v3732 = vld [vmem:[%s884 + $0x1c8] sm:$0xff]
        %v3733 = vld [vmem:[%s884 + $0x1d0] sm:$0xff]
        %v3734 = vld [vmem:[%s884 + $0x1d8] sm:$0xff]
        %v3735 = vld [vmem:[%s884 + $0x1e0] sm:$0xff]
        %v3736 = vld [vmem:[%s884 + $0x1e8] sm:$0xff]
        %v3737 = vld [vmem:[%s884 + $0x1f0] sm:$0xff]
        %v3738 = vld [vmem:[%s884 + $0x1f8] sm:$0xff]
        %v3739 = vld [vmem:[%s884 + $0x200] sm:$0xff]
        %v3740 = vld [vmem:[%s884 + $0x208] sm:$0xff]
        %v3741 = vld [vmem:[%s884 + $0x210] sm:$0xff]
        %v3742 = vld [vmem:[%s884 + $0x218] sm:$0xff]
        %v3743 = vld [vmem:[%s884 + $0x220] sm:$0xff]
        %v3744 = vld [vmem:[%s884 + $0x228] sm:$0xff]
        %v3745 = vld [vmem:[%s884 + $0x230] sm:$0xff]
        %v3746 = vld [vmem:[%s884 + $0x238] sm:$0xff]
        %v3747 = vld [vmem:[%s884 + $0x240] sm:$0xff]
        %v3748 = vld [vmem:[%s884 + $0x248] sm:$0xff]
        %v3749 = vld [vmem:[%s884 + $0x250] sm:$0xff]
        %v3750 = vld [vmem:[%s884 + $0x258] sm:$0xff]
        %v3751 = vld [vmem:[%s884 + $0x260] sm:$0xff]
        %v3752 = vld [vmem:[%s884 + $0x268] sm:$0xff]
        %v3753 = vld [vmem:[%s884 + $0x270] sm:$0xff]
        %v3754 = vld [vmem:[%s884 + $0x278] sm:$0xff]
        %v3755 = vld [vmem:[%s884 + $0x280] sm:$0xff]
        %v3756 = vld [vmem:[%s884 + $0x288] sm:$0xff]
        %v3757 = vld [vmem:[%s884 + $0x290] sm:$0xff]
        %v3758 = vld [vmem:[%s884 + $0x298] sm:$0xff]
        %v3759 = vld [vmem:[%s884 + $0x2a0] sm:$0xff]
        %v3760 = vld [vmem:[%s884 + $0x2a8] sm:$0xff]
        %v3761 = vld [vmem:[%s884 + $0x2b0] sm:$0xff]
        %v3762 = vld [vmem:[%s884 + $0x2b8] sm:$0xff]
        %v3763 = vld [vmem:[%s884 + $0x2c0] sm:$0xff]
        %v3764 = vld [vmem:[%s884 + $0x2c8] sm:$0xff]
        %v3765 = vld [vmem:[%s884 + $0x2d0] sm:$0xff]
        %v3766 = vld [vmem:[%s884 + $0x2d8] sm:$0xff]
        %v3767 = vld [vmem:[%s884 + $0x2e0] sm:$0xff]
        %v3768 = vld [vmem:[%s884 + $0x2e8] sm:$0xff]
        %v3769 = vld [vmem:[%s884 + $0x2f0] sm:$0xff]
        %v3770 = vld [vmem:[%s884 + $0x2f8] sm:$0xff]
        %v3771 = vld [vmem:[%s884 + $0x300] sm:$0xff]
        %v3772 = vld [vmem:[%s884 + $0x308] sm:$0xff]
        %v3773 = vld [vmem:[%s884 + $0x310] sm:$0xff]
        %v3774 = vld [vmem:[%s884 + $0x318] sm:$0xff]
        %v3775 = vld [vmem:[%s884 + $0x320] sm:$0xff]
        %v3776 = vld [vmem:[%s884 + $0x328] sm:$0xff]
        %v3777 = vld [vmem:[%s884 + $0x330] sm:$0xff]
        %v3778 = vld [vmem:[%s884 + $0x338] sm:$0xff]
        %v3779 = vld [vmem:[%s884 + $0x340] sm:$0xff]
        %v3780 = vld [vmem:[%s884 + $0x348] sm:$0xff]
        %v3781 = vld [vmem:[%s884 + $0x350] sm:$0xff]
        %v3782 = vld [vmem:[%s884 + $0x358] sm:$0xff]
        %v3783 = vld [vmem:[%s884 + $0x360] sm:$0xff]
        %v3784 = vld [vmem:[%s884 + $0x368] sm:$0xff]
        %v3785 = vld [vmem:[%s884 + $0x370] sm:$0xff]
        %v3786 = vld [vmem:[%s884 + $0x378] sm:$0xff]
        %v3787 = vld [vmem:[%s884 + $0x380] sm:$0xff]
        %v3788 = vld [vmem:[%s884 + $0x388] sm:$0xff]
        %v3789 = vld [vmem:[%s884 + $0x390] sm:$0xff]
        %v3790 = vld [vmem:[%s884 + $0x398] sm:$0xff]
        %v3791 = vld [vmem:[%s884 + $0x3a0] sm:$0xff]
        %v3792 = vld [vmem:[%s884 + $0x3a8] sm:$0xff]
        %v3793 = vld [vmem:[%s884 + $0x3b0] sm:$0xff]
        %v3794 = vld [vmem:[%s884 + $0x3b8] sm:$0xff]
        %v3795 = vld [vmem:[%s884 + $0x3c0] sm:$0xff]
        %v3796 = vld [vmem:[%s884 + $0x3c8] sm:$0xff]
        %v3797 = vld [vmem:[%s884 + $0x3d0] sm:$0xff]
        %v3798 = vld [vmem:[%s884 + $0x3d8] sm:$0xff]
        %v3799 = vld [vmem:[%s884 + $0x3e0] sm:$0xff]
        %v3800 = vld [vmem:[%s884 + $0x3e8] sm:$0xff]
        %v3801 = vld [vmem:[%s884 + $0x3f0] sm:$0xff]
        %v3802 = vld [vmem:[%s884 + $0x3f8] sm:$0xff]
        %v3803 = vld [vmem:[%s884 + $0x400] sm:$0xff]
        %v3804 = vld [vmem:[%s884 + $0x408] sm:$0xff]
        %v3805 = vld [vmem:[%s884 + $0x410] sm:$0xff]
        %v3806 = vld [vmem:[%s884 + $0x418] sm:$0xff]
        %v3807 = vld [vmem:[%s884 + $0x420] sm:$0xff]
        %v3808 = vld [vmem:[%s884 + $0x428] sm:$0xff]
        %v3809 = vld [vmem:[%s884 + $0x430] sm:$0xff]
        %v3810 = vld [vmem:[%s884 + $0x438] sm:$0xff]
        %v3811 = vld [vmem:[%s884 + $0x440] sm:$0xff]
        %v3812 = vld [vmem:[%s884 + $0x448] sm:$0xff]
        %v3813 = vld [vmem:[%s884 + $0x450] sm:$0xff]
        %v3814 = vld [vmem:[%s884 + $0x458] sm:$0xff]
        %v3815 = vld [vmem:[%s884 + $0x460] sm:$0xff]
        %v3816 = vld [vmem:[%s884 + $0x468] sm:$0xff]
        %v3817 = vld [vmem:[%s884 + $0x470] sm:$0xff]
        %v3818 = vld [vmem:[%s884 + $0x478] sm:$0xff]
        %v3819 = vld [vmem:[%s884 + $0x480] sm:$0xff]
        %v3820 = vld [vmem:[%s884 + $0x488] sm:$0xff]
        %v3821 = vld [vmem:[%s884 + $0x490] sm:$0xff]
        %v3822 = vld [vmem:[%s884 + $0x498] sm:$0xff]
        %v3823 = vld [vmem:[%s884 + $0x4a0] sm:$0xff]
        %v3824 = vld [vmem:[%s884 + $0x4a8] sm:$0xff]
        %v3825 = vld [vmem:[%s884 + $0x4b0] sm:$0xff]
        %v3826 = vld [vmem:[%s884 + $0x4b8] sm:$0xff]
        %v3827 = vld [vmem:[%s884 + $0x4c0] sm:$0xff]
        %v3828 = vld [vmem:[%s884 + $0x4c8] sm:$0xff]
        %v3829 = vld [vmem:[%s884 + $0x4d0] sm:$0xff]
        %v3830 = vld [vmem:[%s884 + $0x4d8] sm:$0xff]
        %v3831 = vld [vmem:[%s884 + $0x4e0] sm:$0xff]
        %v3832 = vld [vmem:[%s884 + $0x4e8] sm:$0xff]
        %v3833 = vld [vmem:[%s884 + $0x4f0] sm:$0xff]
        %v3834 = vld [vmem:[%s884 + $0x4f8] sm:$0xff]
        %v3835 = vld [vmem:[%s884 + $0x500] sm:$0xff]
        %v3836 = vld [vmem:[%s884 + $0x508] sm:$0xff]
        %v3837 = vld [vmem:[%s884 + $0x510] sm:$0xff]
        %v3838 = vld [vmem:[%s884 + $0x518] sm:$0xff]
        %v3839 = vld [vmem:[%s884 + $0x520] sm:$0xff]
        %v3840 = vld [vmem:[%s884 + $0x528] sm:$0xff]
        %v3841 = vld [vmem:[%s884 + $0x530] sm:$0xff]
        %v3842 = vld [vmem:[%s884 + $0x538] sm:$0xff]
        %v3843 = vld [vmem:[%s884 + $0x540] sm:$0xff]
        %v3844 = vld [vmem:[%s884 + $0x548] sm:$0xff]
        %v3845 = vld [vmem:[%s884 + $0x550] sm:$0xff]
        %v3846 = vld [vmem:[%s884 + $0x558] sm:$0xff]
        %v3847 = vld [vmem:[%s884 + $0x560] sm:$0xff]
        %v3848 = vld [vmem:[%s884 + $0x568] sm:$0xff]
        %v3849 = vld [vmem:[%s884 + $0x570] sm:$0xff]
        %v3850 = vld [vmem:[%s884 + $0x578] sm:$0xff]
        %v3851 = vld [vmem:[%s884 + $0x580] sm:$0xff]
        %v3852 = vld [vmem:[%s884 + $0x588] sm:$0xff]
        %v3853 = vld [vmem:[%s884 + $0x590] sm:$0xff]
        %v3854 = vld [vmem:[%s884 + $0x598] sm:$0xff]
        %v3855 = vld [vmem:[%s884 + $0x5a0] sm:$0xff]
        %v3856 = vld [vmem:[%s884 + $0x5a8] sm:$0xff]
        %v3857 = vld [vmem:[%s884 + $0x5b0] sm:$0xff]
        %v3858 = vld [vmem:[%s884 + $0x5b8] sm:$0xff]
        %v3859 = vld [vmem:[%s884 + $0x5c0] sm:$0xff]
        %v3860 = vld [vmem:[%s884 + $0x5c8] sm:$0xff]
        %v3861 = vld [vmem:[%s884 + $0x5d0] sm:$0xff]
        %v3862 = vld [vmem:[%s884 + $0x5d8] sm:$0xff]
        %v3863 = vld [vmem:[%s884 + $0x5e0] sm:$0xff]
        %v3864 = vld [vmem:[%s884 + $0x5e8] sm:$0xff]
        %v3865 = vld [vmem:[%s884 + $0x5f0] sm:$0xff]
        %v3866 = vld [vmem:[%s884 + $0x5f8] sm:$0xff]
        %v3867 = vld [vmem:[%s884 + $0x600] sm:$0xff]
        %v3868 = vld [vmem:[%s884 + $0x608] sm:$0xff]
        %v3869 = vld [vmem:[%s884 + $0x610] sm:$0xff]
        %v3870 = vld [vmem:[%s884 + $0x618] sm:$0xff]
        %v3871 = vld [vmem:[%s884 + $0x620] sm:$0xff]
        %v3872 = vld [vmem:[%s884 + $0x628] sm:$0xff]
        %v3873 = vld [vmem:[%s884 + $0x630] sm:$0xff]
        %v3874 = vld [vmem:[%s884 + $0x638] sm:$0xff]
        %v3875 = vld [vmem:[%s884 + $0x640] sm:$0xff]
        %v3876 = vld [vmem:[%s884 + $0x648] sm:$0xff]
        %v3877 = vld [vmem:[%s884 + $0x650] sm:$0xff]
        %v3878 = vld [vmem:[%s884 + $0x658] sm:$0xff]
        %v3879 = vld [vmem:[%s884 + $0x660] sm:$0xff]
        %v3880 = vld [vmem:[%s884 + $0x668] sm:$0xff]
        %v3881 = vld [vmem:[%s884 + $0x670] sm:$0xff]
        %v3882 = vld [vmem:[%s884 + $0x678] sm:$0xff]
        %v3883 = vld [vmem:[%s884 + $0x680] sm:$0xff]
        %v3884 = vld [vmem:[%s884 + $0x688] sm:$0xff]
        %v3885 = vld [vmem:[%s884 + $0x690] sm:$0xff]
        %v3886 = vld [vmem:[%s884 + $0x698] sm:$0xff]
        %v3887 = vld [vmem:[%s884 + $0x6a0] sm:$0xff]
        %v3888 = vld [vmem:[%s884 + $0x6a8] sm:$0xff]
        %v3889 = vld [vmem:[%s884 + $0x6b0] sm:$0xff]
        %v3890 = vld [vmem:[%s884 + $0x6b8] sm:$0xff]
        %v3891 = vld [vmem:[%s884 + $0x6c0] sm:$0xff]
        %v3892 = vld [vmem:[%s884 + $0x6c8] sm:$0xff]
        %v3893 = vld [vmem:[%s884 + $0x6d0] sm:$0xff]
        %v3894 = vld [vmem:[%s884 + $0x6d8] sm:$0xff]
        %v3895 = vld [vmem:[%s884 + $0x6e0] sm:$0xff]
        %v3896 = vld [vmem:[%s884 + $0x6e8] sm:$0xff]
        %v3897 = vld [vmem:[%s884 + $0x6f0] sm:$0xff]
        %v3898 = vld [vmem:[%s884 + $0x6f8] sm:$0xff]
        %v3899 = vld [vmem:[%s884 + $0x700] sm:$0xff]
        %v3900 = vld [vmem:[%s884 + $0x708] sm:$0xff]
        %v3901 = vld [vmem:[%s884 + $0x710] sm:$0xff]
        %v3902 = vld [vmem:[%s884 + $0x718] sm:$0xff]
        %v3903 = vld [vmem:[%s884 + $0x720] sm:$0xff]
        %v3904 = vld [vmem:[%s884 + $0x728] sm:$0xff]
        %v3905 = vld [vmem:[%s884 + $0x730] sm:$0xff]
        %v3906 = vld [vmem:[%s884 + $0x738] sm:$0xff]
        %v3907 = vld [vmem:[%s884 + $0x740] sm:$0xff]
        %v3908 = vld [vmem:[%s884 + $0x748] sm:$0xff]
        %v3909 = vld [vmem:[%s884 + $0x750] sm:$0xff]
        %v3910 = vld [vmem:[%s884 + $0x758] sm:$0xff]
        %v3911 = vld [vmem:[%s884 + $0x760] sm:$0xff]
        %v3912 = vld [vmem:[%s884 + $0x768] sm:$0xff]
        %v3913 = vld [vmem:[%s884 + $0x770] sm:$0xff]
        %v3914 = vld [vmem:[%s884 + $0x778] sm:$0xff]
        %v3915 = vld [vmem:[%s884 + $0x780] sm:$0xff]
        %v3916 = vld [vmem:[%s884 + $0x788] sm:$0xff]
        %v3917 = vld [vmem:[%s884 + $0x790] sm:$0xff]
        %v3918 = vld [vmem:[%s884 + $0x798] sm:$0xff]
        %v3919 = vld [vmem:[%s884 + $0x7a0] sm:$0xff]
        %v3920 = vld [vmem:[%s884 + $0x7a8] sm:$0xff]
        %v3921 = vld [vmem:[%s884 + $0x7b0] sm:$0xff]
        %v3922 = vld [vmem:[%s884 + $0x7b8] sm:$0xff]
        %v3923 = vld [vmem:[%s884 + $0x7c0] sm:$0xff]
        %v3924 = vld [vmem:[%s884 + $0x7c8] sm:$0xff]
        %v3925 = vld [vmem:[%s884 + $0x7d0] sm:$0xff]
        %v3926 = vld [vmem:[%s884 + $0x7d8] sm:$0xff]
        %v3927 = vld [vmem:[%s884 + $0x7e0] sm:$0xff]
        %v3928 = vld [vmem:[%s884 + $0x7e8] sm:$0xff]
        %v3929 = vld [vmem:[%s884 + $0x7f0] sm:$0xff]
        %v3930 = vld [vmem:[%s884 + $0x7f8] sm:$0xff]
        %v3931 = vld [vmem:[%s884 + $0x800] sm:$0xff]
        %v3932 = vld [vmem:[%s884 + $0x808] sm:$0xff]
        %v3933 = vld [vmem:[%s884 + $0x810] sm:$0xff]
        %v3934 = vld [vmem:[%s884 + $0x818] sm:$0xff]
        %v3935 = vld [vmem:[%s884 + $0x820] sm:$0xff]
        %v3936 = vld [vmem:[%s884 + $0x828] sm:$0xff]
        %v3937 = vld [vmem:[%s884 + $0x830] sm:$0xff]
        %v3938 = vld [vmem:[%s884 + $0x838] sm:$0xff]
        %v3939 = vld [vmem:[%s884 + $0x840] sm:$0xff]
        %v3940 = vld [vmem:[%s884 + $0x848] sm:$0xff]
        %v3941 = vld [vmem:[%s884 + $0x850] sm:$0xff]
        %v3942 = vld [vmem:[%s884 + $0x858] sm:$0xff]
        %v3943 = vld [vmem:[%s884 + $0x860] sm:$0xff]
        %v3944 = vld [vmem:[%s884 + $0x868] sm:$0xff]
        %v3945 = vld [vmem:[%s884 + $0x870] sm:$0xff]
        %v3946 = vld [vmem:[%s884 + $0x878] sm:$0xff]
        %v3947 = vld [vmem:[%s884 + $0x880] sm:$0xff]
        %v3948 = vld [vmem:[%s884 + $0x888] sm:$0xff]
        %v3949 = vld [vmem:[%s884 + $0x890] sm:$0xff]
        %v3950 = vld [vmem:[%s884 + $0x898] sm:$0xff]
        %v3951 = vld [vmem:[%s884 + $0x8a0] sm:$0xff]
        %v3952 = vld [vmem:[%s884 + $0x8a8] sm:$0xff]
        %v3953 = vld [vmem:[%s884 + $0x8b0] sm:$0xff]
        %v3954 = vld [vmem:[%s884 + $0x8b8] sm:$0xff]
        %v3955 = vld [vmem:[%s884 + $0x8c0] sm:$0xff]
        %v3956 = vld [vmem:[%s884 + $0x8c8] sm:$0xff]
        %v3957 = vld [vmem:[%s884 + $0x8d0] sm:$0xff]
        %v3958 = vld [vmem:[%s884 + $0x8d8] sm:$0xff]
        %v3959 = vld [vmem:[%s884 + $0x8e0] sm:$0xff]
        %v3960 = vld [vmem:[%s884 + $0x8e8] sm:$0xff]
        %v3961 = vld [vmem:[%s884 + $0x8f0] sm:$0xff]
        %v3962 = vld [vmem:[%s884 + $0x8f8] sm:$0xff]
        %v3963 = vld [vmem:[%s884 + $0x900] sm:$0xff]
        %v3964 = vld [vmem:[%s884 + $0x908] sm:$0xff]
        %v3965 = vld [vmem:[%s884 + $0x910] sm:$0xff]
        %v3966 = vld [vmem:[%s884 + $0x918] sm:$0xff]
        %v3967 = vld [vmem:[%s884 + $0x920] sm:$0xff]
        %v3968 = vld [vmem:[%s884 + $0x928] sm:$0xff]
        %v3969 = vld [vmem:[%s884 + $0x930] sm:$0xff]
        %v3970 = vld [vmem:[%s884 + $0x938] sm:$0xff]
        %v3971 = vld [vmem:[%s884 + $0x940] sm:$0xff]
        %v3972 = vld [vmem:[%s884 + $0x948] sm:$0xff]
        %v3973 = vld [vmem:[%s884 + $0x950] sm:$0xff]
        %v3974 = vld [vmem:[%s884 + $0x958] sm:$0xff]
        %v3975 = vld [vmem:[%s884 + $0x960] sm:$0xff]
        %v3976 = vld [vmem:[%s884 + $0x968] sm:$0xff]
        %v3977 = vld [vmem:[%s884 + $0x970] sm:$0xff]
        %v3978 = vld [vmem:[%s884 + $0x978] sm:$0xff]
        %v3979 = vld [vmem:[%s884 + $0x980] sm:$0xff]
        %v3980 = vld [vmem:[%s884 + $0x988] sm:$0xff]
        %v3981 = vld [vmem:[%s884 + $0x990] sm:$0xff]
        %v3982 = vld [vmem:[%s884 + $0x998] sm:$0xff]
        %v3983 = vld [vmem:[%s884 + $0x9a0] sm:$0xff]
        %v3984 = vld [vmem:[%s884 + $0x9a8] sm:$0xff]
        %v3985 = vld [vmem:[%s884 + $0x9b0] sm:$0xff]
        %v3986 = vld [vmem:[%s884 + $0x9b8] sm:$0xff]
        %v3987 = vld [vmem:[%s884 + $0x9c0] sm:$0xff]
        %v3988 = vld [vmem:[%s884 + $0x9c8] sm:$0xff]
        %v3989 = vld [vmem:[%s884 + $0x9d0] sm:$0xff]
        %v3990 = vld [vmem:[%s884 + $0x9d8] sm:$0xff]
        %v3991 = vld [vmem:[%s884 + $0x9e0] sm:$0xff]
        %v3992 = vld [vmem:[%s884 + $0x9e8] sm:$0xff]
        %v3993 = vld [vmem:[%s884 + $0x9f0] sm:$0xff]
        %v3994 = vld [vmem:[%s884 + $0x9f8] sm:$0xff]
        %v3995 = vadd.f32 %v2458, %v3675
        %v3996 = vadd.f32 %v3276, %v3676
        %v3997 = vadd.f32 %v2460, %v3677
        %v3998 = vadd.f32 %v3278, %v3678
        %v3999 = vadd.f32 %v2463, %v3679
        %v4000 = vadd.f32 %v3281, %v3680
        %v4001 = vadd.f32 %v2465, %v3681
        %v4002 = vadd.f32 %v3283, %v3682
        %v4003 = vadd.f32 %v2468, %v3683
        %v4004 = vadd.f32 %v3286, %v3684
        %v4005 = vadd.f32 %v2470, %v3685
        %v4006 = vadd.f32 %v3288, %v3686
        %v4007 = vadd.f32 %v2473, %v3687
        %v4008 = vadd.f32 %v3291, %v3688
        %v4009 = vadd.f32 %v2475, %v3689
        %v4010 = vadd.f32 %v3293, %v3690
        %v4011 = vadd.f32 %v2478, %v3691
        %v4012 = vadd.f32 %v3296, %v3692
        %v4013 = vadd.f32 %v2480, %v3693
        %v4014 = vadd.f32 %v3298, %v3694
        %v4015 = vadd.f32 %v2483, %v3695
        %v4016 = vadd.f32 %v3301, %v3696
        %v4017 = vadd.f32 %v2485, %v3697
        %v4018 = vadd.f32 %v3303, %v3698
        %v4019 = vadd.f32 %v2488, %v3699
        %v4020 = vadd.f32 %v3306, %v3700
        %v4021 = vadd.f32 %v2490, %v3701
        %v4022 = vadd.f32 %v3308, %v3702
        %v4023 = vadd.f32 %v2493, %v3703
        %v4024 = vadd.f32 %v3311, %v3704
        %v4025 = vadd.f32 %v2495, %v3705
        %v4026 = vadd.f32 %v3313, %v3706
        %v4027 = vadd.f32 %v2498, %v3707
        %v4028 = vadd.f32 %v3316, %v3708
        %v4029 = vadd.f32 %v2500, %v3709
        %v4030 = vadd.f32 %v3318, %v3710
        %v4031 = vadd.f32 %v2503, %v3711
        %v4032 = vadd.f32 %v3321, %v3712
        %v4033 = vadd.f32 %v2505, %v3713
        %v4034 = vadd.f32 %v3323, %v3714
        %v4035 = vadd.f32 %v2508, %v3715
        %v4036 = vadd.f32 %v3326, %v3716
        %v4037 = vadd.f32 %v2510, %v3717
        %v4038 = vadd.f32 %v3328, %v3718
        %v4039 = vadd.f32 %v2513, %v3719
        %v4040 = vadd.f32 %v3331, %v3720
        %v4041 = vadd.f32 %v2515, %v3721
        %v4042 = vadd.f32 %v3333, %v3722
        %v4043 = vadd.f32 %v2518, %v3723
        %v4044 = vadd.f32 %v3336, %v3724
        %v4045 = vadd.f32 %v2520, %v3725
        %v4046 = vadd.f32 %v3338, %v3726
        %v4047 = vadd.f32 %v2523, %v3727
        %v4048 = vadd.f32 %v3341, %v3728
        %v4049 = vadd.f32 %v2525, %v3729
        %v4050 = vadd.f32 %v3343, %v3730
        %v4051 = vadd.f32 %v2528, %v3731
        %v4052 = vadd.f32 %v3346, %v3732
        %v4053 = vadd.f32 %v2530, %v3733
        %v4054 = vadd.f32 %v3348, %v3734
        %v4055 = vadd.f32 %v2533, %v3735
        %v4056 = vadd.f32 %v3351, %v3736
        %v4057 = vadd.f32 %v2535, %v3737
        %v4058 = vadd.f32 %v3353, %v3738
        %v4059 = vadd.f32 %v2538, %v3739
        %v4060 = vadd.f32 %v3356, %v3740
        %v4061 = vadd.f32 %v2540, %v3741
        %v4062 = vadd.f32 %v3358, %v3742
        %v4063 = vadd.f32 %v2543, %v3743
        %v4064 = vadd.f32 %v3361, %v3744
        %v4065 = vadd.f32 %v2545, %v3745
        %v4066 = vadd.f32 %v3363, %v3746
        %v4067 = vadd.f32 %v2548, %v3747
        %v4068 = vadd.f32 %v3366, %v3748
        %v4069 = vadd.f32 %v2550, %v3749
        %v4070 = vadd.f32 %v3368, %v3750
        %v4071 = vadd.f32 %v2553, %v3751
        %v4072 = vadd.f32 %v3371, %v3752
        %v4073 = vadd.f32 %v2555, %v3753
        %v4074 = vadd.f32 %v3373, %v3754
        %v4075 = vadd.f32 %v2558, %v3755
        %v4076 = vadd.f32 %v3376, %v3756
        %v4077 = vadd.f32 %v2560, %v3757
        %v4078 = vadd.f32 %v3378, %v3758
        %v4079 = vadd.f32 %v2563, %v3759
        %v4080 = vadd.f32 %v3381, %v3760
        %v4081 = vadd.f32 %v2565, %v3761
        %v4082 = vadd.f32 %v3383, %v3762
        %v4083 = vadd.f32 %v2568, %v3763
        %v4084 = vadd.f32 %v3386, %v3764
        %v4085 = vadd.f32 %v2570, %v3765
        %v4086 = vadd.f32 %v3388, %v3766
        %v4087 = vadd.f32 %v2573, %v3767
        %v4088 = vadd.f32 %v3391, %v3768
        %v4089 = vadd.f32 %v2575, %v3769
        %v4090 = vadd.f32 %v3393, %v3770
        %v4091 = vadd.f32 %v2578, %v3771
        %v4092 = vadd.f32 %v3396, %v3772
        %v4093 = vadd.f32 %v2580, %v3773
        %v4094 = vadd.f32 %v3398, %v3774
        %v4095 = vadd.f32 %v2583, %v3775
        %v4096 = vadd.f32 %v3401, %v3776
        %v4097 = vadd.f32 %v2585, %v3777
        %v4098 = vadd.f32 %v3403, %v3778
        %v4099 = vadd.f32 %v2588, %v3779
        %v4100 = vadd.f32 %v3406, %v3780
        %v4101 = vadd.f32 %v2590, %v3781
        %v4102 = vadd.f32 %v3408, %v3782
        %v4103 = vadd.f32 %v2593, %v3783
        %v4104 = vadd.f32 %v3411, %v3784
        %v4105 = vadd.f32 %v2595, %v3785
        %v4106 = vadd.f32 %v3413, %v3786
        %v4107 = vadd.f32 %v2598, %v3787
        %v4108 = vadd.f32 %v3416, %v3788
        %v4109 = vadd.f32 %v2600, %v3789
        %v4110 = vadd.f32 %v3418, %v3790
        %v4111 = vadd.f32 %v2603, %v3791
        %v4112 = vadd.f32 %v3421, %v3792
        %v4113 = vadd.f32 %v2605, %v3793
        %v4114 = vadd.f32 %v3423, %v3794
        %v4115 = vadd.f32 %v2608, %v3795
        %v4116 = vadd.f32 %v3426, %v3796
        %v4117 = vadd.f32 %v2610, %v3797
        %v4118 = vadd.f32 %v3428, %v3798
        %v4119 = vadd.f32 %v2613, %v3799
        %v4120 = vadd.f32 %v3431, %v3800
        %v4121 = vadd.f32 %v2615, %v3801
        %v4122 = vadd.f32 %v3433, %v3802
        %v4123 = vadd.f32 %v2618, %v3803
        %v4124 = vadd.f32 %v3436, %v3804
        %v4125 = vadd.f32 %v2620, %v3805
        %v4126 = vadd.f32 %v3438, %v3806
        %v4127 = vadd.f32 %v2623, %v3807
        %v4128 = vadd.f32 %v3441, %v3808
        %v4129 = vadd.f32 %v2625, %v3809
        %v4130 = vadd.f32 %v3443, %v3810
        %v4131 = vadd.f32 %v2628, %v3811
        %v4132 = vadd.f32 %v3446, %v3812
        %v4133 = vadd.f32 %v2630, %v3813
        %v4134 = vadd.f32 %v3448, %v3814
        %v4135 = vadd.f32 %v2633, %v3815
        %v4136 = vadd.f32 %v3451, %v3816
        %v4137 = vadd.f32 %v2635, %v3817
        %v4138 = vadd.f32 %v3453, %v3818
        %v4139 = vadd.f32 %v2638, %v3819
        %v4140 = vadd.f32 %v3456, %v3820
        %v4141 = vadd.f32 %v2640, %v3821
        %v4142 = vadd.f32 %v3458, %v3822
        %v4143 = vadd.f32 %v2643, %v3823
        %v4144 = vadd.f32 %v3461, %v3824
        %v4145 = vadd.f32 %v2645, %v3825
        %v4146 = vadd.f32 %v3463, %v3826
        %v4147 = vadd.f32 %v2648, %v3827
        %v4148 = vadd.f32 %v3466, %v3828
        %v4149 = vadd.f32 %v2650, %v3829
        %v4150 = vadd.f32 %v3468, %v3830
        %v4151 = vadd.f32 %v2653, %v3831
        %v4152 = vadd.f32 %v3471, %v3832
        %v4153 = vadd.f32 %v2655, %v3833
        %v4154 = vadd.f32 %v3473, %v3834
        %v4155 = vadd.f32 %v2658, %v3835
        %v4156 = vadd.f32 %v3476, %v3836
        %v4157 = vadd.f32 %v2660, %v3837
        %v4158 = vadd.f32 %v3478, %v3838
        %v4159 = vadd.f32 %v2663, %v3839
        %v4160 = vadd.f32 %v3481, %v3840
        %v4161 = vadd.f32 %v2665, %v3841
        %v4162 = vadd.f32 %v3483, %v3842
        %v4163 = vadd.f32 %v2668, %v3843
        %v4164 = vadd.f32 %v3486, %v3844
        %v4165 = vadd.f32 %v2670, %v3845
        %v4166 = vadd.f32 %v3488, %v3846
        %v4167 = vadd.f32 %v2673, %v3847
        %v4168 = vadd.f32 %v3491, %v3848
        %v4169 = vadd.f32 %v2675, %v3849
        %v4170 = vadd.f32 %v3493, %v3850
        %v4171 = vadd.f32 %v2678, %v3851
        %v4172 = vadd.f32 %v3496, %v3852
        %v4173 = vadd.f32 %v2680, %v3853
        %v4174 = vadd.f32 %v3498, %v3854
        %v4175 = vadd.f32 %v2683, %v3855
        %v4176 = vadd.f32 %v3501, %v3856
        %v4177 = vadd.f32 %v2685, %v3857
        %v4178 = vadd.f32 %v3503, %v3858
        %v4179 = vadd.f32 %v2688, %v3859
        %v4180 = vadd.f32 %v3506, %v3860
        %v4181 = vadd.f32 %v2690, %v3861
        %v4182 = vadd.f32 %v3508, %v3862
        %v4183 = vadd.f32 %v2693, %v3863
        %v4184 = vadd.f32 %v3511, %v3864
        %v4185 = vadd.f32 %v2695, %v3865
        %v4186 = vadd.f32 %v3513, %v3866
        %v4187 = vadd.f32 %v2698, %v3867
        %v4188 = vadd.f32 %v3516, %v3868
        %v4189 = vadd.f32 %v2700, %v3869
        %v4190 = vadd.f32 %v3518, %v3870
        %v4191 = vadd.f32 %v2703, %v3871
        %v4192 = vadd.f32 %v3521, %v3872
        %v4193 = vadd.f32 %v2705, %v3873
        %v4194 = vadd.f32 %v3523, %v3874
        %v4195 = vadd.f32 %v2708, %v3875
        %v4196 = vadd.f32 %v3526, %v3876
        %v4197 = vadd.f32 %v2710, %v3877
        %v4198 = vadd.f32 %v3528, %v3878
        %v4199 = vadd.f32 %v2713, %v3879
        %v4200 = vadd.f32 %v3531, %v3880
        %v4201 = vadd.f32 %v2715, %v3881
        %v4202 = vadd.f32 %v3533, %v3882
        %v4203 = vadd.f32 %v2718, %v3883
        %v4204 = vadd.f32 %v3536, %v3884
        %v4205 = vadd.f32 %v2720, %v3885
        %v4206 = vadd.f32 %v3538, %v3886
        %v4207 = vadd.f32 %v2723, %v3887
        %v4208 = vadd.f32 %v3541, %v3888
        %v4209 = vadd.f32 %v2725, %v3889
        %v4210 = vadd.f32 %v3543, %v3890
        %v4211 = vadd.f32 %v2728, %v3891
        %v4212 = vadd.f32 %v3546, %v3892
        %v4213 = vadd.f32 %v2730, %v3893
        %v4214 = vadd.f32 %v3548, %v3894
        %v4215 = vadd.f32 %v2733, %v3895
        %v4216 = vadd.f32 %v3551, %v3896
        %v4217 = vadd.f32 %v2735, %v3897
        %v4218 = vadd.f32 %v3553, %v3898
        %v4219 = vadd.f32 %v2738, %v3899
        %v4220 = vadd.f32 %v3556, %v3900
        %v4221 = vadd.f32 %v2740, %v3901
        %v4222 = vadd.f32 %v3558, %v3902
        %v4223 = vadd.f32 %v2743, %v3903
        %v4224 = vadd.f32 %v3561, %v3904
        %v4225 = vadd.f32 %v2745, %v3905
        %v4226 = vadd.f32 %v3563, %v3906
        %v4227 = vadd.f32 %v2748, %v3907
        %v4228 = vadd.f32 %v3566, %v3908
        %v4229 = vadd.f32 %v2750, %v3909
        %v4230 = vadd.f32 %v3568, %v3910
        %v4231 = vadd.f32 %v2753, %v3911
        %v4232 = vadd.f32 %v3571, %v3912
        %v4233 = vadd.f32 %v2755, %v3913
        %v4234 = vadd.f32 %v3573, %v3914
        %v4235 = vadd.f32 %v2758, %v3915
        %v4236 = vadd.f32 %v3576, %v3916
        %v4237 = vadd.f32 %v2760, %v3917
        %v4238 = vadd.f32 %v3578, %v3918
        %v4239 = vadd.f32 %v2763, %v3919
        %v4240 = vadd.f32 %v3581, %v3920
        %v4241 = vadd.f32 %v2765, %v3921
        %v4242 = vadd.f32 %v3583, %v3922
        %v4243 = vadd.f32 %v2768, %v3923
        %v4244 = vadd.f32 %v3586, %v3924
        %v4245 = vadd.f32 %v2770, %v3925
        %v4246 = vadd.f32 %v3588, %v3926
        %v4247 = vadd.f32 %v2773, %v3927
        %v4248 = vadd.f32 %v3591, %v3928
        %v4249 = vadd.f32 %v2775, %v3929
        %v4250 = vadd.f32 %v3593, %v3930
        %v4251 = vadd.f32 %v2778, %v3931
        %v4252 = vadd.f32 %v3596, %v3932
        %v4253 = vadd.f32 %v2780, %v3933
        %v4254 = vadd.f32 %v3598, %v3934
        %v4255 = vadd.f32 %v2783, %v3935
        %v4256 = vadd.f32 %v3601, %v3936
        %v4257 = vadd.f32 %v2785, %v3937
        %v4258 = vadd.f32 %v3603, %v3938
        %v4259 = vadd.f32 %v2788, %v3939
        %v4260 = vadd.f32 %v3606, %v3940
        %v4261 = vadd.f32 %v2790, %v3941
        %v4262 = vadd.f32 %v3608, %v3942
        %v4263 = vadd.f32 %v2793, %v3943
        %v4264 = vadd.f32 %v3611, %v3944
        %v4265 = vadd.f32 %v2795, %v3945
        %v4266 = vadd.f32 %v3613, %v3946
        %v4267 = vadd.f32 %v2798, %v3947
        %v4268 = vadd.f32 %v3616, %v3948
        %v4269 = vadd.f32 %v2800, %v3949
        %v4270 = vadd.f32 %v3618, %v3950
        %v4271 = vadd.f32 %v2803, %v3951
        %v4272 = vadd.f32 %v3621, %v3952
        %v4273 = vadd.f32 %v2805, %v3953
        %v4274 = vadd.f32 %v3623, %v3954
        %v4275 = vadd.f32 %v2808, %v3955
        %v4276 = vadd.f32 %v3626, %v3956
        %v4277 = vadd.f32 %v2810, %v3957
        %v4278 = vadd.f32 %v3628, %v3958
        %v4279 = vadd.f32 %v2813, %v3959
        %v4280 = vadd.f32 %v3631, %v3960
        %v4281 = vadd.f32 %v2815, %v3961
        %v4282 = vadd.f32 %v3633, %v3962
        %v4283 = vadd.f32 %v2818, %v3963
        %v4284 = vadd.f32 %v3636, %v3964
        %v4285 = vadd.f32 %v2820, %v3965
        %v4286 = vadd.f32 %v3638, %v3966
        %v4287 = vadd.f32 %v2823, %v3967
        %v4288 = vadd.f32 %v3641, %v3968
        %v4289 = vadd.f32 %v2825, %v3969
        %v4290 = vadd.f32 %v3643, %v3970
        %v4291 = vadd.f32 %v2828, %v3971
        %v4292 = vadd.f32 %v3646, %v3972
        %v4293 = vadd.f32 %v2830, %v3973
        %v4294 = vadd.f32 %v3648, %v3974
        %v4295 = vadd.f32 %v2833, %v3975
        %v4296 = vadd.f32 %v3651, %v3976
        %v4297 = vadd.f32 %v2835, %v3977
        %v4298 = vadd.f32 %v3653, %v3978
        %v4299 = vadd.f32 %v2838, %v3979
        %v4300 = vadd.f32 %v3656, %v3980
        %v4301 = vadd.f32 %v2840, %v3981
        %v4302 = vadd.f32 %v3658, %v3982
        %v4303 = vadd.f32 %v2843, %v3983
        %v4304 = vadd.f32 %v3661, %v3984
        %v4305 = vadd.f32 %v2845, %v3985
        %v4306 = vadd.f32 %v3663, %v3986
        %v4307 = vadd.f32 %v2848, %v3987
        %v4308 = vadd.f32 %v3666, %v3988
        %v4309 = vadd.f32 %v2850, %v3989
        %v4310 = vadd.f32 %v3668, %v3990
        %v4311 = vadd.f32 %v2853, %v3991
        %v4312 = vadd.f32 %v3671, %v3992
        %v4313 = vadd.f32 %v2855, %v3993
        %v4314 = vadd.f32 %v3673, %v3994
        %4315 = vst [vmem:[%s877] sm:$0xff] %v3995
        %4316 = vst [vmem:[%s877 + $0x8] sm:$0xff] %v3996
        %4317 = vst [vmem:[%s877 + $0x10] sm:$0xff] %v3997
        %4318 = vst [vmem:[%s877 + $0x18] sm:$0xff] %v3998
        %4319 = vst [vmem:[%s877 + $0x20] sm:$0xff] %v3999
        %4320 = vst [vmem:[%s877 + $0x28] sm:$0xff] %v4000
        %4321 = vst [vmem:[%s877 + $0x30] sm:$0xff] %v4001
        %4322 = vst [vmem:[%s877 + $0x38] sm:$0xff] %v4002
        %4323 = vst [vmem:[%s877 + $0x40] sm:$0xff] %v4003
        %4324 = vst [vmem:[%s877 + $0x48] sm:$0xff] %v4004
        %4325 = vst [vmem:[%s877 + $0x50] sm:$0xff] %v4005
        %4326 = vst [vmem:[%s877 + $0x58] sm:$0xff] %v4006
        %4327 = vst [vmem:[%s877 + $0x60] sm:$0xff] %v4007
        %4328 = vst [vmem:[%s877 + $0x68] sm:$0xff] %v4008
        %4329 = vst [vmem:[%s877 + $0x70] sm:$0xff] %v4009
        %4330 = vst [vmem:[%s877 + $0x78] sm:$0xff] %v4010
        %4331 = vst [vmem:[%s877 + $0x80] sm:$0xff] %v4011
        %4332 = vst [vmem:[%s877 + $0x88] sm:$0xff] %v4012
        %4333 = vst [vmem:[%s877 + $0x90] sm:$0xff] %v4013
        %4334 = vst [vmem:[%s877 + $0x98] sm:$0xff] %v4014
        %4335 = vst [vmem:[%s877 + $0xa0] sm:$0xff] %v4015
        %4336 = vst [vmem:[%s877 + $0xa8] sm:$0xff] %v4016
        %4337 = vst [vmem:[%s877 + $0xb0] sm:$0xff] %v4017
        %4338 = vst [vmem:[%s877 + $0xb8] sm:$0xff] %v4018
        %4339 = vst [vmem:[%s877 + $0xc0] sm:$0xff] %v4019
        %4340 = vst [vmem:[%s877 + $0xc8] sm:$0xff] %v4020
        %4341 = vst [vmem:[%s877 + $0xd0] sm:$0xff] %v4021
        %4342 = vst [vmem:[%s877 + $0xd8] sm:$0xff] %v4022
        %4343 = vst [vmem:[%s877 + $0xe0] sm:$0xff] %v4023
        %4344 = vst [vmem:[%s877 + $0xe8] sm:$0xff] %v4024
        %4345 = vst [vmem:[%s877 + $0xf0] sm:$0xff] %v4025
        %4346 = vst [vmem:[%s877 + $0xf8] sm:$0xff] %v4026
        %4347 = vst [vmem:[%s877 + $0x100] sm:$0xff] %v4027
        %4348 = vst [vmem:[%s877 + $0x108] sm:$0xff] %v4028
        %4349 = vst [vmem:[%s877 + $0x110] sm:$0xff] %v4029
        %4350 = vst [vmem:[%s877 + $0x118] sm:$0xff] %v4030
        %4351 = vst [vmem:[%s877 + $0x120] sm:$0xff] %v4031
        %4352 = vst [vmem:[%s877 + $0x128] sm:$0xff] %v4032
        %4353 = vst [vmem:[%s877 + $0x130] sm:$0xff] %v4033
        %4354 = vst [vmem:[%s877 + $0x138] sm:$0xff] %v4034
        %4355 = vst [vmem:[%s877 + $0x140] sm:$0xff] %v4035
        %4356 = vst [vmem:[%s877 + $0x148] sm:$0xff] %v4036
        %4357 = vst [vmem:[%s877 + $0x150] sm:$0xff] %v4037
        %4358 = vst [vmem:[%s877 + $0x158] sm:$0xff] %v4038
        %4359 = vst [vmem:[%s877 + $0x160] sm:$0xff] %v4039
        %4360 = vst [vmem:[%s877 + $0x168] sm:$0xff] %v4040
        %4361 = vst [vmem:[%s877 + $0x170] sm:$0xff] %v4041
        %4362 = vst [vmem:[%s877 + $0x178] sm:$0xff] %v4042
        %4363 = vst [vmem:[%s877 + $0x180] sm:$0xff] %v4043
        %4364 = vst [vmem:[%s877 + $0x188] sm:$0xff] %v4044
        %4365 = vst [vmem:[%s877 + $0x190] sm:$0xff] %v4045
        %4366 = vst [vmem:[%s877 + $0x198] sm:$0xff] %v4046
        %4367 = vst [vmem:[%s877 + $0x1a0] sm:$0xff] %v4047
        %4368 = vst [vmem:[%s877 + $0x1a8] sm:$0xff] %v4048
        %4369 = vst [vmem:[%s877 + $0x1b0] sm:$0xff] %v4049
        %4370 = vst [vmem:[%s877 + $0x1b8] sm:$0xff] %v4050
        %4371 = vst [vmem:[%s877 + $0x1c0] sm:$0xff] %v4051
        %4372 = vst [vmem:[%s877 + $0x1c8] sm:$0xff] %v4052
        %4373 = vst [vmem:[%s877 + $0x1d0] sm:$0xff] %v4053
        %4374 = vst [vmem:[%s877 + $0x1d8] sm:$0xff] %v4054
        %4375 = vst [vmem:[%s877 + $0x1e0] sm:$0xff] %v4055
        %4376 = vst [vmem:[%s877 + $0x1e8] sm:$0xff] %v4056
        %4377 = vst [vmem:[%s877 + $0x1f0] sm:$0xff] %v4057
        %4378 = vst [vmem:[%s877 + $0x1f8] sm:$0xff] %v4058
        %4379 = vst [vmem:[%s877 + $0x200] sm:$0xff] %v4059
        %4380 = vst [vmem:[%s877 + $0x208] sm:$0xff] %v4060
        %4381 = vst [vmem:[%s877 + $0x210] sm:$0xff] %v4061
        %4382 = vst [vmem:[%s877 + $0x218] sm:$0xff] %v4062
        %4383 = vst [vmem:[%s877 + $0x220] sm:$0xff] %v4063
        %4384 = vst [vmem:[%s877 + $0x228] sm:$0xff] %v4064
        %4385 = vst [vmem:[%s877 + $0x230] sm:$0xff] %v4065
        %4386 = vst [vmem:[%s877 + $0x238] sm:$0xff] %v4066
        %4387 = vst [vmem:[%s877 + $0x240] sm:$0xff] %v4067
        %4388 = vst [vmem:[%s877 + $0x248] sm:$0xff] %v4068
        %4389 = vst [vmem:[%s877 + $0x250] sm:$0xff] %v4069
        %4390 = vst [vmem:[%s877 + $0x258] sm:$0xff] %v4070
        %4391 = vst [vmem:[%s877 + $0x260] sm:$0xff] %v4071
        %4392 = vst [vmem:[%s877 + $0x268] sm:$0xff] %v4072
        %4393 = vst [vmem:[%s877 + $0x270] sm:$0xff] %v4073
        %4394 = vst [vmem:[%s877 + $0x278] sm:$0xff] %v4074
        %4395 = vst [vmem:[%s877 + $0x280] sm:$0xff] %v4075
        %4396 = vst [vmem:[%s877 + $0x288] sm:$0xff] %v4076
        %4397 = vst [vmem:[%s877 + $0x290] sm:$0xff] %v4077
        %4398 = vst [vmem:[%s877 + $0x298] sm:$0xff] %v4078
        %4399 = vst [vmem:[%s877 + $0x2a0] sm:$0xff] %v4079
        %4400 = vst [vmem:[%s877 + $0x2a8] sm:$0xff] %v4080
        %4401 = vst [vmem:[%s877 + $0x2b0] sm:$0xff] %v4081
        %4402 = vst [vmem:[%s877 + $0x2b8] sm:$0xff] %v4082
        %4403 = vst [vmem:[%s877 + $0x2c0] sm:$0xff] %v4083
        %4404 = vst [vmem:[%s877 + $0x2c8] sm:$0xff] %v4084
        %4405 = vst [vmem:[%s877 + $0x2d0] sm:$0xff] %v4085
        %4406 = vst [vmem:[%s877 + $0x2d8] sm:$0xff] %v4086
        %4407 = vst [vmem:[%s877 + $0x2e0] sm:$0xff] %v4087
        %4408 = vst [vmem:[%s877 + $0x2e8] sm:$0xff] %v4088
        %4409 = vst [vmem:[%s877 + $0x2f0] sm:$0xff] %v4089
        %4410 = vst [vmem:[%s877 + $0x2f8] sm:$0xff] %v4090
        %4411 = vst [vmem:[%s877 + $0x300] sm:$0xff] %v4091
        %4412 = vst [vmem:[%s877 + $0x308] sm:$0xff] %v4092
        %4413 = vst [vmem:[%s877 + $0x310] sm:$0xff] %v4093
        %4414 = vst [vmem:[%s877 + $0x318] sm:$0xff] %v4094
        %4415 = vst [vmem:[%s877 + $0x320] sm:$0xff] %v4095
        %4416 = vst [vmem:[%s877 + $0x328] sm:$0xff] %v4096
        %4417 = vst [vmem:[%s877 + $0x330] sm:$0xff] %v4097
        %4418 = vst [vmem:[%s877 + $0x338] sm:$0xff] %v4098
        %4419 = vst [vmem:[%s877 + $0x340] sm:$0xff] %v4099
        %4420 = vst [vmem:[%s877 + $0x348] sm:$0xff] %v4100
        %4421 = vst [vmem:[%s877 + $0x350] sm:$0xff] %v4101
        %4422 = vst [vmem:[%s877 + $0x358] sm:$0xff] %v4102
        %4423 = vst [vmem:[%s877 + $0x360] sm:$0xff] %v4103
        %4424 = vst [vmem:[%s877 + $0x368] sm:$0xff] %v4104
        %4425 = vst [vmem:[%s877 + $0x370] sm:$0xff] %v4105
        %4426 = vst [vmem:[%s877 + $0x378] sm:$0xff] %v4106
        %4427 = vst [vmem:[%s877 + $0x380] sm:$0xff] %v4107
        %4428 = vst [vmem:[%s877 + $0x388] sm:$0xff] %v4108
        %4429 = vst [vmem:[%s877 + $0x390] sm:$0xff] %v4109
        %4430 = vst [vmem:[%s877 + $0x398] sm:$0xff] %v4110
        %4431 = vst [vmem:[%s877 + $0x3a0] sm:$0xff] %v4111
        %4432 = vst [vmem:[%s877 + $0x3a8] sm:$0xff] %v4112
        %4433 = vst [vmem:[%s877 + $0x3b0] sm:$0xff] %v4113
        %4434 = vst [vmem:[%s877 + $0x3b8] sm:$0xff] %v4114
        %4435 = vst [vmem:[%s877 + $0x3c0] sm:$0xff] %v4115
        %4436 = vst [vmem:[%s877 + $0x3c8] sm:$0xff] %v4116
        %4437 = vst [vmem:[%s877 + $0x3d0] sm:$0xff] %v4117
        %4438 = vst [vmem:[%s877 + $0x3d8] sm:$0xff] %v4118
        %4439 = vst [vmem:[%s877 + $0x3e0] sm:$0xff] %v4119
        %4440 = vst [vmem:[%s877 + $0x3e8] sm:$0xff] %v4120
        %4441 = vst [vmem:[%s877 + $0x3f0] sm:$0xff] %v4121
        %4442 = vst [vmem:[%s877 + $0x3f8] sm:$0xff] %v4122
        %4443 = vst [vmem:[%s877 + $0x400] sm:$0xff] %v4123
        %4444 = vst [vmem:[%s877 + $0x408] sm:$0xff] %v4124
        %4445 = vst [vmem:[%s877 + $0x410] sm:$0xff] %v4125
        %4446 = vst [vmem:[%s877 + $0x418] sm:$0xff] %v4126
        %4447 = vst [vmem:[%s877 + $0x420] sm:$0xff] %v4127
        %4448 = vst [vmem:[%s877 + $0x428] sm:$0xff] %v4128
        %4449 = vst [vmem:[%s877 + $0x430] sm:$0xff] %v4129
        %4450 = vst [vmem:[%s877 + $0x438] sm:$0xff] %v4130
        %4451 = vst [vmem:[%s877 + $0x440] sm:$0xff] %v4131
        %4452 = vst [vmem:[%s877 + $0x448] sm:$0xff] %v4132
        %4453 = vst [vmem:[%s877 + $0x450] sm:$0xff] %v4133
        %4454 = vst [vmem:[%s877 + $0x458] sm:$0xff] %v4134
        %4455 = vst [vmem:[%s877 + $0x460] sm:$0xff] %v4135
        %4456 = vst [vmem:[%s877 + $0x468] sm:$0xff] %v4136
        %4457 = vst [vmem:[%s877 + $0x470] sm:$0xff] %v4137
        %4458 = vst [vmem:[%s877 + $0x478] sm:$0xff] %v4138
        %4459 = vst [vmem:[%s877 + $0x480] sm:$0xff] %v4139
        %4460 = vst [vmem:[%s877 + $0x488] sm:$0xff] %v4140
        %4461 = vst [vmem:[%s877 + $0x490] sm:$0xff] %v4141
        %4462 = vst [vmem:[%s877 + $0x498] sm:$0xff] %v4142
        %4463 = vst [vmem:[%s877 + $0x4a0] sm:$0xff] %v4143
        %4464 = vst [vmem:[%s877 + $0x4a8] sm:$0xff] %v4144
        %4465 = vst [vmem:[%s877 + $0x4b0] sm:$0xff] %v4145
        %4466 = vst [vmem:[%s877 + $0x4b8] sm:$0xff] %v4146
        %4467 = vst [vmem:[%s877 + $0x4c0] sm:$0xff] %v4147
        %4468 = vst [vmem:[%s877 + $0x4c8] sm:$0xff] %v4148
        %4469 = vst [vmem:[%s877 + $0x4d0] sm:$0xff] %v4149
        %4470 = vst [vmem:[%s877 + $0x4d8] sm:$0xff] %v4150
        %4471 = vst [vmem:[%s877 + $0x4e0] sm:$0xff] %v4151
        %4472 = vst [vmem:[%s877 + $0x4e8] sm:$0xff] %v4152
        %4473 = vst [vmem:[%s877 + $0x4f0] sm:$0xff] %v4153
        %4474 = vst [vmem:[%s877 + $0x4f8] sm:$0xff] %v4154
        %4475 = vst [vmem:[%s877 + $0x500] sm:$0xff] %v4155
        %4476 = vst [vmem:[%s877 + $0x508] sm:$0xff] %v4156
        %4477 = vst [vmem:[%s877 + $0x510] sm:$0xff] %v4157
        %4478 = vst [vmem:[%s877 + $0x518] sm:$0xff] %v4158
        %4479 = vst [vmem:[%s877 + $0x520] sm:$0xff] %v4159
        %4480 = vst [vmem:[%s877 + $0x528] sm:$0xff] %v4160
        %4481 = vst [vmem:[%s877 + $0x530] sm:$0xff] %v4161
        %4482 = vst [vmem:[%s877 + $0x538] sm:$0xff] %v4162
        %4483 = vst [vmem:[%s877 + $0x540] sm:$0xff] %v4163
        %4484 = vst [vmem:[%s877 + $0x548] sm:$0xff] %v4164
        %4485 = vst [vmem:[%s877 + $0x550] sm:$0xff] %v4165
        %4486 = vst [vmem:[%s877 + $0x558] sm:$0xff] %v4166
        %4487 = vst [vmem:[%s877 + $0x560] sm:$0xff] %v4167
        %4488 = vst [vmem:[%s877 + $0x568] sm:$0xff] %v4168
        %4489 = vst [vmem:[%s877 + $0x570] sm:$0xff] %v4169
        %4490 = vst [vmem:[%s877 + $0x578] sm:$0xff] %v4170
        %4491 = vst [vmem:[%s877 + $0x580] sm:$0xff] %v4171
        %4492 = vst [vmem:[%s877 + $0x588] sm:$0xff] %v4172
        %4493 = vst [vmem:[%s877 + $0x590] sm:$0xff] %v4173
        %4494 = vst [vmem:[%s877 + $0x598] sm:$0xff] %v4174
        %4495 = vst [vmem:[%s877 + $0x5a0] sm:$0xff] %v4175
        %4496 = vst [vmem:[%s877 + $0x5a8] sm:$0xff] %v4176
        %4497 = vst [vmem:[%s877 + $0x5b0] sm:$0xff] %v4177
        %4498 = vst [vmem:[%s877 + $0x5b8] sm:$0xff] %v4178
        %4499 = vst [vmem:[%s877 + $0x5c0] sm:$0xff] %v4179
        %4500 = vst [vmem:[%s877 + $0x5c8] sm:$0xff] %v4180
        %4501 = vst [vmem:[%s877 + $0x5d0] sm:$0xff] %v4181
        %4502 = vst [vmem:[%s877 + $0x5d8] sm:$0xff] %v4182
        %4503 = vst [vmem:[%s877 + $0x5e0] sm:$0xff] %v4183
        %4504 = vst [vmem:[%s877 + $0x5e8] sm:$0xff] %v4184
        %4505 = vst [vmem:[%s877 + $0x5f0] sm:$0xff] %v4185
        %4506 = vst [vmem:[%s877 + $0x5f8] sm:$0xff] %v4186
        %4507 = vst [vmem:[%s877 + $0x600] sm:$0xff] %v4187
        %4508 = vst [vmem:[%s877 + $0x608] sm:$0xff] %v4188
        %4509 = vst [vmem:[%s877 + $0x610] sm:$0xff] %v4189
        %4510 = vst [vmem:[%s877 + $0x618] sm:$0xff] %v4190
        %4511 = vst [vmem:[%s877 + $0x620] sm:$0xff] %v4191
        %4512 = vst [vmem:[%s877 + $0x628] sm:$0xff] %v4192
        %4513 = vst [vmem:[%s877 + $0x630] sm:$0xff] %v4193
        %4514 = vst [vmem:[%s877 + $0x638] sm:$0xff] %v4194
        %4515 = vst [vmem:[%s877 + $0x640] sm:$0xff] %v4195
        %4516 = vst [vmem:[%s877 + $0x648] sm:$0xff] %v4196
        %4517 = vst [vmem:[%s877 + $0x650] sm:$0xff] %v4197
        %4518 = vst [vmem:[%s877 + $0x658] sm:$0xff] %v4198
        %4519 = vst [vmem:[%s877 + $0x660] sm:$0xff] %v4199
        %4520 = vst [vmem:[%s877 + $0x668] sm:$0xff] %v4200
        %4521 = vst [vmem:[%s877 + $0x670] sm:$0xff] %v4201
        %4522 = vst [vmem:[%s877 + $0x678] sm:$0xff] %v4202
        %4523 = vst [vmem:[%s877 + $0x680] sm:$0xff] %v4203
        %4524 = vst [vmem:[%s877 + $0x688] sm:$0xff] %v4204
        %4525 = vst [vmem:[%s877 + $0x690] sm:$0xff] %v4205
        %4526 = vst [vmem:[%s877 + $0x698] sm:$0xff] %v4206
        %4527 = vst [vmem:[%s877 + $0x6a0] sm:$0xff] %v4207
        %4528 = vst [vmem:[%s877 + $0x6a8] sm:$0xff] %v4208
        %4529 = vst [vmem:[%s877 + $0x6b0] sm:$0xff] %v4209
        %4530 = vst [vmem:[%s877 + $0x6b8] sm:$0xff] %v4210
        %4531 = vst [vmem:[%s877 + $0x6c0] sm:$0xff] %v4211
        %4532 = vst [vmem:[%s877 + $0x6c8] sm:$0xff] %v4212
        %4533 = vst [vmem:[%s877 + $0x6d0] sm:$0xff] %v4213
        %4534 = vst [vmem:[%s877 + $0x6d8] sm:$0xff] %v4214
        %4535 = vst [vmem:[%s877 + $0x6e0] sm:$0xff] %v4215
        %4536 = vst [vmem:[%s877 + $0x6e8] sm:$0xff] %v4216
        %4537 = vst [vmem:[%s877 + $0x6f0] sm:$0xff] %v4217
        %4538 = vst [vmem:[%s877 + $0x6f8] sm:$0xff] %v4218
        %4539 = vst [vmem:[%s877 + $0x700] sm:$0xff] %v4219
        %4540 = vst [vmem:[%s877 + $0x708] sm:$0xff] %v4220
        %4541 = vst [vmem:[%s877 + $0x710] sm:$0xff] %v4221
        %4542 = vst [vmem:[%s877 + $0x718] sm:$0xff] %v4222
        %4543 = vst [vmem:[%s877 + $0x720] sm:$0xff] %v4223
        %4544 = vst [vmem:[%s877 + $0x728] sm:$0xff] %v4224
        %4545 = vst [vmem:[%s877 + $0x730] sm:$0xff] %v4225
        %4546 = vst [vmem:[%s877 + $0x738] sm:$0xff] %v4226
        %4547 = vst [vmem:[%s877 + $0x740] sm:$0xff] %v4227
        %4548 = vst [vmem:[%s877 + $0x748] sm:$0xff] %v4228
        %4549 = vst [vmem:[%s877 + $0x750] sm:$0xff] %v4229
        %4550 = vst [vmem:[%s877 + $0x758] sm:$0xff] %v4230
        %4551 = vst [vmem:[%s877 + $0x760] sm:$0xff] %v4231
        %4552 = vst [vmem:[%s877 + $0x768] sm:$0xff] %v4232
        %4553 = vst [vmem:[%s877 + $0x770] sm:$0xff] %v4233
        %4554 = vst [vmem:[%s877 + $0x778] sm:$0xff] %v4234
        %4555 = vst [vmem:[%s877 + $0x780] sm:$0xff] %v4235
        %4556 = vst [vmem:[%s877 + $0x788] sm:$0xff] %v4236
        %4557 = vst [vmem:[%s877 + $0x790] sm:$0xff] %v4237
        %4558 = vst [vmem:[%s877 + $0x798] sm:$0xff] %v4238
        %4559 = vst [vmem:[%s877 + $0x7a0] sm:$0xff] %v4239
        %4560 = vst [vmem:[%s877 + $0x7a8] sm:$0xff] %v4240
        %4561 = vst [vmem:[%s877 + $0x7b0] sm:$0xff] %v4241
        %4562 = vst [vmem:[%s877 + $0x7b8] sm:$0xff] %v4242
        %4563 = vst [vmem:[%s877 + $0x7c0] sm:$0xff] %v4243
        %4564 = vst [vmem:[%s877 + $0x7c8] sm:$0xff] %v4244
        %4565 = vst [vmem:[%s877 + $0x7d0] sm:$0xff] %v4245
        %4566 = vst [vmem:[%s877 + $0x7d8] sm:$0xff] %v4246
        %4567 = vst [vmem:[%s877 + $0x7e0] sm:$0xff] %v4247
        %4568 = vst [vmem:[%s877 + $0x7e8] sm:$0xff] %v4248
        %4569 = vst [vmem:[%s877 + $0x7f0] sm:$0xff] %v4249
        %4570 = vst [vmem:[%s877 + $0x7f8] sm:$0xff] %v4250
        %4571 = vst [vmem:[%s877 + $0x800] sm:$0xff] %v4251
        %4572 = vst [vmem:[%s877 + $0x808] sm:$0xff] %v4252
        %4573 = vst [vmem:[%s877 + $0x810] sm:$0xff] %v4253
        %4574 = vst [vmem:[%s877 + $0x818] sm:$0xff] %v4254
        %4575 = vst [vmem:[%s877 + $0x820] sm:$0xff] %v4255
        %4576 = vst [vmem:[%s877 + $0x828] sm:$0xff] %v4256
        %4577 = vst [vmem:[%s877 + $0x830] sm:$0xff] %v4257
        %4578 = vst [vmem:[%s877 + $0x838] sm:$0xff] %v4258
        %4579 = vst [vmem:[%s877 + $0x840] sm:$0xff] %v4259
        %4580 = vst [vmem:[%s877 + $0x848] sm:$0xff] %v4260
        %4581 = vst [vmem:[%s877 + $0x850] sm:$0xff] %v4261
        %4582 = vst [vmem:[%s877 + $0x858] sm:$0xff] %v4262
        %4583 = vst [vmem:[%s877 + $0x860] sm:$0xff] %v4263
        %4584 = vst [vmem:[%s877 + $0x868] sm:$0xff] %v4264
        %4585 = vst [vmem:[%s877 + $0x870] sm:$0xff] %v4265
        %4586 = vst [vmem:[%s877 + $0x878] sm:$0xff] %v4266
        %4587 = vst [vmem:[%s877 + $0x880] sm:$0xff] %v4267
        %4588 = vst [vmem:[%s877 + $0x888] sm:$0xff] %v4268
        %4589 = vst [vmem:[%s877 + $0x890] sm:$0xff] %v4269
        %4590 = vst [vmem:[%s877 + $0x898] sm:$0xff] %v4270
        %4591 = vst [vmem:[%s877 + $0x8a0] sm:$0xff] %v4271
        %4592 = vst [vmem:[%s877 + $0x8a8] sm:$0xff] %v4272
        %4593 = vst [vmem:[%s877 + $0x8b0] sm:$0xff] %v4273
        %4594 = vst [vmem:[%s877 + $0x8b8] sm:$0xff] %v4274
        %4595 = vst [vmem:[%s877 + $0x8c0] sm:$0xff] %v4275
        %4596 = vst [vmem:[%s877 + $0x8c8] sm:$0xff] %v4276
        %4597 = vst [vmem:[%s877 + $0x8d0] sm:$0xff] %v4277
        %4598 = vst [vmem:[%s877 + $0x8d8] sm:$0xff] %v4278
        %4599 = vst [vmem:[%s877 + $0x8e0] sm:$0xff] %v4279
        %4600 = vst [vmem:[%s877 + $0x8e8] sm:$0xff] %v4280
        %4601 = vst [vmem:[%s877 + $0x8f0] sm:$0xff] %v4281
        %4602 = vst [vmem:[%s877 + $0x8f8] sm:$0xff] %v4282
        %4603 = vst [vmem:[%s877 + $0x900] sm:$0xff] %v4283
        %4604 = vst [vmem:[%s877 + $0x908] sm:$0xff] %v4284
        %4605 = vst [vmem:[%s877 + $0x910] sm:$0xff] %v4285
        %4606 = vst [vmem:[%s877 + $0x918] sm:$0xff] %v4286
        %4607 = vst [vmem:[%s877 + $0x920] sm:$0xff] %v4287
        %4608 = vst [vmem:[%s877 + $0x928] sm:$0xff] %v4288
        %4609 = vst [vmem:[%s877 + $0x930] sm:$0xff] %v4289
        %4610 = vst [vmem:[%s877 + $0x938] sm:$0xff] %v4290
        %4611 = vst [vmem:[%s877 + $0x940] sm:$0xff] %v4291
        %4612 = vst [vmem:[%s877 + $0x948] sm:$0xff] %v4292
        %4613 = vst [vmem:[%s877 + $0x950] sm:$0xff] %v4293
        %4614 = vst [vmem:[%s877 + $0x958] sm:$0xff] %v4294
        %4615 = vst [vmem:[%s877 + $0x960] sm:$0xff] %v4295
        %4616 = vst [vmem:[%s877 + $0x968] sm:$0xff] %v4296
        %4617 = vst [vmem:[%s877 + $0x970] sm:$0xff] %v4297
        %4618 = vst [vmem:[%s877 + $0x978] sm:$0xff] %v4298
        %4619 = vst [vmem:[%s877 + $0x980] sm:$0xff] %v4299
        %4620 = vst [vmem:[%s877 + $0x988] sm:$0xff] %v4300
        %4621 = vst [vmem:[%s877 + $0x990] sm:$0xff] %v4301
        %4622 = vst [vmem:[%s877 + $0x998] sm:$0xff] %v4302
        %4623 = vst [vmem:[%s877 + $0x9a0] sm:$0xff] %v4303
        %4624 = vst [vmem:[%s877 + $0x9a8] sm:$0xff] %v4304
        %4625 = vst [vmem:[%s877 + $0x9b0] sm:$0xff] %v4305
        %4626 = vst [vmem:[%s877 + $0x9b8] sm:$0xff] %v4306
        %4627 = vst [vmem:[%s877 + $0x9c0] sm:$0xff] %v4307
        %4628 = vst [vmem:[%s877 + $0x9c8] sm:$0xff] %v4308
        %4629 = vst [vmem:[%s877 + $0x9d0] sm:$0xff] %v4309
        %4630 = vst [vmem:[%s877 + $0x9d8] sm:$0xff] %v4310
        %4631 = vst [vmem:[%s877 + $0x9e0] sm:$0xff] %v4311
        %4632 = vst [vmem:[%s877 + $0x9e8] sm:$0xff] %v4312
        %4633 = vst [vmem:[%s877 + $0x9f0] sm:$0xff] %v4313
        %4634 = vst [vmem:[%s877 + $0x9f8] sm:$0xff] %v4314
        %s4635 = sand.u32 %s114, 1
        %s4636 = scalar_lea.sflag [#allocation4], %s4635
        %s4637 = sand.u32 %s114, 1
        %s4638 = smul.addr %s4637, 2560
        %s4639 = scalar_lea.vmem [#allocation3], %s4638
        // Predicated region
        $region71: #{pos_emd_forward.1} parent=65 // pred_check
          %p4640 = pneg %p124
        $region72: #{pos_emd_forward.1} parent=65 // pred_check_branch
          %4642 = sbr.rel (%p4640) target = $region74
        $region73: #{pos_emd_forward.1} parent=65 // pred_region
          #allocation6 [shape = 'u32[6]{0}', space=smem, size = 0x18, scoped, tag = 'DMA stride descriptor']
          %s4643 = smul.u32 5, %s21
          %4645 = vsyncadd %s4636, 0
          %s4646 = smul.addr %s22, 64
          %s4647 = smul.addr %s4643, 128
          %s4648 = sadd.s32 %s4646, %s4647
          %s4649 = smul.addr %s4648, 8
          %s4650 = scalar_lea.hbm %s3, %s4649
          %s4652 = sshll.u32 1, 14
          %s4653 = sxor.u32 4294967295, %s4652
          %s4656 = sshll.u32 7, 18
          %s4657 = sxor.u32 4294967295, %s4656
          %s4658 = sand.u32 0, %s4657
          %s4660 = sor.u32 %s4658, 0
          %s4661 = sshll.u32 %s4639, 4
          %s4662 = int_to_ptr.vmem [resolvable:$true] %s4661
          %s4663 = sshll.u32 %s4650, 4
          %s4664 = int_to_ptr.hbm [resolvable:$true] %s4663
          %4670 = sst [smem:[#allocation6]] 8192
          %s4671 = scalar_lea.smem [#allocation6], 1
          %4672 = sst [smem:[%s4671]] 16384
          %s4673 = scalar_lea.smem [#allocation6], 2
          %4674 = sst [smem:[%s4673]] 32
          %s4675 = scalar_lea.smem [#allocation6], 3
          %4676 = sst [smem:[%s4675]] 256
          %s4677 = scalar_lea.smem [#allocation6], 4
          %4678 = sst [smem:[%s4677]] 256
          %s4679 = scalar_lea.smem [#allocation6], 5
          %4680 = sst [smem:[%s4679]] 16
          %4682 = dma.general %s4662, 40960, %s4664, %s4636, [#allocation5], [#allocation6], %s4660, 0
        $region74: #{pos_emd_forward.1} parent=65 // pred_fallthru
          _
      $region66: #{pos_emd_forward.1} parent=5 // pred_fallthru
        _
      %p4683 = scmp.le.s32.totalorder 2, %s12
      // Predicated region
      $region75: #{pos_emd_forward.1} parent=5 // pred_check
        %p4684 = pneg %p4683
      $region76: #{pos_emd_forward.1} parent=5 // pred_check_branch
        %4686 = sbr.rel (%p4684) target = $region78
      $region77: #{pos_emd_forward.1} parent=5 // pred_region
        %s4687 = ssub.s32 %s12, 2
        // Predicated region
        $region79: #{pos_emd_forward.1} parent=77 // pred_check
          %p4688 = pneg %p130
        $region80: #{pos_emd_forward.1} parent=77 // pred_check_branch
          %4690 = sbr.rel (%p4688) target = $region82
        $region81: #{pos_emd_forward.1} parent=77 // pred_region
          %s4691 = sand.u32 %s115, 1
          %s4692 = scalar_lea.sflag [#allocation4], %s4691
          %s4693 = sand.u32 %s115, 1
          %s4694 = smul.addr %s4693, 2560
          %s4695 = scalar_lea.vmem [#allocation3], %s4694
          %4697 = dma.done %s4692, 40960
        $region82: #{pos_emd_forward.1} parent=77 // pred_fallthru
          _
      $region78: #{pos_emd_forward.1} parent=5 // pred_fallthru
        _
    $region6: #{pos_emd_forward.1} parent=1 // loop_footer
      %s16 = sadd.s32 1, %s12
    $region7: #{pos_emd_forward.1} parent=1 // loop_footer_branch
      %11 = sbr.rel target = $region3
    $region8: #{pos_emd_forward.1} parent=1 // loop_exit
      _
    %4698 = vsyncpa [#allocation4], 1
    %s4699 = scalar_lea.sflag [#allocation4], 1
    %4700 = vsyncpa %s4699, 1

</llo_original>
